<compile_context>
chip_gen: v7x
topology: tpu7x:2x2x1
jax: 0.10.0
libtpu: 0.0.40
codegen_flags: <defaults>
</compile_context>

<pallas_src>
from functools import partial

import jax
import jax.numpy as jnp
import numpy as np
from jax.experimental import pallas as pl
from jax.experimental.pallas import tpu as pltpu


# ----------------------------- Pallas kernel -------------------------------

def _fused_rec_kernel(x_ref, we_ref, be_ref, wd_ref, bd_ref, m_ref,
                      o_ref, content_ref, *, Wp, L, base):
    """Fused gen_a.encode (3x3 conv + relu) -> gen_a.decode (3x3 conv + tanh).

    Per grid step (= one image), channel-major / spatial-on-lanes layout:
      x_ref:       (1, Cin, Le)   flattened zero-padded image (+ shift halo)
      we_ref:      (9, Chid, Cin) per-tap encoder weights (Cout-major)
      be_ref:      (Chid, 1)      encoder bias
      wd_ref:      (9, Cin, Chid) per-tap decoder weights (Cout-major)
      bd_ref:      (Cin, 1)       decoder bias
      m_ref:       (1, L)         interior mask over the padded grid
      o_ref:       (1, Cin, L)    decoder output over the padded grid
      content_ref: (Chid, Le)     VMEM scratch holding the intermediate content
    """
    Chid = we_ref.shape[1]
    Cout = o_ref.shape[1]
    xv = x_ref[0]                                          # (Cin, Le)

    # ---- encode: SAME 3x3 conv as 9 shifted lane-dense matmuls ----
    acc = jnp.zeros((Chid, L), jnp.float32)
    for kh in range(3):
        for kw in range(3):
            s = base + (kh - 1) * Wp + (kw - 1)            # static per-tap shift
            acc = acc + jnp.dot(we_ref[kh * 3 + kw], xv[:, s:s + L],
                                preferred_element_type=jnp.float32)
    # bias + relu (f32 epilogue), zero the padded-grid border (= SAME zero pad
    # for the following decoder conv).
    content = jnp.maximum(acc + be_ref[...], 0.0) * m_ref[...]   # (Chid, L)

    # Keep the intermediate in VMEM with zeroed halo margins.
    content_ref[...] = jnp.zeros_like(content_ref)
    content_ref[:, base:base + L] = content

    # ---- decode: SAME 3x3 conv as 9 shifted lane-dense matmuls + tanh ----
    acc2 = jnp.zeros((Cout, L), jnp.float32)
    for kh in range(3):
        for kw in range(3):
            s = base + (kh - 1) * Wp + (kw - 1)
            acc2 = acc2 + jnp.dot(wd_ref[kh * 3 + kw], content_ref[:, s:s + L],
                                  preferred_element_type=jnp.float32)
    o_ref[0] = jnp.tanh(acc2 + bd_ref[...]).astype(o_ref.dtype)


# --------------------------- forward (ModelTest_rec) ------------------------

def model_test_rec_forward(params, x_nchw):
    """Equivalent of ModelTest_rec.forward (NCHW in, NCHW out)."""
    N, Cin, H, W = x_nchw.shape
    Chid = params["w_enc"].shape[-1]
    Hp, Wp = H + 2, W + 2            # SAME-pad grid
    L = Hp * Wp                      # padded spatial positions per image
    base = 2 * Wp                    # halo so all 9 tap shifts stay in-bounds
    Le = L + 2 * base

    # NCHW -> pad: 1 ring of conv SAME padding + 2 extra zero rows of shift
    # halo (top & bottom) -> flatten spatial so M sits on the lane axis.
    xp = jnp.pad(x_nchw, ((0, 0), (0, 0), (3, 3), (1, 1)))      # (N,Cin,Hp+4,Wp)
    x_ext = xp.reshape(N, Cin, Le)

    # Interior mask on the padded grid (1 inside the original HxW image).
    yy = jnp.arange(Hp)[:, None]
    xx = jnp.arange(Wp)[None, :]
    mask = ((yy >= 1) & (yy <= H) & (xx >= 1) & (xx <= W)).astype(jnp.float32)
    mask = mask.reshape(1, L)

    # Per-tap, Cout-major weights: HWIO (3,3,I,O) -> (9, O, I).
    w_enc_t = jnp.transpose(params["w_enc"], (0, 1, 3, 2)).reshape(9, Chid, Cin)
    w_dec_t = jnp.transpose(params["w_dec"], (0, 1, 3, 2)).reshape(9, Cin, Chid)
    b_enc = params["b_enc"].reshape(Chid, 1)
    b_dec = params["b_dec"].reshape(Cin, 1)

    flops = N * 2 * 9 * L * (Cin * Chid + Chid * Cin)
    bytes_accessed = 4 * (x_ext.size + w_enc_t.size + w_dec_t.size
                          + b_enc.size + b_dec.size + mask.size + N * Cin * L)

    kern = partial(_fused_rec_kernel, Wp=Wp, L=L, base=base)
    out = pl.pallas_call(
        kern,
        out_shape=jax.ShapeDtypeStruct((N, Cin, L), jnp.float32),
        grid=(N,),
        in_specs=[
            pl.BlockSpec((1, Cin, Le), lambda n: (n, 0, 0)),
            pl.BlockSpec((9, Chid, Cin), lambda n: (0, 0, 0)),
            pl.BlockSpec((Chid, 1), lambda n: (0, 0)),
            pl.BlockSpec((9, Cin, Chid), lambda n: (0, 0, 0)),
            pl.BlockSpec((Cin, 1), lambda n: (0, 0)),
            pl.BlockSpec((1, L), lambda n: (0, 0)),
        ],
        out_specs=pl.BlockSpec((1, Cin, L), lambda n: (n, 0, 0)),
        # TODO(synk): for real gen_a sizes (large H*W*C) tile the spatial axis
        #             with a halo instead of one whole image per grid step.
        scratch_shapes=[pltpu.VMEM((Chid, Le), jnp.float32)],
        compiler_params=pltpu.CompilerParams(
            dimension_semantics=("parallel",)),
        cost_estimate=pl.CostEstimate(
            flops=flops,
            transcendentals=N * Cin * L,
            bytes_accessed=bytes_accessed),
    )(x_ext, w_enc_t, b_enc, w_dec_t, b_dec, mask)

    # padded-grid (N, Cin, Hp*Wp) -> crop interior -> NCHW
    out = out.reshape(N, Cin, Hp, Wp)[:, :, 1:H + 1, 1:W + 1]
    return out


# ------------------------------ reference -----------------------------------

def _conv3x3_ref(x_nhwc, w_hwio, b):
    y = jax.lax.conv_general_dilated(
        x_nhwc, w_hwio, window_strides=(1, 1), padding="SAME",
        dimension_numbers=("NHWC", "HWIO", "NHWC"))
    return y + b


def _forward_ref(params, x_nchw):
    x = jnp.transpose(x_nchw, (0, 2, 3, 1))
    c = jnp.maximum(_conv3x3_ref(x, params["w_enc"], params["b_enc"]), 0.0)
    y = jnp.tanh(_conv3x3_ref(c, params["w_dec"], params["b_dec"]))
    return jnp.transpose(y, (0, 3, 1, 2))


# --------------------------------- main --------------------------------------

if __name__ == "__main__":
    N, Cin, H, W = 2, 4, 16, 16
    Chid = 8

    key = jax.random.PRNGKey(0)
    kx, k1, k2, k3, k4 = jax.random.split(key, 5)

    x = jax.random.normal(kx, (N, Cin, H, W), jnp.float32)

    params = {
        # HWIO conv weight layout (kh, kw, cin, cout), deterministic init
        "w_enc": 0.1 * jax.random.normal(k1, (3, 3, Cin, Chid), jnp.float32),
        "b_enc": 0.1 * jax.random.normal(k2, (Chid,), jnp.float32),
        "w_dec": 0.1 * jax.random.normal(k3, (3, 3, Chid, Cin), jnp.float32),
        "b_dec": 0.1 * jax.random.normal(k4, (Cin,), jnp.float32),
    }

    out = jax.jit(model_test_rec_forward)(params, x)
    out = jax.block_until_ready(out)

    ref = jax.block_until_ready(_forward_ref(params, x))
    assert out.shape == x.shape and out.dtype == jnp.float32
    np.testing.assert_allclose(np.asarray(out), np.asarray(ref),
                               rtol=1e-5, atol=1e-5)

    print("KERNEL_OK")
</pallas_src>

<mosaic_0001>
module attributes {stable_mosaic.version = 11 : i64} {
  func.func @_fused_rec_kernel(%arg0: i32, %arg1: memref<1x4x396xf32, #tpu.memory_space<vmem>>, %arg2: memref<9x8x4xf32, #tpu.memory_space<vmem>>, %arg3: memref<8x1xf32, #tpu.memory_space<vmem>>, %arg4: memref<9x4x8xf32, #tpu.memory_space<vmem>>, %arg5: memref<4x1xf32, #tpu.memory_space<vmem>>, %arg6: memref<1x324xf32, #tpu.memory_space<vmem>>, %arg7: memref<1x4x324xf32, #tpu.memory_space<vmem>>, %arg8: memref<8x396xf32, #tpu.memory_space<vmem>>) attributes {dimension_semantics = [#tpu.dimension_semantics<parallel>], iteration_bounds = array<i64: 2>, scalar_prefetch = 0 : i64, scratch_operands = 1 : i64, tpu.core_type = #tpu.core_type<tc>, window_params = [{transform_indices = @transform_0, window_bounds = array<i64: 1, 4, 396>}, {pipeline_mode = #tpu.pipeline_mode<synchronous>, transform_indices = @transform_1, window_bounds = array<i64: 9, 8, 4>}, {pipeline_mode = #tpu.pipeline_mode<synchronous>, transform_indices = @transform_2, window_bounds = array<i64: 8, 1>}, {pipeline_mode = #tpu.pipeline_mode<synchronous>, transform_indices = @transform_3, window_bounds = array<i64: 9, 4, 8>}, {pipeline_mode = #tpu.pipeline_mode<synchronous>, transform_indices = @transform_4, window_bounds = array<i64: 4, 1>}, {pipeline_mode = #tpu.pipeline_mode<synchronous>, transform_indices = @transform_5, window_bounds = array<i64: 1, 324>}, {transform_indices = @transform_6, window_bounds = array<i64: 1, 4, 324>}]} {
    %c0 = arith.constant 0 : index
    %c0_0 = arith.constant 0 : index
    %c0_1 = arith.constant 0 : index
    %0 = vector.load %arg1[%c0, %c0_0, %c0_1] : memref<1x4x396xf32, #tpu.memory_space<vmem>>, vector<1x4x396xf32>
    %1 = vector.shape_cast %0 : vector<1x4x396xf32> to vector<4x396xf32>
    %cst = arith.constant 0.000000e+00 : f32
    %2 = vector.broadcast %cst : f32 to vector<8x324xf32>
    %c0_2 = arith.constant 0 : index
    %c0_3 = arith.constant 0 : index
    %c0_4 = arith.constant 0 : index
    %3 = vector.load %arg2[%c0_2, %c0_3, %c0_4] : memref<9x8x4xf32, #tpu.memory_space<vmem>>, vector<1x8x4xf32>
    %4 = vector.shape_cast %3 : vector<1x8x4xf32> to vector<8x4xf32>
    %5 = vector.extract_strided_slice %1 {offsets = [0, 17], sizes = [4, 324], strides = [1, 1]} : vector<4x396xf32> to vector<4x324xf32>
    %cst_5 = arith.constant dense<0.000000e+00> : vector<8x324xf32>
    %6 = tpu.matmul %4, %5, %cst_5 {dimension_numbers = #tpu.dot_dimension_numbers<[1], [0], [0], [1], [0, 0, 1, 1], [], []>} : vector<8x4xf32>, vector<4x324xf32>, vector<8x324xf32> -> vector<8x324xf32>
    %7 = arith.addf %2, %6 : vector<8x324xf32>
    %c1 = arith.constant 1 : index
    %c0_6 = arith.constant 0 : index
    %c0_7 = arith.constant 0 : index
    %8 = vector.load %arg2[%c1, %c0_6, %c0_7] : memref<9x8x4xf32, #tpu.memory_space<vmem>>, vector<1x8x4xf32>
    %9 = vector.shape_cast %8 : vector<1x8x4xf32> to vector<8x4xf32>
    %10 = vector.extract_strided_slice %1 {offsets = [0, 18], sizes = [4, 324], strides = [1, 1]} : vector<4x396xf32> to vector<4x324xf32>
    %cst_8 = arith.constant dense<0.000000e+00> : vector<8x324xf32>
    %11 = tpu.matmul %9, %10, %cst_8 {dimension_numbers = #tpu.dot_dimension_numbers<[1], [0], [0], [1], [0, 0, 1, 1], [], []>} : vector<8x4xf32>, vector<4x324xf32>, vector<8x324xf32> -> vector<8x324xf32>
    %12 = arith.addf %7, %11 : vector<8x324xf32>
    %c2 = arith.constant 2 : index
    %c0_9 = arith.constant 0 : index
    %c0_10 = arith.constant 0 : index
    %13 = vector.load %arg2[%c2, %c0_9, %c0_10] : memref<9x8x4xf32, #tpu.memory_space<vmem>>, vector<1x8x4xf32>
    %14 = vector.shape_cast %13 : vector<1x8x4xf32> to vector<8x4xf32>
    %15 = vector.extract_strided_slice %1 {offsets = [0, 19], sizes = [4, 324], strides = [1, 1]} : vector<4x396xf32> to vector<4x324xf32>
    %cst_11 = arith.constant dense<0.000000e+00> : vector<8x324xf32>
    %16 = tpu.matmul %14, %15, %cst_11 {dimension_numbers = #tpu.dot_dimension_numbers<[1], [0], [0], [1], [0, 0, 1, 1], [], []>} : vector<8x4xf32>, vector<4x324xf32>, vector<8x324xf32> -> vector<8x324xf32>
    %17 = arith.addf %12, %16 : vector<8x324xf32>
    %c3 = arith.constant 3 : index
    %c0_12 = arith.constant 0 : index
    %c0_13 = arith.constant 0 : index
    %18 = vector.load %arg2[%c3, %c0_12, %c0_13] : memref<9x8x4xf32, #tpu.memory_space<vmem>>, vector<1x8x4xf32>
    %19 = vector.shape_cast %18 : vector<1x8x4xf32> to vector<8x4xf32>
    %20 = vector.extract_strided_slice %1 {offsets = [0, 35], sizes = [4, 324], strides = [1, 1]} : vector<4x396xf32> to vector<4x324xf32>
    %cst_14 = arith.constant dense<0.000000e+00> : vector<8x324xf32>
    %21 = tpu.matmul %19, %20, %cst_14 {dimension_numbers = #tpu.dot_dimension_numbers<[1], [0], [0], [1], [0, 0, 1, 1], [], []>} : vector<8x4xf32>, vector<4x324xf32>, vector<8x324xf32> -> vector<8x324xf32>
    %22 = arith.addf %17, %21 : vector<8x324xf32>
    %c4 = arith.constant 4 : index
    %c0_15 = arith.constant 0 : index
    %c0_16 = arith.constant 0 : index
    %23 = vector.load %arg2[%c4, %c0_15, %c0_16] : memref<9x8x4xf32, #tpu.memory_space<vmem>>, vector<1x8x4xf32>
    %24 = vector.shape_cast %23 : vector<1x8x4xf32> to vector<8x4xf32>
    %25 = vector.extract_strided_slice %1 {offsets = [0, 36], sizes = [4, 324], strides = [1, 1]} : vector<4x396xf32> to vector<4x324xf32>
    %cst_17 = arith.constant dense<0.000000e+00> : vector<8x324xf32>
    %26 = tpu.matmul %24, %25, %cst_17 {dimension_numbers = #tpu.dot_dimension_numbers<[1], [0], [0], [1], [0, 0, 1, 1], [], []>} : vector<8x4xf32>, vector<4x324xf32>, vector<8x324xf32> -> vector<8x324xf32>
    %27 = arith.addf %22, %26 : vector<8x324xf32>
    %c5 = arith.constant 5 : index
    %c0_18 = arith.constant 0 : index
    %c0_19 = arith.constant 0 : index
    %28 = vector.load %arg2[%c5, %c0_18, %c0_19] : memref<9x8x4xf32, #tpu.memory_space<vmem>>, vector<1x8x4xf32>
    %29 = vector.shape_cast %28 : vector<1x8x4xf32> to vector<8x4xf32>
    %30 = vector.extract_strided_slice %1 {offsets = [0, 37], sizes = [4, 324], strides = [1, 1]} : vector<4x396xf32> to vector<4x324xf32>
    %cst_20 = arith.constant dense<0.000000e+00> : vector<8x324xf32>
    %31 = tpu.matmul %29, %30, %cst_20 {dimension_numbers = #tpu.dot_dimension_numbers<[1], [0], [0], [1], [0, 0, 1, 1], [], []>} : vector<8x4xf32>, vector<4x324xf32>, vector<8x324xf32> -> vector<8x324xf32>
    %32 = arith.addf %27, %31 : vector<8x324xf32>
    %c6 = arith.constant 6 : index
    %c0_21 = arith.constant 0 : index
    %c0_22 = arith.constant 0 : index
    %33 = vector.load %arg2[%c6, %c0_21, %c0_22] : memref<9x8x4xf32, #tpu.memory_space<vmem>>, vector<1x8x4xf32>
    %34 = vector.shape_cast %33 : vector<1x8x4xf32> to vector<8x4xf32>
    %35 = vector.extract_strided_slice %1 {offsets = [0, 53], sizes = [4, 324], strides = [1, 1]} : vector<4x396xf32> to vector<4x324xf32>
    %cst_23 = arith.constant dense<0.000000e+00> : vector<8x324xf32>
    %36 = tpu.matmul %34, %35, %cst_23 {dimension_numbers = #tpu.dot_dimension_numbers<[1], [0], [0], [1], [0, 0, 1, 1], [], []>} : vector<8x4xf32>, vector<4x324xf32>, vector<8x324xf32> -> vector<8x324xf32>
    %37 = arith.addf %32, %36 : vector<8x324xf32>
    %c7 = arith.constant 7 : index
    %c0_24 = arith.constant 0 : index
    %c0_25 = arith.constant 0 : index
    %38 = vector.load %arg2[%c7, %c0_24, %c0_25] : memref<9x8x4xf32, #tpu.memory_space<vmem>>, vector<1x8x4xf32>
    %39 = vector.shape_cast %38 : vector<1x8x4xf32> to vector<8x4xf32>
    %40 = vector.extract_strided_slice %1 {offsets = [0, 54], sizes = [4, 324], strides = [1, 1]} : vector<4x396xf32> to vector<4x324xf32>
    %cst_26 = arith.constant dense<0.000000e+00> : vector<8x324xf32>
    %41 = tpu.matmul %39, %40, %cst_26 {dimension_numbers = #tpu.dot_dimension_numbers<[1], [0], [0], [1], [0, 0, 1, 1], [], []>} : vector<8x4xf32>, vector<4x324xf32>, vector<8x324xf32> -> vector<8x324xf32>
    %42 = arith.addf %37, %41 : vector<8x324xf32>
    %c8 = arith.constant 8 : index
    %c0_27 = arith.constant 0 : index
    %c0_28 = arith.constant 0 : index
    %43 = vector.load %arg2[%c8, %c0_27, %c0_28] : memref<9x8x4xf32, #tpu.memory_space<vmem>>, vector<1x8x4xf32>
    %44 = vector.shape_cast %43 : vector<1x8x4xf32> to vector<8x4xf32>
    %45 = vector.extract_strided_slice %1 {offsets = [0, 55], sizes = [4, 324], strides = [1, 1]} : vector<4x396xf32> to vector<4x324xf32>
    %cst_29 = arith.constant dense<0.000000e+00> : vector<8x324xf32>
    %46 = tpu.matmul %44, %45, %cst_29 {dimension_numbers = #tpu.dot_dimension_numbers<[1], [0], [0], [1], [0, 0, 1, 1], [], []>} : vector<8x4xf32>, vector<4x324xf32>, vector<8x324xf32> -> vector<8x324xf32>
    %47 = arith.addf %42, %46 : vector<8x324xf32>
    %c0_30 = arith.constant 0 : index
    %c0_31 = arith.constant 0 : index
    %48 = vector.load %arg3[%c0_30, %c0_31] : memref<8x1xf32, #tpu.memory_space<vmem>>, vector<8x1xf32>
    %49 = vector.broadcast %48 : vector<8x1xf32> to vector<8x324xf32>
    %50 = arith.addf %47, %49 : vector<8x324xf32>
    %cst_32 = arith.constant 0.000000e+00 : f32
    %51 = vector.broadcast %cst_32 : f32 to vector<8x324xf32>
    %52 = arith.maximumf %50, %51 : vector<8x324xf32>
    %c0_33 = arith.constant 0 : index
    %c0_34 = arith.constant 0 : index
    %53 = vector.load %arg6[%c0_33, %c0_34] : memref<1x324xf32, #tpu.memory_space<vmem>>, vector<1x324xf32>
    %54 = vector.broadcast %53 : vector<1x324xf32> to vector<8x324xf32>
    %55 = arith.mulf %52, %54 : vector<8x324xf32>
    %cst_35 = arith.constant 0.000000e+00 : f32
    %56 = vector.broadcast %cst_35 : f32 to vector<8x396xf32>
    %c0_36 = arith.constant 0 : index
    %c0_37 = arith.constant 0 : index
    %57 = vector.load %arg8[%c0_36, %c0_37] : memref<8x396xf32, #tpu.memory_space<vmem>>, vector<8x396xf32>
    tpu.vector_store %arg8[%c0_36, %c0_37], %56 {strides = array<i32>} : memref<8x396xf32, #tpu.memory_space<vmem>>, vector<8x396xf32>,
    %c0_38 = arith.constant 0 : index
    %c36 = arith.constant 36 : index
    %58 = vector.load %arg8[%c0_38, %c36] : memref<8x396xf32, #tpu.memory_space<vmem>>, vector<8x324xf32>
    tpu.vector_store %arg8[%c0_38, %c36], %55 {strides = array<i32>} : memref<8x396xf32, #tpu.memory_space<vmem>>, vector<8x324xf32>,
    %cst_39 = arith.constant 0.000000e+00 : f32
    %59 = vector.broadcast %cst_39 : f32 to vector<4x324xf32>
    %c0_40 = arith.constant 0 : index
    %c0_41 = arith.constant 0 : index
    %c0_42 = arith.constant 0 : index
    %60 = vector.load %arg4[%c0_40, %c0_41, %c0_42] : memref<9x4x8xf32, #tpu.memory_space<vmem>>, vector<1x4x8xf32>
    %61 = vector.shape_cast %60 : vector<1x4x8xf32> to vector<4x8xf32>
    %c0_43 = arith.constant 0 : index
    %c17 = arith.constant 17 : index
    %62 = vector.load %arg8[%c0_43, %c17] : memref<8x396xf32, #tpu.memory_space<vmem>>, vector<8x324xf32>
    %cst_44 = arith.constant dense<0.000000e+00> : vector<4x324xf32>
    %63 = tpu.matmul %61, %62, %cst_44 {dimension_numbers = #tpu.dot_dimension_numbers<[1], [0], [0], [1], [0, 0, 1, 1], [], []>} : vector<4x8xf32>, vector<8x324xf32>, vector<4x324xf32> -> vector<4x324xf32>
    %64 = arith.addf %59, %63 : vector<4x324xf32>
    %c1_45 = arith.constant 1 : index
    %c0_46 = arith.constant 0 : index
    %c0_47 = arith.constant 0 : index
    %65 = vector.load %arg4[%c1_45, %c0_46, %c0_47] : memref<9x4x8xf32, #tpu.memory_space<vmem>>, vector<1x4x8xf32>
    %66 = vector.shape_cast %65 : vector<1x4x8xf32> to vector<4x8xf32>
    %c0_48 = arith.constant 0 : index
    %c18 = arith.constant 18 : index
    %67 = vector.load %arg8[%c0_48, %c18] : memref<8x396xf32, #tpu.memory_space<vmem>>, vector<8x324xf32>
    %cst_49 = arith.constant dense<0.000000e+00> : vector<4x324xf32>
    %68 = tpu.matmul %66, %67, %cst_49 {dimension_numbers = #tpu.dot_dimension_numbers<[1], [0], [0], [1], [0, 0, 1, 1], [], []>} : vector<4x8xf32>, vector<8x324xf32>, vector<4x324xf32> -> vector<4x324xf32>
    %69 = arith.addf %64, %68 : vector<4x324xf32>
    %c2_50 = arith.constant 2 : index
    %c0_51 = arith.constant 0 : index
    %c0_52 = arith.constant 0 : index
    %70 = vector.load %arg4[%c2_50, %c0_51, %c0_52] : memref<9x4x8xf32, #tpu.memory_space<vmem>>, vector<1x4x8xf32>
    %71 = vector.shape_cast %70 : vector<1x4x8xf32> to vector<4x8xf32>
    %c0_53 = arith.constant 0 : index
    %c19 = arith.constant 19 : index
    %72 = vector.load %arg8[%c0_53, %c19] : memref<8x396xf32, #tpu.memory_space<vmem>>, vector<8x324xf32>
    %cst_54 = arith.constant dense<0.000000e+00> : vector<4x324xf32>
    %73 = tpu.matmul %71, %72, %cst_54 {dimension_numbers = #tpu.dot_dimension_numbers<[1], [0], [0], [1], [0, 0, 1, 1], [], []>} : vector<4x8xf32>, vector<8x324xf32>, vector<4x324xf32> -> vector<4x324xf32>
    %74 = arith.addf %69, %73 : vector<4x324xf32>
    %c3_55 = arith.constant 3 : index
    %c0_56 = arith.constant 0 : index
    %c0_57 = arith.constant 0 : index
    %75 = vector.load %arg4[%c3_55, %c0_56, %c0_57] : memref<9x4x8xf32, #tpu.memory_space<vmem>>, vector<1x4x8xf32>
    %76 = vector.shape_cast %75 : vector<1x4x8xf32> to vector<4x8xf32>
    %c0_58 = arith.constant 0 : index
    %c35 = arith.constant 35 : index
    %77 = vector.load %arg8[%c0_58, %c35] : memref<8x396xf32, #tpu.memory_space<vmem>>, vector<8x324xf32>
    %cst_59 = arith.constant dense<0.000000e+00> : vector<4x324xf32>
    %78 = tpu.matmul %76, %77, %cst_59 {dimension_numbers = #tpu.dot_dimension_numbers<[1], [0], [0], [1], [0, 0, 1, 1], [], []>} : vector<4x8xf32>, vector<8x324xf32>, vector<4x324xf32> -> vector<4x324xf32>
    %79 = arith.addf %74, %78 : vector<4x324xf32>
    %c4_60 = arith.constant 4 : index
    %c0_61 = arith.constant 0 : index
    %c0_62 = arith.constant 0 : index
    %80 = vector.load %arg4[%c4_60, %c0_61, %c0_62] : memref<9x4x8xf32, #tpu.memory_space<vmem>>, vector<1x4x8xf32>
    %81 = vector.shape_cast %80 : vector<1x4x8xf32> to vector<4x8xf32>
    %c0_63 = arith.constant 0 : index
    %c36_64 = arith.constant 36 : index
    %82 = vector.load %arg8[%c0_63, %c36_64] : memref<8x396xf32, #tpu.memory_space<vmem>>, vector<8x324xf32>
    %cst_65 = arith.constant dense<0.000000e+00> : vector<4x324xf32>
    %83 = tpu.matmul %81, %82, %cst_65 {dimension_numbers = #tpu.dot_dimension_numbers<[1], [0], [0], [1], [0, 0, 1, 1], [], []>} : vector<4x8xf32>, vector<8x324xf32>, vector<4x324xf32> -> vector<4x324xf32>
    %84 = arith.addf %79, %83 : vector<4x324xf32>
    %c5_66 = arith.constant 5 : index
    %c0_67 = arith.constant 0 : index
    %c0_68 = arith.constant 0 : index
    %85 = vector.load %arg4[%c5_66, %c0_67, %c0_68] : memref<9x4x8xf32, #tpu.memory_space<vmem>>, vector<1x4x8xf32>
    %86 = vector.shape_cast %85 : vector<1x4x8xf32> to vector<4x8xf32>
    %c0_69 = arith.constant 0 : index
    %c37 = arith.constant 37 : index
    %87 = vector.load %arg8[%c0_69, %c37] : memref<8x396xf32, #tpu.memory_space<vmem>>, vector<8x324xf32>
    %cst_70 = arith.constant dense<0.000000e+00> : vector<4x324xf32>
    %88 = tpu.matmul %86, %87, %cst_70 {dimension_numbers = #tpu.dot_dimension_numbers<[1], [0], [0], [1], [0, 0, 1, 1], [], []>} : vector<4x8xf32>, vector<8x324xf32>, vector<4x324xf32> -> vector<4x324xf32>
    %89 = arith.addf %84, %88 : vector<4x324xf32>
    %c6_71 = arith.constant 6 : index
    %c0_72 = arith.constant 0 : index
    %c0_73 = arith.constant 0 : index
    %90 = vector.load %arg4[%c6_71, %c0_72, %c0_73] : memref<9x4x8xf32, #tpu.memory_space<vmem>>, vector<1x4x8xf32>
    %91 = vector.shape_cast %90 : vector<1x4x8xf32> to vector<4x8xf32>
    %c0_74 = arith.constant 0 : index
    %c53 = arith.constant 53 : index
    %92 = vector.load %arg8[%c0_74, %c53] : memref<8x396xf32, #tpu.memory_space<vmem>>, vector<8x324xf32>
    %cst_75 = arith.constant dense<0.000000e+00> : vector<4x324xf32>
    %93 = tpu.matmul %91, %92, %cst_75 {dimension_numbers = #tpu.dot_dimension_numbers<[1], [0], [0], [1], [0, 0, 1, 1], [], []>} : vector<4x8xf32>, vector<8x324xf32>, vector<4x324xf32> -> vector<4x324xf32>
    %94 = arith.addf %89, %93 : vector<4x324xf32>
    %c7_76 = arith.constant 7 : index
    %c0_77 = arith.constant 0 : index
    %c0_78 = arith.constant 0 : index
    %95 = vector.load %arg4[%c7_76, %c0_77, %c0_78] : memref<9x4x8xf32, #tpu.memory_space<vmem>>, vector<1x4x8xf32>
    %96 = vector.shape_cast %95 : vector<1x4x8xf32> to vector<4x8xf32>
    %c0_79 = arith.constant 0 : index
    %c54 = arith.constant 54 : index
    %97 = vector.load %arg8[%c0_79, %c54] : memref<8x396xf32, #tpu.memory_space<vmem>>, vector<8x324xf32>
    %cst_80 = arith.constant dense<0.000000e+00> : vector<4x324xf32>
    %98 = tpu.matmul %96, %97, %cst_80 {dimension_numbers = #tpu.dot_dimension_numbers<[1], [0], [0], [1], [0, 0, 1, 1], [], []>} : vector<4x8xf32>, vector<8x324xf32>, vector<4x324xf32> -> vector<4x324xf32>
    %99 = arith.addf %94, %98 : vector<4x324xf32>
    %c8_81 = arith.constant 8 : index
    %c0_82 = arith.constant 0 : index
    %c0_83 = arith.constant 0 : index
    %100 = vector.load %arg4[%c8_81, %c0_82, %c0_83] : memref<9x4x8xf32, #tpu.memory_space<vmem>>, vector<1x4x8xf32>
    %101 = vector.shape_cast %100 : vector<1x4x8xf32> to vector<4x8xf32>
    %c0_84 = arith.constant 0 : index
    %c55 = arith.constant 55 : index
    %102 = vector.load %arg8[%c0_84, %c55] : memref<8x396xf32, #tpu.memory_space<vmem>>, vector<8x324xf32>
    %cst_85 = arith.constant dense<0.000000e+00> : vector<4x324xf32>
    %103 = tpu.matmul %101, %102, %cst_85 {dimension_numbers = #tpu.dot_dimension_numbers<[1], [0], [0], [1], [0, 0, 1, 1], [], []>} : vector<4x8xf32>, vector<8x324xf32>, vector<4x324xf32> -> vector<4x324xf32>
    %104 = arith.addf %99, %103 : vector<4x324xf32>
    %c0_86 = arith.constant 0 : index
    %c0_87 = arith.constant 0 : index
    %105 = vector.load %arg5[%c0_86, %c0_87] : memref<4x1xf32, #tpu.memory_space<vmem>>, vector<4x1xf32>
    %106 = vector.broadcast %105 : vector<4x1xf32> to vector<4x324xf32>
    %107 = arith.addf %104, %106 : vector<4x324xf32>
    %108 = math.tanh %107 : vector<4x324xf32>
    %c0_88 = arith.constant 0 : index
    %c0_89 = arith.constant 0 : index
    %c0_90 = arith.constant 0 : index
    %109 = vector.load %arg7[%c0_88, %c0_89, %c0_90] : memref<1x4x324xf32, #tpu.memory_space<vmem>>, vector<1x4x324xf32>
    %110 = vector.shape_cast %109 : vector<1x4x324xf32> to vector<4x324xf32>
    %111 = vector.shape_cast %108 : vector<4x324xf32> to vector<1x4x324xf32>
    tpu.vector_store %arg7[%c0_88, %c0_89, %c0_90], %111 {strides = array<i32>} : memref<1x4x324xf32, #tpu.memory_space<vmem>>, vector<1x4x324xf32>,
    return
  }
  func.func @transform_0(%arg0: i32) -> (i32, i32, i32) {
    %c0_i32 = arith.constant 0 : i32
    %c0_i32_0 = arith.constant 0 : i32
    %c0_i32_1 = arith.constant 0 : i32
    return %arg0, %c0_i32, %c0_i32_0 : i32, i32, i32
  }
  func.func @transform_1(%arg0: i32) -> (i32, i32, i32) {
    %c0_i32 = arith.constant 0 : i32
    %c0_i32_0 = arith.constant 0 : i32
    %c0_i32_1 = arith.constant 0 : i32
    %c0_i32_2 = arith.constant 0 : i32
    return %c0_i32, %c0_i32_0, %c0_i32_1 : i32, i32, i32
  }
  func.func @transform_2(%arg0: i32) -> (i32, i32) {
    %c0_i32 = arith.constant 0 : i32
    %c0_i32_0 = arith.constant 0 : i32
    %c0_i32_1 = arith.constant 0 : i32
    return %c0_i32, %c0_i32_0 : i32, i32
  }
  func.func @transform_3(%arg0: i32) -> (i32, i32, i32) {
    %c0_i32 = arith.constant 0 : i32
    %c0_i32_0 = arith.constant 0 : i32
    %c0_i32_1 = arith.constant 0 : i32
    %c0_i32_2 = arith.constant 0 : i32
    return %c0_i32, %c0_i32_0, %c0_i32_1 : i32, i32, i32
  }
  func.func @transform_4(%arg0: i32) -> (i32, i32) {
    %c0_i32 = arith.constant 0 : i32
    %c0_i32_0 = arith.constant 0 : i32
    %c0_i32_1 = arith.constant 0 : i32
    return %c0_i32, %c0_i32_0 : i32, i32
  }
  func.func @transform_5(%arg0: i32) -> (i32, i32) {
    %c0_i32 = arith.constant 0 : i32
    %c0_i32_0 = arith.constant 0 : i32
    %c0_i32_1 = arith.constant 0 : i32
    return %c0_i32, %c0_i32_0 : i32, i32
  }
  func.func @transform_6(%arg0: i32) -> (i32, i32, i32) {
    %c0_i32 = arith.constant 0 : i32
    %c0_i32_0 = arith.constant 0 : i32
    %c0_i32_1 = arith.constant 0 : i32
    return %arg0, %c0_i32, %c0_i32_0 : i32, i32, i32
  }
}

</mosaic_0001>

<llo_original>
// kernel: model_test_rec_forward.1
$region0: #{model_test_rec_forward.1}
  #allocation0 [shape = 'u32[]', space=smem, size = 0x4, offset = 0x4, fixed_abs, tag = 'smem constant byte address 0x4 - core index']
  #allocation1 [shape = 'u32[144,128]{1,0:T(1,128)}', space=vmem, size = 0x12000, scoped, tag = 'internal scratch']
  #allocation2 [shape = 'f32[8,396]{1,0:T(8,128)}', space=vmem, size = 0x4000, scoped, tag = 'scratch operand']
  %s0 = inlined_call_operand.vmem [shape: f32[2,4,396], index: 0, kind: input, shape index: {}]
  %s1 = inlined_call_operand.vmem [shape: f32[9,8,4], index: 1, kind: input, shape index: {}]
  %s2 = inlined_call_operand.vmem [shape: f32[8,1], index: 2, kind: input, shape index: {}]
  %s3 = inlined_call_operand.vmem [shape: f32[9,4,8], index: 3, kind: input, shape index: {}]
  %s4 = inlined_call_operand.vmem [shape: f32[4,1], index: 4, kind: input, shape index: {}]
  %s5 = inlined_call_operand.vmem [shape: f32[1,324], index: 5, kind: input, shape index: {}]
  %s6 = inlined_call_operand.vmem [shape: f32[2,4,324], index: 6, kind: output, shape index: {}]
  %s7 = sld [smem:[#allocation0]]
  $region57: #{model_test_rec_forward.1} parent=0
    _
  %s9 = ssub.s32 1, %s7
  %s10 = scalar_select 0, %s9, %s7
  loop: start=0, step=1, limit=4
  $region2: #{model_test_rec_forward.1} parent=0 // loop_pre_header
    _
  $region3: #{model_test_rec_forward.1} parent=0 // loop_header
    %s12 = sphi 0, %s16
    %p13 = scmp.ge.s32.totalorder %s12, 4
    %s22 = sphi 0, %s24
    %s25 = sphi 0, %s22
    %s26 = sphi 0, %s25
    %s42 = sphi 0, %s26
    %s46 = sphi 0, %s46
    %s48 = sphi 0, %s46
    %s49 = sphi 0, %s48
    %s63 = sphi 0, %s49
    %s67 = sphi 0, %s67
    %s69 = sphi 0, %s67
    %s70 = sphi 0, %s69
    %s84 = sphi 0, %s70
    %s88 = sphi 0, %s88
    %s90 = sphi 0, %s88
    %s91 = sphi 0, %s90
    %s105 = sphi 0, %s91
    %s109 = sphi 0, %s109
    %s111 = sphi 0, %s109
    %s112 = sphi 0, %s111
    %s126 = sphi 0, %s112
    %s130 = sphi 0, %s130
    %s132 = sphi 0, %s130
    %s133 = sphi 0, %s132
    %s147 = sphi 0, %s133
    %s153 = sphi 0, %s155
    %s156 = sphi 0, %s153
    %s157 = sphi 0, %s156
    %s173 = sphi 0, %s157
  $region4: #{model_test_rec_forward.1} parent=0 // loop_header_branch
    %15 = sbr.rel (%p13) target = $region8
  $region5: #{model_test_rec_forward.1} parent=0 // loop_body
    %s17 = ssub.s32 %s12, 1
    %s18 = ssub.s32 %s12, 2
    %s19 = sadd.s32 %s12, 1
    %s20 = ssub.s32 %s12, %s19
    %p21 = scmp.eq.s32.totalorder %s20, 0
    %s23 = sadd.s32 %s22, 1
    %s24 = scalar_select %p21, %s22, %s23
    %p27 = pneg %p21
    %p28 = scmp.eq.s32.totalorder %s12, 1
    %p29 = por %p27, %p28
    %p30 = scmp.ne.s32.totalorder %s22, %s25
    %p31 = scmp.eq.s32.totalorder %s12, 0
    %p32 = por %p30, %p31
    %p33 = scmp.ne.s32.totalorder %s22, %s25
    %p34 = scmp.eq.s32.totalorder %s17, 1
    %p35 = por %p33, %p34
    %p36 = scmp.ne.s32.totalorder %s25, %s26
    %p37 = scmp.eq.s32.totalorder %s17, 0
    %p38 = por %p36, %p37
    %p39 = scmp.ne.s32.totalorder %s25, %s26
    %p40 = scmp.eq.s32.totalorder %s18, 1
    %p41 = por %p39, %p40
    %p43 = scmp.ne.s32.totalorder %s26, %s42
    %p44 = scmp.eq.s32.totalorder %s18, 0
    %p45 = por %p43, %p44
    %s47 = sadd.s32 %s46, 1
    %p50 = scmp.eq.s32.totalorder %s12, 1
    %p51 = scmp.ne.s32.totalorder %s46, %s48
    %p52 = scmp.eq.s32.totalorder %s12, 0
    %p53 = por %p51, %p52
    %p54 = scmp.ne.s32.totalorder %s46, %s48
    %p55 = scmp.eq.s32.totalorder %s17, 1
    %p56 = por %p54, %p55
    %p57 = scmp.ne.s32.totalorder %s48, %s49
    %p58 = scmp.eq.s32.totalorder %s17, 0
    %p59 = por %p57, %p58
    %p60 = scmp.ne.s32.totalorder %s48, %s49
    %p61 = scmp.eq.s32.totalorder %s18, 1
    %p62 = por %p60, %p61
    %p64 = scmp.ne.s32.totalorder %s49, %s63
    %p65 = scmp.eq.s32.totalorder %s18, 0
    %p66 = por %p64, %p65
    %s68 = sadd.s32 %s67, 1
    %p71 = scmp.eq.s32.totalorder %s12, 1
    %p72 = scmp.ne.s32.totalorder %s67, %s69
    %p73 = scmp.eq.s32.totalorder %s12, 0
    %p74 = por %p72, %p73
    %p75 = scmp.ne.s32.totalorder %s67, %s69
    %p76 = scmp.eq.s32.totalorder %s17, 1
    %p77 = por %p75, %p76
    %p78 = scmp.ne.s32.totalorder %s69, %s70
    %p79 = scmp.eq.s32.totalorder %s17, 0
    %p80 = por %p78, %p79
    %p81 = scmp.ne.s32.totalorder %s69, %s70
    %p82 = scmp.eq.s32.totalorder %s18, 1
    %p83 = por %p81, %p82
    %p85 = scmp.ne.s32.totalorder %s70, %s84
    %p86 = scmp.eq.s32.totalorder %s18, 0
    %p87 = por %p85, %p86
    %s89 = sadd.s32 %s88, 1
    %p92 = scmp.eq.s32.totalorder %s12, 1
    %p93 = scmp.ne.s32.totalorder %s88, %s90
    %p94 = scmp.eq.s32.totalorder %s12, 0
    %p95 = por %p93, %p94
    %p96 = scmp.ne.s32.totalorder %s88, %s90
    %p97 = scmp.eq.s32.totalorder %s17, 1
    %p98 = por %p96, %p97
    %p99 = scmp.ne.s32.totalorder %s90, %s91
    %p100 = scmp.eq.s32.totalorder %s17, 0
    %p101 = por %p99, %p100
    %p102 = scmp.ne.s32.totalorder %s90, %s91
    %p103 = scmp.eq.s32.totalorder %s18, 1
    %p104 = por %p102, %p103
    %p106 = scmp.ne.s32.totalorder %s91, %s105
    %p107 = scmp.eq.s32.totalorder %s18, 0
    %p108 = por %p106, %p107
    %s110 = sadd.s32 %s109, 1
    %p113 = scmp.eq.s32.totalorder %s12, 1
    %p114 = scmp.ne.s32.totalorder %s109, %s111
    %p115 = scmp.eq.s32.totalorder %s12, 0
    %p116 = por %p114, %p115
    %p117 = scmp.ne.s32.totalorder %s109, %s111
    %p118 = scmp.eq.s32.totalorder %s17, 1
    %p119 = por %p117, %p118
    %p120 = scmp.ne.s32.totalorder %s111, %s112
    %p121 = scmp.eq.s32.totalorder %s17, 0
    %p122 = por %p120, %p121
    %p123 = scmp.ne.s32.totalorder %s111, %s112
    %p124 = scmp.eq.s32.totalorder %s18, 1
    %p125 = por %p123, %p124
    %p127 = scmp.ne.s32.totalorder %s112, %s126
    %p128 = scmp.eq.s32.totalorder %s18, 0
    %p129 = por %p127, %p128
    %s131 = sadd.s32 %s130, 1
    %p134 = scmp.eq.s32.totalorder %s12, 1
    %p135 = scmp.ne.s32.totalorder %s130, %s132
    %p136 = scmp.eq.s32.totalorder %s12, 0
    %p137 = por %p135, %p136
    %p138 = scmp.ne.s32.totalorder %s130, %s132
    %p139 = scmp.eq.s32.totalorder %s17, 1
    %p140 = por %p138, %p139
    %p141 = scmp.ne.s32.totalorder %s132, %s133
    %p142 = scmp.eq.s32.totalorder %s17, 0
    %p143 = por %p141, %p142
    %p144 = scmp.ne.s32.totalorder %s132, %s133
    %p145 = scmp.eq.s32.totalorder %s18, 1
    %p146 = por %p144, %p145
    %p148 = scmp.ne.s32.totalorder %s133, %s147
    %p149 = scmp.eq.s32.totalorder %s18, 0
    %p150 = por %p148, %p149
    %s151 = ssub.s32 %s12, %s19
    %p152 = scmp.eq.s32.totalorder %s151, 0
    %s154 = sadd.s32 %s153, 1
    %s155 = scalar_select %p152, %s153, %s154
    %p158 = pneg %p152
    %p159 = scmp.eq.s32.totalorder %s12, 1
    %p160 = por %p158, %p159
    %p161 = scmp.ne.s32.totalorder %s153, %s156
    %p162 = scmp.eq.s32.totalorder %s12, 0
    %p163 = por %p161, %p162
    %p164 = scmp.ne.s32.totalorder %s153, %s156
    %p165 = scmp.eq.s32.totalorder %s17, 1
    %p166 = por %p164, %p165
    %p167 = scmp.ne.s32.totalorder %s156, %s157
    %p168 = scmp.eq.s32.totalorder %s17, 0
    %p169 = por %p167, %p168
    %p170 = scmp.ne.s32.totalorder %s156, %s157
    %p171 = scmp.eq.s32.totalorder %s18, 1
    %p172 = por %p170, %p171
    %p174 = scmp.ne.s32.totalorder %s157, %s173
    %p175 = scmp.eq.s32.totalorder %s18, 0
    %p176 = por %p174, %p175
    %p177 = scmp.le.s32.totalorder 1, %s12
    %p178 = scmp.lt.s32.totalorder %s12, 3
    %p179 = pnand %p177, %p178
    %p180 = pneg %p179
    // Predicated region
    $region9: #{model_test_rec_forward.1} parent=5 // pred_check
      _
    $region10: #{model_test_rec_forward.1} parent=5 // pred_check_branch
      %182 = sbr.rel (%p179) target = $region12
    $region11: #{model_test_rec_forward.1} parent=5 // pred_region
      %s183 = ssub.s32 %s12, 1
      // Predicated region
      $region13: #{model_test_rec_forward.1} parent=11 // pred_check
        %p184 = pneg %p59
      $region14: #{model_test_rec_forward.1} parent=11 // pred_check_branch
        %186 = sbr.rel (%p184) target = $region16
      $region15: #{model_test_rec_forward.1} parent=11 // pred_region
        _
      $region16: #{model_test_rec_forward.1} parent=11 // pred_fallthru
        _
      // Predicated region
      $region17: #{model_test_rec_forward.1} parent=11 // pred_check
        %p187 = pneg %p80
      $region18: #{model_test_rec_forward.1} parent=11 // pred_check_branch
        %189 = sbr.rel (%p187) target = $region20
      $region19: #{model_test_rec_forward.1} parent=11 // pred_region
        _
      $region20: #{model_test_rec_forward.1} parent=11 // pred_fallthru
        _
      // Predicated region
      $region21: #{model_test_rec_forward.1} parent=11 // pred_check
        %p190 = pneg %p101
      $region22: #{model_test_rec_forward.1} parent=11 // pred_check_branch
        %192 = sbr.rel (%p190) target = $region24
      $region23: #{model_test_rec_forward.1} parent=11 // pred_region
        _
      $region24: #{model_test_rec_forward.1} parent=11 // pred_fallthru
        _
      // Predicated region
      $region25: #{model_test_rec_forward.1} parent=11 // pred_check
        %p193 = pneg %p122
      $region26: #{model_test_rec_forward.1} parent=11 // pred_check_branch
        %195 = sbr.rel (%p193) target = $region28
      $region27: #{model_test_rec_forward.1} parent=11 // pred_region
        _
      $region28: #{model_test_rec_forward.1} parent=11 // pred_fallthru
        _
      // Predicated region
      $region29: #{model_test_rec_forward.1} parent=11 // pred_check
        %p196 = pneg %p143
      $region30: #{model_test_rec_forward.1} parent=11 // pred_check_branch
        %198 = sbr.rel (%p196) target = $region32
      $region31: #{model_test_rec_forward.1} parent=11 // pred_region
        _
      $region32: #{model_test_rec_forward.1} parent=11 // pred_fallthru
        _
    $region12: #{model_test_rec_forward.1} parent=5 // pred_fallthru
      _
    %p199 = scmp.lt.s32.totalorder %s12, 2
    // Predicated region
    $region33: #{model_test_rec_forward.1} parent=5 // pred_check
      %p200 = pneg %p199
    $region34: #{model_test_rec_forward.1} parent=5 // pred_check_branch
      %202 = sbr.rel (%p200) target = $region36
    $region35: #{model_test_rec_forward.1} parent=5 // pred_region
      // Predicated region
      $region37: #{model_test_rec_forward.1} parent=35 // pred_check
        %p203 = pneg %p32
      $region38: #{model_test_rec_forward.1} parent=35 // pred_check_branch
        %205 = sbr.rel (%p203) target = $region40
      $region39: #{model_test_rec_forward.1} parent=35 // pred_region
        %p206 = scmp.lt.s32.totalorder %s12, 1
        %s207 = scalar_select %p206, %s12, 1
        %s208 = smul.addr %s207, 4
        %s209 = smul.addr %s208, 4
        %s210 = scalar_lea.vmem %s0, %s209
      $region40: #{model_test_rec_forward.1} parent=35 // pred_fallthru
        _
    $region36: #{model_test_rec_forward.1} parent=5 // pred_fallthru
      _
    %p211 = scmp.le.s32.totalorder 1, %s12
    %p212 = scmp.lt.s32.totalorder %s12, 3
    %p213 = pnand %p211, %p212
    %p214 = pneg %p213
    // Predicated region
    $region41: #{model_test_rec_forward.1} parent=5 // pred_check
      _
    $region42: #{model_test_rec_forward.1} parent=5 // pred_check_branch
      %216 = sbr.rel (%p213) target = $region44
    $region43: #{model_test_rec_forward.1} parent=5 // pred_region
      %s217 = ssub.s32 %s12, 1
      %p218 = scmp.lt.s32.totalorder %s17, 1
      %s219 = scalar_select %p218, %s17, 1
      %s220 = smul.addr %s219, 4
      %s221 = smul.addr %s220, 4
      %s222 = scalar_lea.vmem %s0, %s221
      %p223 = pneg %p38
      %p224 = pneg %p35
      %p225 = pneg %p59
      %p226 = pneg %p56
      %p227 = pneg %p80
      %p228 = pneg %p77
      %p229 = pneg %p101
      %p230 = pneg %p98
      %p231 = pneg %p122
      %p232 = pneg %p119
      %p233 = pneg %p143
      %p234 = pneg %p140
      %p235 = pneg %p169
      %p236 = pneg %p166
      %p237 = scmp.lt.s32.totalorder %s17, 1
      %s238 = scalar_select %p237, %s17, 1
      %s239 = smul.addr %s238, 3
      %s240 = smul.addr %s239, 4
      %s241 = scalar_lea.vmem %s6, %s240
      %p242 = scmp.lt.s32.totalorder %s17, 1
      %s243 = scalar_select %p242, %s17, 1
      %s244 = smul.addr %s243, 4
      %s245 = smul.addr %s244, 4
      %s246 = scalar_lea.vmem %s0, %s245
      %p247 = scmp.lt.s32.totalorder %s17, 1
      %s248 = scalar_select %p247, %s17, 1
      %s249 = smul.addr %s248, 3
      %s250 = smul.addr %s249, 4
      %s251 = scalar_lea.vmem %s6, %s250
      %v252 = vld [vmem:[%s246] sm:$0xff]
      %v253 = vld [vmem:[%s246 + $0x8] sm:$0xff]
      %v254 = vld [vmem:[%s1] sm:$0xff]
      %s255 = scalar_lea.vmem %s1, 8
      %v256 = vld [vmem:[%s255] sm:$0xff]
      %v259 = vcombine.high %v252, %v252
      %260 = vrot.lane.b32.xlu0 %v252, 110
      %v261 = vpop.permute.xlu0 %260
      %262 = vrot.lane.b32.xlu0 %v259, 110
      %v263 = vpop.permute.xlu0 %262
      %264 = vrot.lane.b32.xlu0 %v253, 110
      %v265 = vpop.permute.xlu0 %264
      %vm266 = vcmask 900096
      %v267 = vsel %vm266, %v261, %v263
      %v268 = vsel %vm266, %v263, %v265
      %vm269 = vcmask 31744
      %v271 = vsel %vm269, %v256, 0
      %vm273 = vcmask 1043456
      %v274 = vsel %vm273, %v267, 0
      %v276 = vsel %vm273, %v268, 0
      %v278 = vsel %vm273, %v265, 0
      %280 = vmatprep.subr.mxu0 %v276
      %281 = vmatpush1.msra.mxu0 %v274
      %282 = vmatprep.subr.mxu0 0.0
      %283 = vmatpush1.msra.mxu0 0.0
      %284 = vmatprep.subr.mxu0 0.0
      %285 = vmatpush1.msra.mxu0 0.0
      %286 = vmatprep.subr.mxu0 0.0
      %287 = vmatpush1.msra.mxu0 0.0
      %288 = vmatprep.subr.mxu0 0.0
      %289 = vmatpush1.msra.mxu0 0.0
      %290 = vmatprep.subr.mxu0 0.0
      %291 = vmatpush1.msra.mxu0 0.0
      %292 = vmatprep.subr.mxu0 0.0
      %293 = vmatpush1.msra.mxu0 0.0
      %294 = vmatprep.subr.mxu0 0.0
      %295 = vmatpush1.msra.mxu0 0.0
      %296 = vmatprep.subr.mxu0 0.0
      %297 = vmatpush1.msra.mxu0 0.0
      %298 = vmatprep.subr.mxu0 0.0
      %299 = vmatpush1.msra.mxu0 0.0
      %300 = vmatprep.subr.mxu0 0.0
      %301 = vmatpush1.msra.mxu0 0.0
      %302 = vmatprep.subr.mxu0 0.0
      %303 = vmatpush1.msra.mxu0 0.0
      %304 = vmatprep.subr.mxu0 0.0
      %305 = vmatpush1.msra.mxu0 0.0
      %306 = vmatprep.subr.mxu0 0.0
      %307 = vmatpush1.msra.mxu0 0.0
      %308 = vmatprep.subr.mxu0 0.0
      %309 = vmatpush1.msra.mxu0 0.0
      %310 = vmatprep.subr.mxu0 0.0
      %311 = vmatpush1.msra.mxu0 0.0
      %312 = vmatprep.subr.mxu0 0.0
      %313 = vmatpush1.msra.mxu0 0.0
      %314 = vmatprep.subr.mxu0 0.0
      %315 = vmatpush1.msra.mxu0 0.0
      %316 = vmatprep.subr.mxu0 0.0
      %317 = vmatpush1.msra.mxu0 0.0
      %318 = vmatprep.subr.mxu0 0.0
      %319 = vmatpush1.msra.mxu0 0.0
      %320 = vmatprep.subr.mxu0 0.0
      %321 = vmatpush1.msra.mxu0 0.0
      %322 = vmatprep.subr.mxu0 0.0
      %323 = vmatpush1.msra.mxu0 0.0
      %324 = vmatprep.subr.mxu0 0.0
      %325 = vmatpush1.msra.mxu0 0.0
      %326 = vmatprep.subr.mxu0 0.0
      %327 = vmatpush1.msra.mxu0 0.0
      %328 = vmatprep.subr.mxu0 0.0
      %329 = vmatpush1.msra.mxu0 0.0
      %330 = vmatprep.subr.mxu0 0.0
      %331 = vmatpush1.msra.mxu0 0.0
      %332 = vmatprep.subr.mxu0 0.0
      %333 = vmatpush1.msra.mxu0 0.0
      %334 = vmatprep.subr.mxu0 0.0
      %335 = vmatpush1.msra.mxu0 0.0
      %336 = vmatprep.subr.mxu0 0.0
      %337 = vmatpush1.msra.mxu0 0.0
      %338 = vmatprep.subr.mxu0 0.0
      %339 = vmatpush1.msra.mxu0 0.0
      %340 = vmatprep.subr.mxu0 0.0
      %341 = vmatpush1.msra.mxu0 0.0
      %342 = vmatprep.subr.mxu0 0.0
      %343 = vmatpush1.msra.mxu0 0.0
      %344 = vmatprep.mubr.f32.mxu0 0.0
      %345 = vmatmul.mubr.f32.gmra.mrb[0].mxu0 %v271
      %v346 = vpop.f32.mrb[0].mxu0
      %v347 = vadd.f32 0.0, %v346
      %v348 = vpop.f32.mrb[0].mxu0
      %v349 = vadd.f32 0.0, %v348
      %350 = vdwg.mxu0
      %351 = vmatprep.subr.mxu0 0.0
      %352 = vmatpush1.msra.mxu0 %v278
      %353 = vmatprep.subr.mxu0 0.0
      %354 = vmatpush1.msra.mxu0 0.0
      %355 = vmatprep.subr.mxu0 0.0
      %356 = vmatpush1.msra.mxu0 0.0
      %357 = vmatprep.subr.mxu0 0.0
      %358 = vmatpush1.msra.mxu0 0.0
      %359 = vmatprep.subr.mxu0 0.0
      %360 = vmatpush1.msra.mxu0 0.0
      %361 = vmatprep.subr.mxu0 0.0
      %362 = vmatpush1.msra.mxu0 0.0
      %363 = vmatprep.subr.mxu0 0.0
      %364 = vmatpush1.msra.mxu0 0.0
      %365 = vmatprep.subr.mxu0 0.0
      %366 = vmatpush1.msra.mxu0 0.0
      %367 = vmatprep.subr.mxu0 0.0
      %368 = vmatpush1.msra.mxu0 0.0
      %369 = vmatprep.subr.mxu0 0.0
      %370 = vmatpush1.msra.mxu0 0.0
      %371 = vmatprep.subr.mxu0 0.0
      %372 = vmatpush1.msra.mxu0 0.0
      %373 = vmatprep.subr.mxu0 0.0
      %374 = vmatpush1.msra.mxu0 0.0
      %375 = vmatprep.subr.mxu0 0.0
      %376 = vmatpush1.msra.mxu0 0.0
      %377 = vmatprep.subr.mxu0 0.0
      %378 = vmatpush1.msra.mxu0 0.0
      %379 = vmatprep.subr.mxu0 0.0
      %380 = vmatpush1.msra.mxu0 0.0
      %381 = vmatprep.subr.mxu0 0.0
      %382 = vmatpush1.msra.mxu0 0.0
      %383 = vmatprep.subr.mxu0 0.0
      %384 = vmatpush1.msra.mxu0 0.0
      %385 = vmatprep.subr.mxu0 0.0
      %386 = vmatpush1.msra.mxu0 0.0
      %387 = vmatprep.subr.mxu0 0.0
      %388 = vmatpush1.msra.mxu0 0.0
      %389 = vmatprep.subr.mxu0 0.0
      %390 = vmatpush1.msra.mxu0 0.0
      %391 = vmatprep.subr.mxu0 0.0
      %392 = vmatpush1.msra.mxu0 0.0
      %393 = vmatprep.subr.mxu0 0.0
      %394 = vmatpush1.msra.mxu0 0.0
      %395 = vmatprep.subr.mxu0 0.0
      %396 = vmatpush1.msra.mxu0 0.0
      %397 = vmatprep.subr.mxu0 0.0
      %398 = vmatpush1.msra.mxu0 0.0
      %399 = vmatprep.subr.mxu0 0.0
      %400 = vmatpush1.msra.mxu0 0.0
      %401 = vmatprep.subr.mxu0 0.0
      %402 = vmatpush1.msra.mxu0 0.0
      %403 = vmatprep.subr.mxu0 0.0
      %404 = vmatpush1.msra.mxu0 0.0
      %405 = vmatprep.subr.mxu0 0.0
      %406 = vmatpush1.msra.mxu0 0.0
      %407 = vmatprep.subr.mxu0 0.0
      %408 = vmatpush1.msra.mxu0 0.0
      %409 = vmatprep.subr.mxu0 0.0
      %410 = vmatpush1.msra.mxu0 0.0
      %411 = vmatprep.subr.mxu0 0.0
      %412 = vmatpush1.msra.mxu0 0.0
      %413 = vmatprep.subr.mxu0 0.0
      %414 = vmatpush1.msra.mxu0 0.0
      %415 = vmatprep.mubr.f32.mxu0 0.0
      %416 = vmatmul.mubr.f32.gmra.mrb[0].mxu0 %v271
      %v417 = vpop.f32.mrb[0].mxu0
      %v418 = vadd.f32 0.0, %v417
      %v419 = vpop.f32.mrb[0].mxu0
      %420 = vdwg.mxu0
      %421 = vrot.lane.b32.xlu0 %v252, 111
      %v422 = vpop.permute.xlu0 %421
      %423 = vrot.lane.b32.xlu0 %v259, 111
      %v424 = vpop.permute.xlu0 %423
      %425 = vrot.lane.b32.xlu0 %v253, 111
      %v426 = vpop.permute.xlu0 %425
      %vm427 = vcmask 908288
      %v428 = vsel %vm427, %v422, %v424
      %v429 = vsel %vm427, %v424, %v426
      %v431 = vsel %vm269, %v254, 0
      %v433 = vsel %vm273, %v428, 0
      %v435 = vsel %vm273, %v429, 0
      %v437 = vsel %vm273, %v426, 0
      %439 = vmatprep.subr.mxu0 %v435
      %440 = vmatpush1.msra.mxu0 %v433
      %441 = vmatprep.subr.mxu0 0.0
      %442 = vmatpush1.msra.mxu0 0.0
      %443 = vmatprep.subr.mxu0 0.0
      %444 = vmatpush1.msra.mxu0 0.0
      %445 = vmatprep.subr.mxu0 0.0
      %446 = vmatpush1.msra.mxu0 0.0
      %447 = vmatprep.subr.mxu0 0.0
      %448 = vmatpush1.msra.mxu0 0.0
      %449 = vmatprep.subr.mxu0 0.0
      %450 = vmatpush1.msra.mxu0 0.0
      %451 = vmatprep.subr.mxu0 0.0
      %452 = vmatpush1.msra.mxu0 0.0
      %453 = vmatprep.subr.mxu0 0.0
      %454 = vmatpush1.msra.mxu0 0.0
      %455 = vmatprep.subr.mxu0 0.0
      %456 = vmatpush1.msra.mxu0 0.0
      %457 = vmatprep.subr.mxu0 0.0
      %458 = vmatpush1.msra.mxu0 0.0
      %459 = vmatprep.subr.mxu0 0.0
      %460 = vmatpush1.msra.mxu0 0.0
      %461 = vmatprep.subr.mxu0 0.0
      %462 = vmatpush1.msra.mxu0 0.0
      %463 = vmatprep.subr.mxu0 0.0
      %464 = vmatpush1.msra.mxu0 0.0
      %465 = vmatprep.subr.mxu0 0.0
      %466 = vmatpush1.msra.mxu0 0.0
      %467 = vmatprep.subr.mxu0 0.0
      %468 = vmatpush1.msra.mxu0 0.0
      %469 = vmatprep.subr.mxu0 0.0
      %470 = vmatpush1.msra.mxu0 0.0
      %471 = vmatprep.subr.mxu0 0.0
      %472 = vmatpush1.msra.mxu0 0.0
      %473 = vmatprep.subr.mxu0 0.0
      %474 = vmatpush1.msra.mxu0 0.0
      %475 = vmatprep.subr.mxu0 0.0
      %476 = vmatpush1.msra.mxu0 0.0
      %477 = vmatprep.subr.mxu0 0.0
      %478 = vmatpush1.msra.mxu0 0.0
      %479 = vmatprep.subr.mxu0 0.0
      %480 = vmatpush1.msra.mxu0 0.0
      %481 = vmatprep.subr.mxu0 0.0
      %482 = vmatpush1.msra.mxu0 0.0
      %483 = vmatprep.subr.mxu0 0.0
      %484 = vmatpush1.msra.mxu0 0.0
      %485 = vmatprep.subr.mxu0 0.0
      %486 = vmatpush1.msra.mxu0 0.0
      %487 = vmatprep.subr.mxu0 0.0
      %488 = vmatpush1.msra.mxu0 0.0
      %489 = vmatprep.subr.mxu0 0.0
      %490 = vmatpush1.msra.mxu0 0.0
      %491 = vmatprep.subr.mxu0 0.0
      %492 = vmatpush1.msra.mxu0 0.0
      %493 = vmatprep.subr.mxu0 0.0
      %494 = vmatpush1.msra.mxu0 0.0
      %495 = vmatprep.subr.mxu0 0.0
      %496 = vmatpush1.msra.mxu0 0.0
      %497 = vmatprep.subr.mxu0 0.0
      %498 = vmatpush1.msra.mxu0 0.0
      %499 = vmatprep.subr.mxu0 0.0
      %500 = vmatpush1.msra.mxu0 0.0
      %501 = vmatprep.subr.mxu0 0.0
      %502 = vmatpush1.msra.mxu0 0.0
      %503 = vmatprep.mubr.f32.mxu0 0.0
      %504 = vmatmul.mubr.f32.gmra.mrb[0].mxu0 %v431
      %v505 = vpop.f32.mrb[0].mxu0
      %v506 = vadd.f32 %v347, %v505
      %v507 = vpop.f32.mrb[0].mxu0
      %v508 = vadd.f32 %v349, %v507
      %509 = vdwg.mxu0
      %510 = vmatprep.subr.mxu0 0.0
      %511 = vmatpush1.msra.mxu0 %v437
      %512 = vmatprep.subr.mxu0 0.0
      %513 = vmatpush1.msra.mxu0 0.0
      %514 = vmatprep.subr.mxu0 0.0
      %515 = vmatpush1.msra.mxu0 0.0
      %516 = vmatprep.subr.mxu0 0.0
      %517 = vmatpush1.msra.mxu0 0.0
      %518 = vmatprep.subr.mxu0 0.0
      %519 = vmatpush1.msra.mxu0 0.0
      %520 = vmatprep.subr.mxu0 0.0
      %521 = vmatpush1.msra.mxu0 0.0
      %522 = vmatprep.subr.mxu0 0.0
      %523 = vmatpush1.msra.mxu0 0.0
      %524 = vmatprep.subr.mxu0 0.0
      %525 = vmatpush1.msra.mxu0 0.0
      %526 = vmatprep.subr.mxu0 0.0
      %527 = vmatpush1.msra.mxu0 0.0
      %528 = vmatprep.subr.mxu0 0.0
      %529 = vmatpush1.msra.mxu0 0.0
      %530 = vmatprep.subr.mxu0 0.0
      %531 = vmatpush1.msra.mxu0 0.0
      %532 = vmatprep.subr.mxu0 0.0
      %533 = vmatpush1.msra.mxu0 0.0
      %534 = vmatprep.subr.mxu0 0.0
      %535 = vmatpush1.msra.mxu0 0.0
      %536 = vmatprep.subr.mxu0 0.0
      %537 = vmatpush1.msra.mxu0 0.0
      %538 = vmatprep.subr.mxu0 0.0
      %539 = vmatpush1.msra.mxu0 0.0
      %540 = vmatprep.subr.mxu0 0.0
      %541 = vmatpush1.msra.mxu0 0.0
      %542 = vmatprep.subr.mxu0 0.0
      %543 = vmatpush1.msra.mxu0 0.0
      %544 = vmatprep.subr.mxu0 0.0
      %545 = vmatpush1.msra.mxu0 0.0
      %546 = vmatprep.subr.mxu0 0.0
      %547 = vmatpush1.msra.mxu0 0.0
      %548 = vmatprep.subr.mxu0 0.0
      %549 = vmatpush1.msra.mxu0 0.0
      %550 = vmatprep.subr.mxu0 0.0
      %551 = vmatpush1.msra.mxu0 0.0
      %552 = vmatprep.subr.mxu0 0.0
      %553 = vmatpush1.msra.mxu0 0.0
      %554 = vmatprep.subr.mxu0 0.0
      %555 = vmatpush1.msra.mxu0 0.0
      %556 = vmatprep.subr.mxu0 0.0
      %557 = vmatpush1.msra.mxu0 0.0
      %558 = vmatprep.subr.mxu0 0.0
      %559 = vmatpush1.msra.mxu0 0.0
      %560 = vmatprep.subr.mxu0 0.0
      %561 = vmatpush1.msra.mxu0 0.0
      %562 = vmatprep.subr.mxu0 0.0
      %563 = vmatpush1.msra.mxu0 0.0
      %564 = vmatprep.subr.mxu0 0.0
      %565 = vmatpush1.msra.mxu0 0.0
      %566 = vmatprep.subr.mxu0 0.0
      %567 = vmatpush1.msra.mxu0 0.0
      %568 = vmatprep.subr.mxu0 0.0
      %569 = vmatpush1.msra.mxu0 0.0
      %570 = vmatprep.subr.mxu0 0.0
      %571 = vmatpush1.msra.mxu0 0.0
      %572 = vmatprep.subr.mxu0 0.0
      %573 = vmatpush1.msra.mxu0 0.0
      %574 = vmatprep.mubr.f32.mxu0 0.0
      %575 = vmatmul.mubr.f32.gmra.mrb[0].mxu0 %v431
      %v576 = vpop.f32.mrb[0].mxu0
      %v577 = vadd.f32 %v418, %v576
      %v578 = vpop.f32.mrb[0].mxu0
      %579 = vdwg.mxu0
      %s580 = scalar_lea.vmem %s1, 16
      %v581 = vld [vmem:[%s580] sm:$0xff]
      %582 = vrot.lane.b32.xlu0 %v252, 109
      %v583 = vpop.permute.xlu0 %582
      %584 = vrot.lane.b32.xlu0 %v259, 109
      %v585 = vpop.permute.xlu0 %584
      %586 = vrot.lane.b32.xlu0 %v253, 109
      %v587 = vpop.permute.xlu0 %586
      %vm588 = vcmask 891904
      %v589 = vsel %vm588, %v583, %v585
      %v590 = vsel %vm588, %v585, %v587
      %v592 = vsel %vm269, %v581, 0
      %v594 = vsel %vm273, %v589, 0
      %v596 = vsel %vm273, %v590, 0
      %v598 = vsel %vm273, %v587, 0
      %600 = vmatprep.subr.mxu0 %v596
      %601 = vmatpush1.msra.mxu0 %v594
      %602 = vmatprep.subr.mxu0 0.0
      %603 = vmatpush1.msra.mxu0 0.0
      %604 = vmatprep.subr.mxu0 0.0
      %605 = vmatpush1.msra.mxu0 0.0
      %606 = vmatprep.subr.mxu0 0.0
      %607 = vmatpush1.msra.mxu0 0.0
      %608 = vmatprep.subr.mxu0 0.0
      %609 = vmatpush1.msra.mxu0 0.0
      %610 = vmatprep.subr.mxu0 0.0
      %611 = vmatpush1.msra.mxu0 0.0
      %612 = vmatprep.subr.mxu0 0.0
      %613 = vmatpush1.msra.mxu0 0.0
      %614 = vmatprep.subr.mxu0 0.0
      %615 = vmatpush1.msra.mxu0 0.0
      %616 = vmatprep.subr.mxu0 0.0
      %617 = vmatpush1.msra.mxu0 0.0
      %618 = vmatprep.subr.mxu0 0.0
      %619 = vmatpush1.msra.mxu0 0.0
      %620 = vmatprep.subr.mxu0 0.0
      %621 = vmatpush1.msra.mxu0 0.0
      %622 = vmatprep.subr.mxu0 0.0
      %623 = vmatpush1.msra.mxu0 0.0
      %624 = vmatprep.subr.mxu0 0.0
      %625 = vmatpush1.msra.mxu0 0.0
      %626 = vmatprep.subr.mxu0 0.0
      %627 = vmatpush1.msra.mxu0 0.0
      %628 = vmatprep.subr.mxu0 0.0
      %629 = vmatpush1.msra.mxu0 0.0
      %630 = vmatprep.subr.mxu0 0.0
      %631 = vmatpush1.msra.mxu0 0.0
      %632 = vmatprep.subr.mxu0 0.0
      %633 = vmatpush1.msra.mxu0 0.0
      %634 = vmatprep.subr.mxu0 0.0
      %635 = vmatpush1.msra.mxu0 0.0
      %636 = vmatprep.subr.mxu0 0.0
      %637 = vmatpush1.msra.mxu0 0.0
      %638 = vmatprep.subr.mxu0 0.0
      %639 = vmatpush1.msra.mxu0 0.0
      %640 = vmatprep.subr.mxu0 0.0
      %641 = vmatpush1.msra.mxu0 0.0
      %642 = vmatprep.subr.mxu0 0.0
      %643 = vmatpush1.msra.mxu0 0.0
      %644 = vmatprep.subr.mxu0 0.0
      %645 = vmatpush1.msra.mxu0 0.0
      %646 = vmatprep.subr.mxu0 0.0
      %647 = vmatpush1.msra.mxu0 0.0
      %648 = vmatprep.subr.mxu0 0.0
      %649 = vmatpush1.msra.mxu0 0.0
      %650 = vmatprep.subr.mxu0 0.0
      %651 = vmatpush1.msra.mxu0 0.0
      %652 = vmatprep.subr.mxu0 0.0
      %653 = vmatpush1.msra.mxu0 0.0
      %654 = vmatprep.subr.mxu0 0.0
      %655 = vmatpush1.msra.mxu0 0.0
      %656 = vmatprep.subr.mxu0 0.0
      %657 = vmatpush1.msra.mxu0 0.0
      %658 = vmatprep.subr.mxu0 0.0
      %659 = vmatpush1.msra.mxu0 0.0
      %660 = vmatprep.subr.mxu0 0.0
      %661 = vmatpush1.msra.mxu0 0.0
      %662 = vmatprep.subr.mxu0 0.0
      %663 = vmatpush1.msra.mxu0 0.0
      %664 = vmatprep.mubr.f32.mxu0 0.0
      %665 = vmatmul.mubr.f32.gmra.mrb[0].mxu0 %v592
      %v666 = vpop.f32.mrb[0].mxu0
      %v667 = vadd.f32 0.0, %v666
      %v668 = vpop.f32.mrb[0].mxu0
      %v669 = vadd.f32 0.0, %v668
      %670 = vdwg.mxu0
      %671 = vmatprep.subr.mxu0 0.0
      %672 = vmatpush1.msra.mxu0 %v598
      %673 = vmatprep.subr.mxu0 0.0
      %674 = vmatpush1.msra.mxu0 0.0
      %675 = vmatprep.subr.mxu0 0.0
      %676 = vmatpush1.msra.mxu0 0.0
      %677 = vmatprep.subr.mxu0 0.0
      %678 = vmatpush1.msra.mxu0 0.0
      %679 = vmatprep.subr.mxu0 0.0
      %680 = vmatpush1.msra.mxu0 0.0
      %681 = vmatprep.subr.mxu0 0.0
      %682 = vmatpush1.msra.mxu0 0.0
      %683 = vmatprep.subr.mxu0 0.0
      %684 = vmatpush1.msra.mxu0 0.0
      %685 = vmatprep.subr.mxu0 0.0
      %686 = vmatpush1.msra.mxu0 0.0
      %687 = vmatprep.subr.mxu0 0.0
      %688 = vmatpush1.msra.mxu0 0.0
      %689 = vmatprep.subr.mxu0 0.0
      %690 = vmatpush1.msra.mxu0 0.0
      %691 = vmatprep.subr.mxu0 0.0
      %692 = vmatpush1.msra.mxu0 0.0
      %693 = vmatprep.subr.mxu0 0.0
      %694 = vmatpush1.msra.mxu0 0.0
      %695 = vmatprep.subr.mxu0 0.0
      %696 = vmatpush1.msra.mxu0 0.0
      %697 = vmatprep.subr.mxu0 0.0
      %698 = vmatpush1.msra.mxu0 0.0
      %699 = vmatprep.subr.mxu0 0.0
      %700 = vmatpush1.msra.mxu0 0.0
      %701 = vmatprep.subr.mxu0 0.0
      %702 = vmatpush1.msra.mxu0 0.0
      %703 = vmatprep.subr.mxu0 0.0
      %704 = vmatpush1.msra.mxu0 0.0
      %705 = vmatprep.subr.mxu0 0.0
      %706 = vmatpush1.msra.mxu0 0.0
      %707 = vmatprep.subr.mxu0 0.0
      %708 = vmatpush1.msra.mxu0 0.0
      %709 = vmatprep.subr.mxu0 0.0
      %710 = vmatpush1.msra.mxu0 0.0
      %711 = vmatprep.subr.mxu0 0.0
      %712 = vmatpush1.msra.mxu0 0.0
      %713 = vmatprep.subr.mxu0 0.0
      %714 = vmatpush1.msra.mxu0 0.0
      %715 = vmatprep.subr.mxu0 0.0
      %716 = vmatpush1.msra.mxu0 0.0
      %717 = vmatprep.subr.mxu0 0.0
      %718 = vmatpush1.msra.mxu0 0.0
      %719 = vmatprep.subr.mxu0 0.0
      %720 = vmatpush1.msra.mxu0 0.0
      %721 = vmatprep.subr.mxu0 0.0
      %722 = vmatpush1.msra.mxu0 0.0
      %723 = vmatprep.subr.mxu0 0.0
      %724 = vmatpush1.msra.mxu0 0.0
      %725 = vmatprep.subr.mxu0 0.0
      %726 = vmatpush1.msra.mxu0 0.0
      %727 = vmatprep.subr.mxu0 0.0
      %728 = vmatpush1.msra.mxu0 0.0
      %729 = vmatprep.subr.mxu0 0.0
      %730 = vmatpush1.msra.mxu0 0.0
      %731 = vmatprep.subr.mxu0 0.0
      %732 = vmatpush1.msra.mxu0 0.0
      %733 = vmatprep.subr.mxu0 0.0
      %734 = vmatpush1.msra.mxu0 0.0
      %735 = vmatprep.mubr.f32.mxu0 0.0
      %736 = vmatmul.mubr.f32.gmra.mrb[0].mxu0 %v592
      %v737 = vpop.f32.mrb[0].mxu0
      %v738 = vadd.f32 0.0, %v737
      %v739 = vpop.f32.mrb[0].mxu0
      %740 = vdwg.mxu0
      %v741 = vadd.f32 %v506, %v667
      %v742 = vadd.f32 %v508, %v669
      %v743 = vadd.f32 %v577, %v738
      %s744 = scalar_lea.vmem %s1, 24
      %v745 = vld [vmem:[%s744] sm:$0xff]
      %746 = vrot.lane.b32.xlu0 %v252, 93
      %v747 = vpop.permute.xlu0 %746
      %748 = vrot.lane.b32.xlu0 %v259, 93
      %v749 = vpop.permute.xlu0 %748
      %750 = vrot.lane.b32.xlu0 %v253, 93
      %v751 = vpop.permute.xlu0 %750
      %vm752 = vcmask 760832
      %v753 = vsel %vm752, %v747, %v749
      %v754 = vsel %vm752, %v749, %v751
      %v756 = vsel %vm269, %v745, 0
      %v758 = vsel %vm273, %v753, 0
      %v760 = vsel %vm273, %v754, 0
      %v762 = vsel %vm273, %v751, 0
      %764 = vmatprep.subr.mxu0 %v760
      %765 = vmatpush1.msra.mxu0 %v758
      %766 = vmatprep.subr.mxu0 0.0
      %767 = vmatpush1.msra.mxu0 0.0
      %768 = vmatprep.subr.mxu0 0.0
      %769 = vmatpush1.msra.mxu0 0.0
      %770 = vmatprep.subr.mxu0 0.0
      %771 = vmatpush1.msra.mxu0 0.0
      %772 = vmatprep.subr.mxu0 0.0
      %773 = vmatpush1.msra.mxu0 0.0
      %774 = vmatprep.subr.mxu0 0.0
      %775 = vmatpush1.msra.mxu0 0.0
      %776 = vmatprep.subr.mxu0 0.0
      %777 = vmatpush1.msra.mxu0 0.0
      %778 = vmatprep.subr.mxu0 0.0
      %779 = vmatpush1.msra.mxu0 0.0
      %780 = vmatprep.subr.mxu0 0.0
      %781 = vmatpush1.msra.mxu0 0.0
      %782 = vmatprep.subr.mxu0 0.0
      %783 = vmatpush1.msra.mxu0 0.0
      %784 = vmatprep.subr.mxu0 0.0
      %785 = vmatpush1.msra.mxu0 0.0
      %786 = vmatprep.subr.mxu0 0.0
      %787 = vmatpush1.msra.mxu0 0.0
      %788 = vmatprep.subr.mxu0 0.0
      %789 = vmatpush1.msra.mxu0 0.0
      %790 = vmatprep.subr.mxu0 0.0
      %791 = vmatpush1.msra.mxu0 0.0
      %792 = vmatprep.subr.mxu0 0.0
      %793 = vmatpush1.msra.mxu0 0.0
      %794 = vmatprep.subr.mxu0 0.0
      %795 = vmatpush1.msra.mxu0 0.0
      %796 = vmatprep.subr.mxu0 0.0
      %797 = vmatpush1.msra.mxu0 0.0
      %798 = vmatprep.subr.mxu0 0.0
      %799 = vmatpush1.msra.mxu0 0.0
      %800 = vmatprep.subr.mxu0 0.0
      %801 = vmatpush1.msra.mxu0 0.0
      %802 = vmatprep.subr.mxu0 0.0
      %803 = vmatpush1.msra.mxu0 0.0
      %804 = vmatprep.subr.mxu0 0.0
      %805 = vmatpush1.msra.mxu0 0.0
      %806 = vmatprep.subr.mxu0 0.0
      %807 = vmatpush1.msra.mxu0 0.0
      %808 = vmatprep.subr.mxu0 0.0
      %809 = vmatpush1.msra.mxu0 0.0
      %810 = vmatprep.subr.mxu0 0.0
      %811 = vmatpush1.msra.mxu0 0.0
      %812 = vmatprep.subr.mxu0 0.0
      %813 = vmatpush1.msra.mxu0 0.0
      %814 = vmatprep.subr.mxu0 0.0
      %815 = vmatpush1.msra.mxu0 0.0
      %816 = vmatprep.subr.mxu0 0.0
      %817 = vmatpush1.msra.mxu0 0.0
      %818 = vmatprep.subr.mxu0 0.0
      %819 = vmatpush1.msra.mxu0 0.0
      %820 = vmatprep.subr.mxu0 0.0
      %821 = vmatpush1.msra.mxu0 0.0
      %822 = vmatprep.subr.mxu0 0.0
      %823 = vmatpush1.msra.mxu0 0.0
      %824 = vmatprep.subr.mxu0 0.0
      %825 = vmatpush1.msra.mxu0 0.0
      %826 = vmatprep.subr.mxu0 0.0
      %827 = vmatpush1.msra.mxu0 0.0
      %828 = vmatprep.mubr.f32.mxu0 0.0
      %829 = vmatmul.mubr.f32.gmra.mrb[0].mxu0 %v756
      %v830 = vpop.f32.mrb[0].mxu0
      %v831 = vadd.f32 0.0, %v830
      %v832 = vpop.f32.mrb[0].mxu0
      %v833 = vadd.f32 0.0, %v832
      %834 = vdwg.mxu0
      %835 = vmatprep.subr.mxu0 0.0
      %836 = vmatpush1.msra.mxu0 %v762
      %837 = vmatprep.subr.mxu0 0.0
      %838 = vmatpush1.msra.mxu0 0.0
      %839 = vmatprep.subr.mxu0 0.0
      %840 = vmatpush1.msra.mxu0 0.0
      %841 = vmatprep.subr.mxu0 0.0
      %842 = vmatpush1.msra.mxu0 0.0
      %843 = vmatprep.subr.mxu0 0.0
      %844 = vmatpush1.msra.mxu0 0.0
      %845 = vmatprep.subr.mxu0 0.0
      %846 = vmatpush1.msra.mxu0 0.0
      %847 = vmatprep.subr.mxu0 0.0
      %848 = vmatpush1.msra.mxu0 0.0
      %849 = vmatprep.subr.mxu0 0.0
      %850 = vmatpush1.msra.mxu0 0.0
      %851 = vmatprep.subr.mxu0 0.0
      %852 = vmatpush1.msra.mxu0 0.0
      %853 = vmatprep.subr.mxu0 0.0
      %854 = vmatpush1.msra.mxu0 0.0
      %855 = vmatprep.subr.mxu0 0.0
      %856 = vmatpush1.msra.mxu0 0.0
      %857 = vmatprep.subr.mxu0 0.0
      %858 = vmatpush1.msra.mxu0 0.0
      %859 = vmatprep.subr.mxu0 0.0
      %860 = vmatpush1.msra.mxu0 0.0
      %861 = vmatprep.subr.mxu0 0.0
      %862 = vmatpush1.msra.mxu0 0.0
      %863 = vmatprep.subr.mxu0 0.0
      %864 = vmatpush1.msra.mxu0 0.0
      %865 = vmatprep.subr.mxu0 0.0
      %866 = vmatpush1.msra.mxu0 0.0
      %867 = vmatprep.subr.mxu0 0.0
      %868 = vmatpush1.msra.mxu0 0.0
      %869 = vmatprep.subr.mxu0 0.0
      %870 = vmatpush1.msra.mxu0 0.0
      %871 = vmatprep.subr.mxu0 0.0
      %872 = vmatpush1.msra.mxu0 0.0
      %873 = vmatprep.subr.mxu0 0.0
      %874 = vmatpush1.msra.mxu0 0.0
      %875 = vmatprep.subr.mxu0 0.0
      %876 = vmatpush1.msra.mxu0 0.0
      %877 = vmatprep.subr.mxu0 0.0
      %878 = vmatpush1.msra.mxu0 0.0
      %879 = vmatprep.subr.mxu0 0.0
      %880 = vmatpush1.msra.mxu0 0.0
      %881 = vmatprep.subr.mxu0 0.0
      %882 = vmatpush1.msra.mxu0 0.0
      %883 = vmatprep.subr.mxu0 0.0
      %884 = vmatpush1.msra.mxu0 0.0
      %885 = vmatprep.subr.mxu0 0.0
      %886 = vmatpush1.msra.mxu0 0.0
      %887 = vmatprep.subr.mxu0 0.0
      %888 = vmatpush1.msra.mxu0 0.0
      %889 = vmatprep.subr.mxu0 0.0
      %890 = vmatpush1.msra.mxu0 0.0
      %891 = vmatprep.subr.mxu0 0.0
      %892 = vmatpush1.msra.mxu0 0.0
      %893 = vmatprep.subr.mxu0 0.0
      %894 = vmatpush1.msra.mxu0 0.0
      %895 = vmatprep.subr.mxu0 0.0
      %896 = vmatpush1.msra.mxu0 0.0
      %897 = vmatprep.subr.mxu0 0.0
      %898 = vmatpush1.msra.mxu0 0.0
      %899 = vmatprep.mubr.f32.mxu0 0.0
      %900 = vmatmul.mubr.f32.gmra.mrb[0].mxu0 %v756
      %v901 = vpop.f32.mrb[0].mxu0
      %v902 = vadd.f32 0.0, %v901
      %v903 = vpop.f32.mrb[0].mxu0
      %904 = vdwg.mxu0
      %v905 = vadd.f32 %v741, %v831
      %v906 = vadd.f32 %v742, %v833
      %v907 = vadd.f32 %v743, %v902
      %s908 = scalar_lea.vmem %s1, 32
      %v909 = vld [vmem:[%s908] sm:$0xff]
      %910 = vrot.lane.b32.xlu0 %v252, 92
      %v911 = vpop.permute.xlu0 %910
      %912 = vrot.lane.b32.xlu0 %v259, 92
      %v913 = vpop.permute.xlu0 %912
      %914 = vrot.lane.b32.xlu0 %v253, 92
      %v915 = vpop.permute.xlu0 %914
      %vm916 = vcmask 752640
      %v917 = vsel %vm916, %v911, %v913
      %v918 = vsel %vm916, %v913, %v915
      %v920 = vsel %vm269, %v909, 0
      %v922 = vsel %vm273, %v917, 0
      %v924 = vsel %vm273, %v918, 0
      %v926 = vsel %vm273, %v915, 0
      %928 = vmatprep.subr.mxu0 %v924
      %929 = vmatpush1.msra.mxu0 %v922
      %930 = vmatprep.subr.mxu0 0.0
      %931 = vmatpush1.msra.mxu0 0.0
      %932 = vmatprep.subr.mxu0 0.0
      %933 = vmatpush1.msra.mxu0 0.0
      %934 = vmatprep.subr.mxu0 0.0
      %935 = vmatpush1.msra.mxu0 0.0
      %936 = vmatprep.subr.mxu0 0.0
      %937 = vmatpush1.msra.mxu0 0.0
      %938 = vmatprep.subr.mxu0 0.0
      %939 = vmatpush1.msra.mxu0 0.0
      %940 = vmatprep.subr.mxu0 0.0
      %941 = vmatpush1.msra.mxu0 0.0
      %942 = vmatprep.subr.mxu0 0.0
      %943 = vmatpush1.msra.mxu0 0.0
      %944 = vmatprep.subr.mxu0 0.0
      %945 = vmatpush1.msra.mxu0 0.0
      %946 = vmatprep.subr.mxu0 0.0
      %947 = vmatpush1.msra.mxu0 0.0
      %948 = vmatprep.subr.mxu0 0.0
      %949 = vmatpush1.msra.mxu0 0.0
      %950 = vmatprep.subr.mxu0 0.0
      %951 = vmatpush1.msra.mxu0 0.0
      %952 = vmatprep.subr.mxu0 0.0
      %953 = vmatpush1.msra.mxu0 0.0
      %954 = vmatprep.subr.mxu0 0.0
      %955 = vmatpush1.msra.mxu0 0.0
      %956 = vmatprep.subr.mxu0 0.0
      %957 = vmatpush1.msra.mxu0 0.0
      %958 = vmatprep.subr.mxu0 0.0
      %959 = vmatpush1.msra.mxu0 0.0
      %960 = vmatprep.subr.mxu0 0.0
      %961 = vmatpush1.msra.mxu0 0.0
      %962 = vmatprep.subr.mxu0 0.0
      %963 = vmatpush1.msra.mxu0 0.0
      %964 = vmatprep.subr.mxu0 0.0
      %965 = vmatpush1.msra.mxu0 0.0
      %966 = vmatprep.subr.mxu0 0.0
      %967 = vmatpush1.msra.mxu0 0.0
      %968 = vmatprep.subr.mxu0 0.0
      %969 = vmatpush1.msra.mxu0 0.0
      %970 = vmatprep.subr.mxu0 0.0
      %971 = vmatpush1.msra.mxu0 0.0
      %972 = vmatprep.subr.mxu0 0.0
      %973 = vmatpush1.msra.mxu0 0.0
      %974 = vmatprep.subr.mxu0 0.0
      %975 = vmatpush1.msra.mxu0 0.0
      %976 = vmatprep.subr.mxu0 0.0
      %977 = vmatpush1.msra.mxu0 0.0
      %978 = vmatprep.subr.mxu0 0.0
      %979 = vmatpush1.msra.mxu0 0.0
      %980 = vmatprep.subr.mxu0 0.0
      %981 = vmatpush1.msra.mxu0 0.0
      %982 = vmatprep.subr.mxu0 0.0
      %983 = vmatpush1.msra.mxu0 0.0
      %984 = vmatprep.subr.mxu0 0.0
      %985 = vmatpush1.msra.mxu0 0.0
      %986 = vmatprep.subr.mxu0 0.0
      %987 = vmatpush1.msra.mxu0 0.0
      %988 = vmatprep.subr.mxu0 0.0
      %989 = vmatpush1.msra.mxu0 0.0
      %990 = vmatprep.subr.mxu0 0.0
      %991 = vmatpush1.msra.mxu0 0.0
      %992 = vmatprep.mubr.f32.mxu0 0.0
      %993 = vmatmul.mubr.f32.gmra.mrb[0].mxu0 %v920
      %v994 = vpop.f32.mrb[0].mxu0
      %v995 = vadd.f32 0.0, %v994
      %v996 = vpop.f32.mrb[0].mxu0
      %v997 = vadd.f32 0.0, %v996
      %998 = vdwg.mxu0
      %999 = vmatprep.subr.mxu0 0.0
      %1000 = vmatpush1.msra.mxu0 %v926
      %1001 = vmatprep.subr.mxu0 0.0
      %1002 = vmatpush1.msra.mxu0 0.0
      %1003 = vmatprep.subr.mxu0 0.0
      %1004 = vmatpush1.msra.mxu0 0.0
      %1005 = vmatprep.subr.mxu0 0.0
      %1006 = vmatpush1.msra.mxu0 0.0
      %1007 = vmatprep.subr.mxu0 0.0
      %1008 = vmatpush1.msra.mxu0 0.0
      %1009 = vmatprep.subr.mxu0 0.0
      %1010 = vmatpush1.msra.mxu0 0.0
      %1011 = vmatprep.subr.mxu0 0.0
      %1012 = vmatpush1.msra.mxu0 0.0
      %1013 = vmatprep.subr.mxu0 0.0
      %1014 = vmatpush1.msra.mxu0 0.0
      %1015 = vmatprep.subr.mxu0 0.0
      %1016 = vmatpush1.msra.mxu0 0.0
      %1017 = vmatprep.subr.mxu0 0.0
      %1018 = vmatpush1.msra.mxu0 0.0
      %1019 = vmatprep.subr.mxu0 0.0
      %1020 = vmatpush1.msra.mxu0 0.0
      %1021 = vmatprep.subr.mxu0 0.0
      %1022 = vmatpush1.msra.mxu0 0.0
      %1023 = vmatprep.subr.mxu0 0.0
      %1024 = vmatpush1.msra.mxu0 0.0
      %1025 = vmatprep.subr.mxu0 0.0
      %1026 = vmatpush1.msra.mxu0 0.0
      %1027 = vmatprep.subr.mxu0 0.0
      %1028 = vmatpush1.msra.mxu0 0.0
      %1029 = vmatprep.subr.mxu0 0.0
      %1030 = vmatpush1.msra.mxu0 0.0
      %1031 = vmatprep.subr.mxu0 0.0
      %1032 = vmatpush1.msra.mxu0 0.0
      %1033 = vmatprep.subr.mxu0 0.0
      %1034 = vmatpush1.msra.mxu0 0.0
      %1035 = vmatprep.subr.mxu0 0.0
      %1036 = vmatpush1.msra.mxu0 0.0
      %1037 = vmatprep.subr.mxu0 0.0
      %1038 = vmatpush1.msra.mxu0 0.0
      %1039 = vmatprep.subr.mxu0 0.0
      %1040 = vmatpush1.msra.mxu0 0.0
      %1041 = vmatprep.subr.mxu0 0.0
      %1042 = vmatpush1.msra.mxu0 0.0
      %1043 = vmatprep.subr.mxu0 0.0
      %1044 = vmatpush1.msra.mxu0 0.0
      %1045 = vmatprep.subr.mxu0 0.0
      %1046 = vmatpush1.msra.mxu0 0.0
      %1047 = vmatprep.subr.mxu0 0.0
      %1048 = vmatpush1.msra.mxu0 0.0
      %1049 = vmatprep.subr.mxu0 0.0
      %1050 = vmatpush1.msra.mxu0 0.0
      %1051 = vmatprep.subr.mxu0 0.0
      %1052 = vmatpush1.msra.mxu0 0.0
      %1053 = vmatprep.subr.mxu0 0.0
      %1054 = vmatpush1.msra.mxu0 0.0
      %1055 = vmatprep.subr.mxu0 0.0
      %1056 = vmatpush1.msra.mxu0 0.0
      %1057 = vmatprep.subr.mxu0 0.0
      %1058 = vmatpush1.msra.mxu0 0.0
      %1059 = vmatprep.subr.mxu0 0.0
      %1060 = vmatpush1.msra.mxu0 0.0
      %1061 = vmatprep.subr.mxu0 0.0
      %1062 = vmatpush1.msra.mxu0 0.0
      %1063 = vmatprep.mubr.f32.mxu0 0.0
      %1064 = vmatmul.mubr.f32.gmra.mrb[0].mxu0 %v920
      %v1065 = vpop.f32.mrb[0].mxu0
      %v1066 = vadd.f32 0.0, %v1065
      %v1067 = vpop.f32.mrb[0].mxu0
      %1068 = vdwg.mxu0
      %v1069 = vadd.f32 %v905, %v995
      %v1070 = vadd.f32 %v906, %v997
      %v1071 = vadd.f32 %v907, %v1066
      %s1072 = scalar_lea.vmem %s1, 40
      %v1073 = vld [vmem:[%s1072] sm:$0xff]
      %1074 = vrot.lane.b32.xlu0 %v252, 91
      %v1075 = vpop.permute.xlu0 %1074
      %1076 = vrot.lane.b32.xlu0 %v259, 91
      %v1077 = vpop.permute.xlu0 %1076
      %1078 = vrot.lane.b32.xlu0 %v253, 91
      %v1079 = vpop.permute.xlu0 %1078
      %vm1080 = vcmask 744448
      %v1081 = vsel %vm1080, %v1075, %v1077
      %v1082 = vsel %vm1080, %v1077, %v1079
      %v1084 = vsel %vm269, %v1073, 0
      %v1086 = vsel %vm273, %v1081, 0
      %v1088 = vsel %vm273, %v1082, 0
      %v1090 = vsel %vm273, %v1079, 0
      %1092 = vmatprep.subr.mxu0 %v1088
      %1093 = vmatpush1.msra.mxu0 %v1086
      %1094 = vmatprep.subr.mxu0 0.0
      %1095 = vmatpush1.msra.mxu0 0.0
      %1096 = vmatprep.subr.mxu0 0.0
      %1097 = vmatpush1.msra.mxu0 0.0
      %1098 = vmatprep.subr.mxu0 0.0
      %1099 = vmatpush1.msra.mxu0 0.0
      %1100 = vmatprep.subr.mxu0 0.0
      %1101 = vmatpush1.msra.mxu0 0.0
      %1102 = vmatprep.subr.mxu0 0.0
      %1103 = vmatpush1.msra.mxu0 0.0
      %1104 = vmatprep.subr.mxu0 0.0
      %1105 = vmatpush1.msra.mxu0 0.0
      %1106 = vmatprep.subr.mxu0 0.0
      %1107 = vmatpush1.msra.mxu0 0.0
      %1108 = vmatprep.subr.mxu0 0.0
      %1109 = vmatpush1.msra.mxu0 0.0
      %1110 = vmatprep.subr.mxu0 0.0
      %1111 = vmatpush1.msra.mxu0 0.0
      %1112 = vmatprep.subr.mxu0 0.0
      %1113 = vmatpush1.msra.mxu0 0.0
      %1114 = vmatprep.subr.mxu0 0.0
      %1115 = vmatpush1.msra.mxu0 0.0
      %1116 = vmatprep.subr.mxu0 0.0
      %1117 = vmatpush1.msra.mxu0 0.0
      %1118 = vmatprep.subr.mxu0 0.0
      %1119 = vmatpush1.msra.mxu0 0.0
      %1120 = vmatprep.subr.mxu0 0.0
      %1121 = vmatpush1.msra.mxu0 0.0
      %1122 = vmatprep.subr.mxu0 0.0
      %1123 = vmatpush1.msra.mxu0 0.0
      %1124 = vmatprep.subr.mxu0 0.0
      %1125 = vmatpush1.msra.mxu0 0.0
      %1126 = vmatprep.subr.mxu0 0.0
      %1127 = vmatpush1.msra.mxu0 0.0
      %1128 = vmatprep.subr.mxu0 0.0
      %1129 = vmatpush1.msra.mxu0 0.0
      %1130 = vmatprep.subr.mxu0 0.0
      %1131 = vmatpush1.msra.mxu0 0.0
      %1132 = vmatprep.subr.mxu0 0.0
      %1133 = vmatpush1.msra.mxu0 0.0
      %1134 = vmatprep.subr.mxu0 0.0
      %1135 = vmatpush1.msra.mxu0 0.0
      %1136 = vmatprep.subr.mxu0 0.0
      %1137 = vmatpush1.msra.mxu0 0.0
      %1138 = vmatprep.subr.mxu0 0.0
      %1139 = vmatpush1.msra.mxu0 0.0
      %1140 = vmatprep.subr.mxu0 0.0
      %1141 = vmatpush1.msra.mxu0 0.0
      %1142 = vmatprep.subr.mxu0 0.0
      %1143 = vmatpush1.msra.mxu0 0.0
      %1144 = vmatprep.subr.mxu0 0.0
      %1145 = vmatpush1.msra.mxu0 0.0
      %1146 = vmatprep.subr.mxu0 0.0
      %1147 = vmatpush1.msra.mxu0 0.0
      %1148 = vmatprep.subr.mxu0 0.0
      %1149 = vmatpush1.msra.mxu0 0.0
      %1150 = vmatprep.subr.mxu0 0.0
      %1151 = vmatpush1.msra.mxu0 0.0
      %1152 = vmatprep.subr.mxu0 0.0
      %1153 = vmatpush1.msra.mxu0 0.0
      %1154 = vmatprep.subr.mxu0 0.0
      %1155 = vmatpush1.msra.mxu0 0.0
      %1156 = vmatprep.mubr.f32.mxu0 0.0
      %1157 = vmatmul.mubr.f32.gmra.mrb[0].mxu0 %v1084
      %v1158 = vpop.f32.mrb[0].mxu0
      %v1159 = vadd.f32 0.0, %v1158
      %v1160 = vpop.f32.mrb[0].mxu0
      %v1161 = vadd.f32 0.0, %v1160
      %1162 = vdwg.mxu0
      %1163 = vmatprep.subr.mxu0 0.0
      %1164 = vmatpush1.msra.mxu0 %v1090
      %1165 = vmatprep.subr.mxu0 0.0
      %1166 = vmatpush1.msra.mxu0 0.0
      %1167 = vmatprep.subr.mxu0 0.0
      %1168 = vmatpush1.msra.mxu0 0.0
      %1169 = vmatprep.subr.mxu0 0.0
      %1170 = vmatpush1.msra.mxu0 0.0
      %1171 = vmatprep.subr.mxu0 0.0
      %1172 = vmatpush1.msra.mxu0 0.0
      %1173 = vmatprep.subr.mxu0 0.0
      %1174 = vmatpush1.msra.mxu0 0.0
      %1175 = vmatprep.subr.mxu0 0.0
      %1176 = vmatpush1.msra.mxu0 0.0
      %1177 = vmatprep.subr.mxu0 0.0
      %1178 = vmatpush1.msra.mxu0 0.0
      %1179 = vmatprep.subr.mxu0 0.0
      %1180 = vmatpush1.msra.mxu0 0.0
      %1181 = vmatprep.subr.mxu0 0.0
      %1182 = vmatpush1.msra.mxu0 0.0
      %1183 = vmatprep.subr.mxu0 0.0
      %1184 = vmatpush1.msra.mxu0 0.0
      %1185 = vmatprep.subr.mxu0 0.0
      %1186 = vmatpush1.msra.mxu0 0.0
      %1187 = vmatprep.subr.mxu0 0.0
      %1188 = vmatpush1.msra.mxu0 0.0
      %1189 = vmatprep.subr.mxu0 0.0
      %1190 = vmatpush1.msra.mxu0 0.0
      %1191 = vmatprep.subr.mxu0 0.0
      %1192 = vmatpush1.msra.mxu0 0.0
      %1193 = vmatprep.subr.mxu0 0.0
      %1194 = vmatpush1.msra.mxu0 0.0
      %1195 = vmatprep.subr.mxu0 0.0
      %1196 = vmatpush1.msra.mxu0 0.0
      %1197 = vmatprep.subr.mxu0 0.0
      %1198 = vmatpush1.msra.mxu0 0.0
      %1199 = vmatprep.subr.mxu0 0.0
      %1200 = vmatpush1.msra.mxu0 0.0
      %1201 = vmatprep.subr.mxu0 0.0
      %1202 = vmatpush1.msra.mxu0 0.0
      %1203 = vmatprep.subr.mxu0 0.0
      %1204 = vmatpush1.msra.mxu0 0.0
      %1205 = vmatprep.subr.mxu0 0.0
      %1206 = vmatpush1.msra.mxu0 0.0
      %1207 = vmatprep.subr.mxu0 0.0
      %1208 = vmatpush1.msra.mxu0 0.0
      %1209 = vmatprep.subr.mxu0 0.0
      %1210 = vmatpush1.msra.mxu0 0.0
      %1211 = vmatprep.subr.mxu0 0.0
      %1212 = vmatpush1.msra.mxu0 0.0
      %1213 = vmatprep.subr.mxu0 0.0
      %1214 = vmatpush1.msra.mxu0 0.0
      %1215 = vmatprep.subr.mxu0 0.0
      %1216 = vmatpush1.msra.mxu0 0.0
      %1217 = vmatprep.subr.mxu0 0.0
      %1218 = vmatpush1.msra.mxu0 0.0
      %1219 = vmatprep.subr.mxu0 0.0
      %1220 = vmatpush1.msra.mxu0 0.0
      %1221 = vmatprep.subr.mxu0 0.0
      %1222 = vmatpush1.msra.mxu0 0.0
      %1223 = vmatprep.subr.mxu0 0.0
      %1224 = vmatpush1.msra.mxu0 0.0
      %1225 = vmatprep.subr.mxu0 0.0
      %1226 = vmatpush1.msra.mxu0 0.0
      %1227 = vmatprep.mubr.f32.mxu0 0.0
      %1228 = vmatmul.mubr.f32.gmra.mrb[0].mxu0 %v1084
      %v1229 = vpop.f32.mrb[0].mxu0
      %v1230 = vadd.f32 0.0, %v1229
      %v1231 = vpop.f32.mrb[0].mxu0
      %1232 = vdwg.mxu0
      %v1233 = vadd.f32 %v1069, %v1159
      %v1234 = vadd.f32 %v1070, %v1161
      %v1235 = vadd.f32 %v1071, %v1230
      %s1236 = scalar_lea.vmem %s1, 48
      %v1237 = vld [vmem:[%s1236] sm:$0xff]
      %1238 = vrot.lane.b32.xlu0 %v252, 75
      %v1239 = vpop.permute.xlu0 %1238
      %1240 = vrot.lane.b32.xlu0 %v259, 75
      %v1241 = vpop.permute.xlu0 %1240
      %1242 = vrot.lane.b32.xlu0 %v253, 75
      %v1243 = vpop.permute.xlu0 %1242
      %vm1244 = vcmask 613376
      %v1245 = vsel %vm1244, %v1239, %v1241
      %v1246 = vsel %vm1244, %v1241, %v1243
      %v1248 = vsel %vm269, %v1237, 0
      %v1250 = vsel %vm273, %v1245, 0
      %v1252 = vsel %vm273, %v1246, 0
      %v1254 = vsel %vm273, %v1243, 0
      %1256 = vmatprep.subr.mxu0 %v1252
      %1257 = vmatpush1.msra.mxu0 %v1250
      %1258 = vmatprep.subr.mxu0 0.0
      %1259 = vmatpush1.msra.mxu0 0.0
      %1260 = vmatprep.subr.mxu0 0.0
      %1261 = vmatpush1.msra.mxu0 0.0
      %1262 = vmatprep.subr.mxu0 0.0
      %1263 = vmatpush1.msra.mxu0 0.0
      %1264 = vmatprep.subr.mxu0 0.0
      %1265 = vmatpush1.msra.mxu0 0.0
      %1266 = vmatprep.subr.mxu0 0.0
      %1267 = vmatpush1.msra.mxu0 0.0
      %1268 = vmatprep.subr.mxu0 0.0
      %1269 = vmatpush1.msra.mxu0 0.0
      %1270 = vmatprep.subr.mxu0 0.0
      %1271 = vmatpush1.msra.mxu0 0.0
      %1272 = vmatprep.subr.mxu0 0.0
      %1273 = vmatpush1.msra.mxu0 0.0
      %1274 = vmatprep.subr.mxu0 0.0
      %1275 = vmatpush1.msra.mxu0 0.0
      %1276 = vmatprep.subr.mxu0 0.0
      %1277 = vmatpush1.msra.mxu0 0.0
      %1278 = vmatprep.subr.mxu0 0.0
      %1279 = vmatpush1.msra.mxu0 0.0
      %1280 = vmatprep.subr.mxu0 0.0
      %1281 = vmatpush1.msra.mxu0 0.0
      %1282 = vmatprep.subr.mxu0 0.0
      %1283 = vmatpush1.msra.mxu0 0.0
      %1284 = vmatprep.subr.mxu0 0.0
      %1285 = vmatpush1.msra.mxu0 0.0
      %1286 = vmatprep.subr.mxu0 0.0
      %1287 = vmatpush1.msra.mxu0 0.0
      %1288 = vmatprep.subr.mxu0 0.0
      %1289 = vmatpush1.msra.mxu0 0.0
      %1290 = vmatprep.subr.mxu0 0.0
      %1291 = vmatpush1.msra.mxu0 0.0
      %1292 = vmatprep.subr.mxu0 0.0
      %1293 = vmatpush1.msra.mxu0 0.0
      %1294 = vmatprep.subr.mxu0 0.0
      %1295 = vmatpush1.msra.mxu0 0.0
      %1296 = vmatprep.subr.mxu0 0.0
      %1297 = vmatpush1.msra.mxu0 0.0
      %1298 = vmatprep.subr.mxu0 0.0
      %1299 = vmatpush1.msra.mxu0 0.0
      %1300 = vmatprep.subr.mxu0 0.0
      %1301 = vmatpush1.msra.mxu0 0.0
      %1302 = vmatprep.subr.mxu0 0.0
      %1303 = vmatpush1.msra.mxu0 0.0
      %1304 = vmatprep.subr.mxu0 0.0
      %1305 = vmatpush1.msra.mxu0 0.0
      %1306 = vmatprep.subr.mxu0 0.0
      %1307 = vmatpush1.msra.mxu0 0.0
      %1308 = vmatprep.subr.mxu0 0.0
      %1309 = vmatpush1.msra.mxu0 0.0
      %1310 = vmatprep.subr.mxu0 0.0
      %1311 = vmatpush1.msra.mxu0 0.0
      %1312 = vmatprep.subr.mxu0 0.0
      %1313 = vmatpush1.msra.mxu0 0.0
      %1314 = vmatprep.subr.mxu0 0.0
      %1315 = vmatpush1.msra.mxu0 0.0
      %1316 = vmatprep.subr.mxu0 0.0
      %1317 = vmatpush1.msra.mxu0 0.0
      %1318 = vmatprep.subr.mxu0 0.0
      %1319 = vmatpush1.msra.mxu0 0.0
      %1320 = vmatprep.mubr.f32.mxu0 0.0
      %1321 = vmatmul.mubr.f32.gmra.mrb[0].mxu0 %v1248
      %v1322 = vpop.f32.mrb[0].mxu0
      %v1323 = vadd.f32 0.0, %v1322
      %v1324 = vpop.f32.mrb[0].mxu0
      %v1325 = vadd.f32 0.0, %v1324
      %1326 = vdwg.mxu0
      %1327 = vmatprep.subr.mxu0 0.0
      %1328 = vmatpush1.msra.mxu0 %v1254
      %1329 = vmatprep.subr.mxu0 0.0
      %1330 = vmatpush1.msra.mxu0 0.0
      %1331 = vmatprep.subr.mxu0 0.0
      %1332 = vmatpush1.msra.mxu0 0.0
      %1333 = vmatprep.subr.mxu0 0.0
      %1334 = vmatpush1.msra.mxu0 0.0
      %1335 = vmatprep.subr.mxu0 0.0
      %1336 = vmatpush1.msra.mxu0 0.0
      %1337 = vmatprep.subr.mxu0 0.0
      %1338 = vmatpush1.msra.mxu0 0.0
      %1339 = vmatprep.subr.mxu0 0.0
      %1340 = vmatpush1.msra.mxu0 0.0
      %1341 = vmatprep.subr.mxu0 0.0
      %1342 = vmatpush1.msra.mxu0 0.0
      %1343 = vmatprep.subr.mxu0 0.0
      %1344 = vmatpush1.msra.mxu0 0.0
      %1345 = vmatprep.subr.mxu0 0.0
      %1346 = vmatpush1.msra.mxu0 0.0
      %1347 = vmatprep.subr.mxu0 0.0
      %1348 = vmatpush1.msra.mxu0 0.0
      %1349 = vmatprep.subr.mxu0 0.0
      %1350 = vmatpush1.msra.mxu0 0.0
      %1351 = vmatprep.subr.mxu0 0.0
      %1352 = vmatpush1.msra.mxu0 0.0
      %1353 = vmatprep.subr.mxu0 0.0
      %1354 = vmatpush1.msra.mxu0 0.0
      %1355 = vmatprep.subr.mxu0 0.0
      %1356 = vmatpush1.msra.mxu0 0.0
      %1357 = vmatprep.subr.mxu0 0.0
      %1358 = vmatpush1.msra.mxu0 0.0
      %1359 = vmatprep.subr.mxu0 0.0
      %1360 = vmatpush1.msra.mxu0 0.0
      %1361 = vmatprep.subr.mxu0 0.0
      %1362 = vmatpush1.msra.mxu0 0.0
      %1363 = vmatprep.subr.mxu0 0.0
      %1364 = vmatpush1.msra.mxu0 0.0
      %1365 = vmatprep.subr.mxu0 0.0
      %1366 = vmatpush1.msra.mxu0 0.0
      %1367 = vmatprep.subr.mxu0 0.0
      %1368 = vmatpush1.msra.mxu0 0.0
      %1369 = vmatprep.subr.mxu0 0.0
      %1370 = vmatpush1.msra.mxu0 0.0
      %1371 = vmatprep.subr.mxu0 0.0
      %1372 = vmatpush1.msra.mxu0 0.0
      %1373 = vmatprep.subr.mxu0 0.0
      %1374 = vmatpush1.msra.mxu0 0.0
      %1375 = vmatprep.subr.mxu0 0.0
      %1376 = vmatpush1.msra.mxu0 0.0
      %1377 = vmatprep.subr.mxu0 0.0
      %1378 = vmatpush1.msra.mxu0 0.0
      %1379 = vmatprep.subr.mxu0 0.0
      %1380 = vmatpush1.msra.mxu0 0.0
      %1381 = vmatprep.subr.mxu0 0.0
      %1382 = vmatpush1.msra.mxu0 0.0
      %1383 = vmatprep.subr.mxu0 0.0
      %1384 = vmatpush1.msra.mxu0 0.0
      %1385 = vmatprep.subr.mxu0 0.0
      %1386 = vmatpush1.msra.mxu0 0.0
      %1387 = vmatprep.subr.mxu0 0.0
      %1388 = vmatpush1.msra.mxu0 0.0
      %1389 = vmatprep.subr.mxu0 0.0
      %1390 = vmatpush1.msra.mxu0 0.0
      %1391 = vmatprep.mubr.f32.mxu0 0.0
      %1392 = vmatmul.mubr.f32.gmra.mrb[0].mxu0 %v1248
      %v1393 = vpop.f32.mrb[0].mxu0
      %v1394 = vadd.f32 0.0, %v1393
      %v1395 = vpop.f32.mrb[0].mxu0
      %1396 = vdwg.mxu0
      %v1397 = vadd.f32 %v1233, %v1323
      %v1398 = vadd.f32 %v1234, %v1325
      %v1399 = vadd.f32 %v1235, %v1394
      %s1400 = scalar_lea.vmem %s1, 56
      %v1401 = vld [vmem:[%s1400] sm:$0xff]
      %1402 = vrot.lane.b32.xlu0 %v252, 74
      %v1403 = vpop.permute.xlu0 %1402
      %1404 = vrot.lane.b32.xlu0 %v259, 74
      %v1405 = vpop.permute.xlu0 %1404
      %1406 = vrot.lane.b32.xlu0 %v253, 74
      %v1407 = vpop.permute.xlu0 %1406
      %vm1408 = vcmask 605184
      %v1409 = vsel %vm1408, %v1403, %v1405
      %v1410 = vsel %vm1408, %v1405, %v1407
      %v1412 = vsel %vm269, %v1401, 0
      %v1414 = vsel %vm273, %v1409, 0
      %v1416 = vsel %vm273, %v1410, 0
      %v1418 = vsel %vm273, %v1407, 0
      %1420 = vmatprep.subr.mxu0 %v1416
      %1421 = vmatpush1.msra.mxu0 %v1414
      %1422 = vmatprep.subr.mxu0 0.0
      %1423 = vmatpush1.msra.mxu0 0.0
      %1424 = vmatprep.subr.mxu0 0.0
      %1425 = vmatpush1.msra.mxu0 0.0
      %1426 = vmatprep.subr.mxu0 0.0
      %1427 = vmatpush1.msra.mxu0 0.0
      %1428 = vmatprep.subr.mxu0 0.0
      %1429 = vmatpush1.msra.mxu0 0.0
      %1430 = vmatprep.subr.mxu0 0.0
      %1431 = vmatpush1.msra.mxu0 0.0
      %1432 = vmatprep.subr.mxu0 0.0
      %1433 = vmatpush1.msra.mxu0 0.0
      %1434 = vmatprep.subr.mxu0 0.0
      %1435 = vmatpush1.msra.mxu0 0.0
      %1436 = vmatprep.subr.mxu0 0.0
      %1437 = vmatpush1.msra.mxu0 0.0
      %1438 = vmatprep.subr.mxu0 0.0
      %1439 = vmatpush1.msra.mxu0 0.0
      %1440 = vmatprep.subr.mxu0 0.0
      %1441 = vmatpush1.msra.mxu0 0.0
      %1442 = vmatprep.subr.mxu0 0.0
      %1443 = vmatpush1.msra.mxu0 0.0
      %1444 = vmatprep.subr.mxu0 0.0
      %1445 = vmatpush1.msra.mxu0 0.0
      %1446 = vmatprep.subr.mxu0 0.0
      %1447 = vmatpush1.msra.mxu0 0.0
      %1448 = vmatprep.subr.mxu0 0.0
      %1449 = vmatpush1.msra.mxu0 0.0
      %1450 = vmatprep.subr.mxu0 0.0
      %1451 = vmatpush1.msra.mxu0 0.0
      %1452 = vmatprep.subr.mxu0 0.0
      %1453 = vmatpush1.msra.mxu0 0.0
      %1454 = vmatprep.subr.mxu0 0.0
      %1455 = vmatpush1.msra.mxu0 0.0
      %1456 = vmatprep.subr.mxu0 0.0
      %1457 = vmatpush1.msra.mxu0 0.0
      %1458 = vmatprep.subr.mxu0 0.0
      %1459 = vmatpush1.msra.mxu0 0.0
      %1460 = vmatprep.subr.mxu0 0.0
      %1461 = vmatpush1.msra.mxu0 0.0
      %1462 = vmatprep.subr.mxu0 0.0
      %1463 = vmatpush1.msra.mxu0 0.0
      %1464 = vmatprep.subr.mxu0 0.0
      %1465 = vmatpush1.msra.mxu0 0.0
      %1466 = vmatprep.subr.mxu0 0.0
      %1467 = vmatpush1.msra.mxu0 0.0
      %1468 = vmatprep.subr.mxu0 0.0
      %1469 = vmatpush1.msra.mxu0 0.0
      %1470 = vmatprep.subr.mxu0 0.0
      %1471 = vmatpush1.msra.mxu0 0.0
      %1472 = vmatprep.subr.mxu0 0.0
      %1473 = vmatpush1.msra.mxu0 0.0
      %1474 = vmatprep.subr.mxu0 0.0
      %1475 = vmatpush1.msra.mxu0 0.0
      %1476 = vmatprep.subr.mxu0 0.0
      %1477 = vmatpush1.msra.mxu0 0.0
      %1478 = vmatprep.subr.mxu0 0.0
      %1479 = vmatpush1.msra.mxu0 0.0
      %1480 = vmatprep.subr.mxu0 0.0
      %1481 = vmatpush1.msra.mxu0 0.0
      %1482 = vmatprep.subr.mxu0 0.0
      %1483 = vmatpush1.msra.mxu0 0.0
      %1484 = vmatprep.mubr.f32.mxu0 0.0
      %1485 = vmatmul.mubr.f32.gmra.mrb[0].mxu0 %v1412
      %v1486 = vpop.f32.mrb[0].mxu0
      %v1487 = vadd.f32 0.0, %v1486
      %v1488 = vpop.f32.mrb[0].mxu0
      %v1489 = vadd.f32 0.0, %v1488
      %1490 = vdwg.mxu0
      %1491 = vmatprep.subr.mxu0 0.0
      %1492 = vmatpush1.msra.mxu0 %v1418
      %1493 = vmatprep.subr.mxu0 0.0
      %1494 = vmatpush1.msra.mxu0 0.0
      %1495 = vmatprep.subr.mxu0 0.0
      %1496 = vmatpush1.msra.mxu0 0.0
      %1497 = vmatprep.subr.mxu0 0.0
      %1498 = vmatpush1.msra.mxu0 0.0
      %1499 = vmatprep.subr.mxu0 0.0
      %1500 = vmatpush1.msra.mxu0 0.0
      %1501 = vmatprep.subr.mxu0 0.0
      %1502 = vmatpush1.msra.mxu0 0.0
      %1503 = vmatprep.subr.mxu0 0.0
      %1504 = vmatpush1.msra.mxu0 0.0
      %1505 = vmatprep.subr.mxu0 0.0
      %1506 = vmatpush1.msra.mxu0 0.0
      %1507 = vmatprep.subr.mxu0 0.0
      %1508 = vmatpush1.msra.mxu0 0.0
      %1509 = vmatprep.subr.mxu0 0.0
      %1510 = vmatpush1.msra.mxu0 0.0
      %1511 = vmatprep.subr.mxu0 0.0
      %1512 = vmatpush1.msra.mxu0 0.0
      %1513 = vmatprep.subr.mxu0 0.0
      %1514 = vmatpush1.msra.mxu0 0.0
      %1515 = vmatprep.subr.mxu0 0.0
      %1516 = vmatpush1.msra.mxu0 0.0
      %1517 = vmatprep.subr.mxu0 0.0
      %1518 = vmatpush1.msra.mxu0 0.0
      %1519 = vmatprep.subr.mxu0 0.0
      %1520 = vmatpush1.msra.mxu0 0.0
      %1521 = vmatprep.subr.mxu0 0.0
      %1522 = vmatpush1.msra.mxu0 0.0
      %1523 = vmatprep.subr.mxu0 0.0
      %1524 = vmatpush1.msra.mxu0 0.0
      %1525 = vmatprep.subr.mxu0 0.0
      %1526 = vmatpush1.msra.mxu0 0.0
      %1527 = vmatprep.subr.mxu0 0.0
      %1528 = vmatpush1.msra.mxu0 0.0
      %1529 = vmatprep.subr.mxu0 0.0
      %1530 = vmatpush1.msra.mxu0 0.0
      %1531 = vmatprep.subr.mxu0 0.0
      %1532 = vmatpush1.msra.mxu0 0.0
      %1533 = vmatprep.subr.mxu0 0.0
      %1534 = vmatpush1.msra.mxu0 0.0
      %1535 = vmatprep.subr.mxu0 0.0
      %1536 = vmatpush1.msra.mxu0 0.0
      %1537 = vmatprep.subr.mxu0 0.0
      %1538 = vmatpush1.msra.mxu0 0.0
      %1539 = vmatprep.subr.mxu0 0.0
      %1540 = vmatpush1.msra.mxu0 0.0
      %1541 = vmatprep.subr.mxu0 0.0
      %1542 = vmatpush1.msra.mxu0 0.0
      %1543 = vmatprep.subr.mxu0 0.0
      %1544 = vmatpush1.msra.mxu0 0.0
      %1545 = vmatprep.subr.mxu0 0.0
      %1546 = vmatpush1.msra.mxu0 0.0
      %1547 = vmatprep.subr.mxu0 0.0
      %1548 = vmatpush1.msra.mxu0 0.0
      %1549 = vmatprep.subr.mxu0 0.0
      %1550 = vmatpush1.msra.mxu0 0.0
      %1551 = vmatprep.subr.mxu0 0.0
      %1552 = vmatpush1.msra.mxu0 0.0
      %1553 = vmatprep.subr.mxu0 0.0
      %1554 = vmatpush1.msra.mxu0 0.0
      %1555 = vmatprep.mubr.f32.mxu0 0.0
      %1556 = vmatmul.mubr.f32.gmra.mrb[0].mxu0 %v1412
      %v1557 = vpop.f32.mrb[0].mxu0
      %v1558 = vadd.f32 0.0, %v1557
      %v1559 = vpop.f32.mrb[0].mxu0
      %1560 = vdwg.mxu0
      %v1561 = vadd.f32 %v1397, %v1487
      %v1562 = vadd.f32 %v1398, %v1489
      %v1563 = vadd.f32 %v1399, %v1558
      %s1564 = scalar_lea.vmem %s1, 64
      %v1565 = vld [vmem:[%s1564] sm:$0xff]
      %1566 = vrot.lane.b32.xlu0 %v252, 73
      %v1567 = vpop.permute.xlu0 %1566
      %1568 = vrot.lane.b32.xlu0 %v259, 73
      %v1569 = vpop.permute.xlu0 %1568
      %1570 = vrot.lane.b32.xlu0 %v253, 73
      %v1571 = vpop.permute.xlu0 %1570
      %vm1572 = vcmask 596992
      %v1573 = vsel %vm1572, %v1567, %v1569
      %v1574 = vsel %vm1572, %v1569, %v1571
      %v1576 = vsel %vm269, %v1565, 0
      %v1578 = vsel %vm273, %v1573, 0
      %v1580 = vsel %vm273, %v1574, 0
      %v1582 = vsel %vm273, %v1571, 0
      %1584 = vmatprep.subr.mxu0 %v1580
      %1585 = vmatpush1.msra.mxu0 %v1578
      %1586 = vmatprep.subr.mxu0 0.0
      %1587 = vmatpush1.msra.mxu0 0.0
      %1588 = vmatprep.subr.mxu0 0.0
      %1589 = vmatpush1.msra.mxu0 0.0
      %1590 = vmatprep.subr.mxu0 0.0
      %1591 = vmatpush1.msra.mxu0 0.0
      %1592 = vmatprep.subr.mxu0 0.0
      %1593 = vmatpush1.msra.mxu0 0.0
      %1594 = vmatprep.subr.mxu0 0.0
      %1595 = vmatpush1.msra.mxu0 0.0
      %1596 = vmatprep.subr.mxu0 0.0
      %1597 = vmatpush1.msra.mxu0 0.0
      %1598 = vmatprep.subr.mxu0 0.0
      %1599 = vmatpush1.msra.mxu0 0.0
      %1600 = vmatprep.subr.mxu0 0.0
      %1601 = vmatpush1.msra.mxu0 0.0
      %1602 = vmatprep.subr.mxu0 0.0
      %1603 = vmatpush1.msra.mxu0 0.0
      %1604 = vmatprep.subr.mxu0 0.0
      %1605 = vmatpush1.msra.mxu0 0.0
      %1606 = vmatprep.subr.mxu0 0.0
      %1607 = vmatpush1.msra.mxu0 0.0
      %1608 = vmatprep.subr.mxu0 0.0
      %1609 = vmatpush1.msra.mxu0 0.0
      %1610 = vmatprep.subr.mxu0 0.0
      %1611 = vmatpush1.msra.mxu0 0.0
      %1612 = vmatprep.subr.mxu0 0.0
      %1613 = vmatpush1.msra.mxu0 0.0
      %1614 = vmatprep.subr.mxu0 0.0
      %1615 = vmatpush1.msra.mxu0 0.0
      %1616 = vmatprep.subr.mxu0 0.0
      %1617 = vmatpush1.msra.mxu0 0.0
      %1618 = vmatprep.subr.mxu0 0.0
      %1619 = vmatpush1.msra.mxu0 0.0
      %1620 = vmatprep.subr.mxu0 0.0
      %1621 = vmatpush1.msra.mxu0 0.0
      %1622 = vmatprep.subr.mxu0 0.0
      %1623 = vmatpush1.msra.mxu0 0.0
      %1624 = vmatprep.subr.mxu0 0.0
      %1625 = vmatpush1.msra.mxu0 0.0
      %1626 = vmatprep.subr.mxu0 0.0
      %1627 = vmatpush1.msra.mxu0 0.0
      %1628 = vmatprep.subr.mxu0 0.0
      %1629 = vmatpush1.msra.mxu0 0.0
      %1630 = vmatprep.subr.mxu0 0.0
      %1631 = vmatpush1.msra.mxu0 0.0
      %1632 = vmatprep.subr.mxu0 0.0
      %1633 = vmatpush1.msra.mxu0 0.0
      %1634 = vmatprep.subr.mxu0 0.0
      %1635 = vmatpush1.msra.mxu0 0.0
      %1636 = vmatprep.subr.mxu0 0.0
      %1637 = vmatpush1.msra.mxu0 0.0
      %1638 = vmatprep.subr.mxu0 0.0
      %1639 = vmatpush1.msra.mxu0 0.0
      %1640 = vmatprep.subr.mxu0 0.0
      %1641 = vmatpush1.msra.mxu0 0.0
      %1642 = vmatprep.subr.mxu0 0.0
      %1643 = vmatpush1.msra.mxu0 0.0
      %1644 = vmatprep.subr.mxu0 0.0
      %1645 = vmatpush1.msra.mxu0 0.0
      %1646 = vmatprep.subr.mxu0 0.0
      %1647 = vmatpush1.msra.mxu0 0.0
      %1648 = vmatprep.mubr.f32.mxu0 0.0
      %1649 = vmatmul.mubr.f32.gmra.mrb[0].mxu0 %v1576
      %v1650 = vpop.f32.mrb[0].mxu0
      %v1651 = vadd.f32 0.0, %v1650
      %v1652 = vpop.f32.mrb[0].mxu0
      %v1653 = vadd.f32 0.0, %v1652
      %1654 = vdwg.mxu0
      %1655 = vmatprep.subr.mxu0 0.0
      %1656 = vmatpush1.msra.mxu0 %v1582
      %1657 = vmatprep.subr.mxu0 0.0
      %1658 = vmatpush1.msra.mxu0 0.0
      %1659 = vmatprep.subr.mxu0 0.0
      %1660 = vmatpush1.msra.mxu0 0.0
      %1661 = vmatprep.subr.mxu0 0.0
      %1662 = vmatpush1.msra.mxu0 0.0
      %1663 = vmatprep.subr.mxu0 0.0
      %1664 = vmatpush1.msra.mxu0 0.0
      %1665 = vmatprep.subr.mxu0 0.0
      %1666 = vmatpush1.msra.mxu0 0.0
      %1667 = vmatprep.subr.mxu0 0.0
      %1668 = vmatpush1.msra.mxu0 0.0
      %1669 = vmatprep.subr.mxu0 0.0
      %1670 = vmatpush1.msra.mxu0 0.0
      %1671 = vmatprep.subr.mxu0 0.0
      %1672 = vmatpush1.msra.mxu0 0.0
      %1673 = vmatprep.subr.mxu0 0.0
      %1674 = vmatpush1.msra.mxu0 0.0
      %1675 = vmatprep.subr.mxu0 0.0
      %1676 = vmatpush1.msra.mxu0 0.0
      %1677 = vmatprep.subr.mxu0 0.0
      %1678 = vmatpush1.msra.mxu0 0.0
      %1679 = vmatprep.subr.mxu0 0.0
      %1680 = vmatpush1.msra.mxu0 0.0
      %1681 = vmatprep.subr.mxu0 0.0
      %1682 = vmatpush1.msra.mxu0 0.0
      %1683 = vmatprep.subr.mxu0 0.0
      %1684 = vmatpush1.msra.mxu0 0.0
      %1685 = vmatprep.subr.mxu0 0.0
      %1686 = vmatpush1.msra.mxu0 0.0
      %1687 = vmatprep.subr.mxu0 0.0
      %1688 = vmatpush1.msra.mxu0 0.0
      %1689 = vmatprep.subr.mxu0 0.0
      %1690 = vmatpush1.msra.mxu0 0.0
      %1691 = vmatprep.subr.mxu0 0.0
      %1692 = vmatpush1.msra.mxu0 0.0
      %1693 = vmatprep.subr.mxu0 0.0
      %1694 = vmatpush1.msra.mxu0 0.0
      %1695 = vmatprep.subr.mxu0 0.0
      %1696 = vmatpush1.msra.mxu0 0.0
      %1697 = vmatprep.subr.mxu0 0.0
      %1698 = vmatpush1.msra.mxu0 0.0
      %1699 = vmatprep.subr.mxu0 0.0
      %1700 = vmatpush1.msra.mxu0 0.0
      %1701 = vmatprep.subr.mxu0 0.0
      %1702 = vmatpush1.msra.mxu0 0.0
      %1703 = vmatprep.subr.mxu0 0.0
      %1704 = vmatpush1.msra.mxu0 0.0
      %1705 = vmatprep.subr.mxu0 0.0
      %1706 = vmatpush1.msra.mxu0 0.0
      %1707 = vmatprep.subr.mxu0 0.0
      %1708 = vmatpush1.msra.mxu0 0.0
      %1709 = vmatprep.subr.mxu0 0.0
      %1710 = vmatpush1.msra.mxu0 0.0
      %1711 = vmatprep.subr.mxu0 0.0
      %1712 = vmatpush1.msra.mxu0 0.0
      %1713 = vmatprep.subr.mxu0 0.0
      %1714 = vmatpush1.msra.mxu0 0.0
      %1715 = vmatprep.subr.mxu0 0.0
      %1716 = vmatpush1.msra.mxu0 0.0
      %1717 = vmatprep.subr.mxu0 0.0
      %1718 = vmatpush1.msra.mxu0 0.0
      %1719 = vmatprep.mubr.f32.mxu0 0.0
      %1720 = vmatmul.mubr.f32.gmra.mrb[0].mxu0 %v1576
      %v1721 = vpop.f32.mrb[0].mxu0
      %v1722 = vadd.f32 0.0, %v1721
      %v1723 = vpop.f32.mrb[0].mxu0
      %1724 = vdwg.mxu0
      %v1725 = vadd.f32 %v1561, %v1651
      %v1726 = vadd.f32 %v1562, %v1653
      %v1727 = vadd.f32 %v1563, %v1722
      %v1728 = vld [vmem:[%s2] sm:$0xff]
      %1730 = vset.pattern.permute.xlu0 0
      %1731 = vperm.xlu0 %1730, %v1728
      %v1732 = vpop.permute.xlu0 %1731
      %v1734 = vadd.f32 %v1725, %v1732
      %v1735 = vadd.f32 %v1726, %v1732
      %v1736 = vadd.f32 %v1727, %v1732
      %v1737 = vmax.f32 %v1734, 0.0
      %v1738 = vmax.f32 %v1735, 0.0
      %v1739 = vmax.f32 %v1736, 0.0
      %v1740 = vld [vmem:[%s5] sm:$0x7]
      %v1742 = vlaneseq
      %v1743 = vshrl.u32 %v1742, 7
      %v1744 = vsub.s32 0, %v1743
      %v1745 = vrot.slane %v1740, %v1744
      %v1746 = vlaneseq
      %v1747 = vshrl.u32 %v1746, 7
      %v1748 = vsub.s32 1, %v1747
      %v1749 = vrot.slane %v1740, %v1748
      %v1750 = vlaneseq
      %v1751 = vshrl.u32 %v1750, 7
      %v1752 = vsub.s32 2, %v1751
      %v1753 = vrot.slane %v1740, %v1752
      %v1757 = vmul.f32 %v1737, %v1745
      %v1758 = vmul.f32 %v1738, %v1749
      %v1759 = vmul.f32 %v1739, %v1753
      %1760 = vst [vmem:[#allocation2] sm:$0xff] 0.0
      %1761 = vst [vmem:[#allocation2 + $0x8] sm:$0xff] 0.0
      %1762 = vst [vmem:[#allocation2 + $0x10] sm:$0xff] 0.0
      %vm1763 = vcmask 97280
      %1764 = vst.msk [vmem:[#allocation2 + $0x18] sm:$0xff] %vm1763, 0.0
      %1768 = vrot.lane.b32.xlu0 %v1757, 36
      %v1769 = vpop.permute.xlu0 %1768
      %1770 = vrot.lane.b32.xlu0 %v1758, 36
      %v1771 = vpop.permute.xlu0 %1770
      %1772 = vrot.lane.b32.xlu0 %v1759, 36
      %v1773 = vpop.permute.xlu0 %1772
      %vm1774 = vcmask 293888
      %v1775 = vsel %vm1774, %v1769, %v1771
      %v1776 = vsel %vm1774, %v1771, %v1773
      %vm1780 = vcmask 1047840
      %1781 = vst.msk [vmem:[#allocation2] sm:$0xff] %vm1780, %v1769
      %1782 = vst [vmem:[#allocation2 + $0x8] sm:$0xff] %v1775
      %vm1783 = vcmask 850944
      %1784 = vst.msk [vmem:[#allocation2 + $0x10] sm:$0xff] %vm1783, %v1776
      %v1785 = vld [vmem:[%s3] sm:$0xf]
      %v1786 = vld [vmem:[#allocation2] sm:$0xff]
      %v1787 = vld [vmem:[#allocation2 + $0x8] sm:$0xff]
      %v1788 = vld [vmem:[#allocation2 + $0x10] sm:$0xff]
      %s1789 = scalar_lea.vmem %s3, 4
      %v1790 = vld [vmem:[%s1789] sm:$0xf]
      %1794 = vrot.lane.b32.xlu0 %v1786, 110
      %v1795 = vpop.permute.xlu0 %1794
      %1796 = vrot.lane.b32.xlu0 %v1787, 110
      %v1797 = vpop.permute.xlu0 %1796
      %1798 = vrot.lane.b32.xlu0 %v1788, 110
      %v1799 = vpop.permute.xlu0 %1798
      %v1800 = vsel %vm266, %v1795, %v1797
      %v1801 = vsel %vm266, %v1797, %v1799
      %vm1805 = vcmask 64512
      %v1807 = vsel %vm1805, %v1790, 0
      %1809 = vmatprep.subr.mxu0 %v1801
      %1810 = vmatpush1.msra.mxu0 %v1800
      %1811 = vmatprep.subr.mxu0 0.0
      %1812 = vmatpush1.msra.mxu0 0.0
      %1813 = vmatprep.subr.mxu0 0.0
      %1814 = vmatpush1.msra.mxu0 0.0
      %1815 = vmatprep.subr.mxu0 0.0
      %1816 = vmatpush1.msra.mxu0 0.0
      %1817 = vmatprep.subr.mxu0 0.0
      %1818 = vmatpush1.msra.mxu0 0.0
      %1819 = vmatprep.subr.mxu0 0.0
      %1820 = vmatpush1.msra.mxu0 0.0
      %1821 = vmatprep.subr.mxu0 0.0
      %1822 = vmatpush1.msra.mxu0 0.0
      %1823 = vmatprep.subr.mxu0 0.0
      %1824 = vmatpush1.msra.mxu0 0.0
      %1825 = vmatprep.subr.mxu0 0.0
      %1826 = vmatpush1.msra.mxu0 0.0
      %1827 = vmatprep.subr.mxu0 0.0
      %1828 = vmatpush1.msra.mxu0 0.0
      %1829 = vmatprep.subr.mxu0 0.0
      %1830 = vmatpush1.msra.mxu0 0.0
      %1831 = vmatprep.subr.mxu0 0.0
      %1832 = vmatpush1.msra.mxu0 0.0
      %1833 = vmatprep.subr.mxu0 0.0
      %1834 = vmatpush1.msra.mxu0 0.0
      %1835 = vmatprep.subr.mxu0 0.0
      %1836 = vmatpush1.msra.mxu0 0.0
      %1837 = vmatprep.subr.mxu0 0.0
      %1838 = vmatpush1.msra.mxu0 0.0
      %1839 = vmatprep.subr.mxu0 0.0
      %1840 = vmatpush1.msra.mxu0 0.0
      %1841 = vmatprep.subr.mxu0 0.0
      %1842 = vmatpush1.msra.mxu0 0.0
      %1843 = vmatprep.subr.mxu0 0.0
      %1844 = vmatpush1.msra.mxu0 0.0
      %1845 = vmatprep.subr.mxu0 0.0
      %1846 = vmatpush1.msra.mxu0 0.0
      %1847 = vmatprep.subr.mxu0 0.0
      %1848 = vmatpush1.msra.mxu0 0.0
      %1849 = vmatprep.subr.mxu0 0.0
      %1850 = vmatpush1.msra.mxu0 0.0
      %1851 = vmatprep.subr.mxu0 0.0
      %1852 = vmatpush1.msra.mxu0 0.0
      %1853 = vmatprep.subr.mxu0 0.0
      %1854 = vmatpush1.msra.mxu0 0.0
      %1855 = vmatprep.subr.mxu0 0.0
      %1856 = vmatpush1.msra.mxu0 0.0
      %1857 = vmatprep.subr.mxu0 0.0
      %1858 = vmatpush1.msra.mxu0 0.0
      %1859 = vmatprep.subr.mxu0 0.0
      %1860 = vmatpush1.msra.mxu0 0.0
      %1861 = vmatprep.subr.mxu0 0.0
      %1862 = vmatpush1.msra.mxu0 0.0
      %1863 = vmatprep.subr.mxu0 0.0
      %1864 = vmatpush1.msra.mxu0 0.0
      %1865 = vmatprep.subr.mxu0 0.0
      %1866 = vmatpush1.msra.mxu0 0.0
      %1867 = vmatprep.subr.mxu0 0.0
      %1868 = vmatpush1.msra.mxu0 0.0
      %1869 = vmatprep.subr.mxu0 0.0
      %1870 = vmatpush1.msra.mxu0 0.0
      %1871 = vmatprep.subr.mxu0 0.0
      %1872 = vmatpush1.msra.mxu0 0.0
      %1873 = vmatprep.mubr.f32.mxu0 0.0
      %1874 = vmatmul.mubr.f32.gmra.mrb[0].mxu0 %v1807
      %v1875 = vpop.f32.mrb[0].mxu0
      %v1876 = vadd.f32 0.0, %v1875
      %v1877 = vpop.f32.mrb[0].mxu0
      %v1878 = vadd.f32 0.0, %v1877
      %1879 = vdwg.mxu0
      %1880 = vmatprep.subr.mxu0 0.0
      %1881 = vmatpush1.msra.mxu0 %v1799
      %1882 = vmatprep.subr.mxu0 0.0
      %1883 = vmatpush1.msra.mxu0 0.0
      %1884 = vmatprep.subr.mxu0 0.0
      %1885 = vmatpush1.msra.mxu0 0.0
      %1886 = vmatprep.subr.mxu0 0.0
      %1887 = vmatpush1.msra.mxu0 0.0
      %1888 = vmatprep.subr.mxu0 0.0
      %1889 = vmatpush1.msra.mxu0 0.0
      %1890 = vmatprep.subr.mxu0 0.0
      %1891 = vmatpush1.msra.mxu0 0.0
      %1892 = vmatprep.subr.mxu0 0.0
      %1893 = vmatpush1.msra.mxu0 0.0
      %1894 = vmatprep.subr.mxu0 0.0
      %1895 = vmatpush1.msra.mxu0 0.0
      %1896 = vmatprep.subr.mxu0 0.0
      %1897 = vmatpush1.msra.mxu0 0.0
      %1898 = vmatprep.subr.mxu0 0.0
      %1899 = vmatpush1.msra.mxu0 0.0
      %1900 = vmatprep.subr.mxu0 0.0
      %1901 = vmatpush1.msra.mxu0 0.0
      %1902 = vmatprep.subr.mxu0 0.0
      %1903 = vmatpush1.msra.mxu0 0.0
      %1904 = vmatprep.subr.mxu0 0.0
      %1905 = vmatpush1.msra.mxu0 0.0
      %1906 = vmatprep.subr.mxu0 0.0
      %1907 = vmatpush1.msra.mxu0 0.0
      %1908 = vmatprep.subr.mxu0 0.0
      %1909 = vmatpush1.msra.mxu0 0.0
      %1910 = vmatprep.subr.mxu0 0.0
      %1911 = vmatpush1.msra.mxu0 0.0
      %1912 = vmatprep.subr.mxu0 0.0
      %1913 = vmatpush1.msra.mxu0 0.0
      %1914 = vmatprep.subr.mxu0 0.0
      %1915 = vmatpush1.msra.mxu0 0.0
      %1916 = vmatprep.subr.mxu0 0.0
      %1917 = vmatpush1.msra.mxu0 0.0
      %1918 = vmatprep.subr.mxu0 0.0
      %1919 = vmatpush1.msra.mxu0 0.0
      %1920 = vmatprep.subr.mxu0 0.0
      %1921 = vmatpush1.msra.mxu0 0.0
      %1922 = vmatprep.subr.mxu0 0.0
      %1923 = vmatpush1.msra.mxu0 0.0
      %1924 = vmatprep.subr.mxu0 0.0
      %1925 = vmatpush1.msra.mxu0 0.0
      %1926 = vmatprep.subr.mxu0 0.0
      %1927 = vmatpush1.msra.mxu0 0.0
      %1928 = vmatprep.subr.mxu0 0.0
      %1929 = vmatpush1.msra.mxu0 0.0
      %1930 = vmatprep.subr.mxu0 0.0
      %1931 = vmatpush1.msra.mxu0 0.0
      %1932 = vmatprep.subr.mxu0 0.0
      %1933 = vmatpush1.msra.mxu0 0.0
      %1934 = vmatprep.subr.mxu0 0.0
      %1935 = vmatpush1.msra.mxu0 0.0
      %1936 = vmatprep.subr.mxu0 0.0
      %1937 = vmatpush1.msra.mxu0 0.0
      %1938 = vmatprep.subr.mxu0 0.0
      %1939 = vmatpush1.msra.mxu0 0.0
      %1940 = vmatprep.subr.mxu0 0.0
      %1941 = vmatpush1.msra.mxu0 0.0
      %1942 = vmatprep.subr.mxu0 0.0
      %1943 = vmatpush1.msra.mxu0 0.0
      %1944 = vmatprep.mubr.f32.mxu0 0.0
      %1945 = vmatmul.mubr.f32.gmra.mrb[0].mxu0 %v1807
      %v1946 = vpop.f32.mrb[0].mxu0
      %v1947 = vadd.f32 0.0, %v1946
      %v1948 = vpop.f32.mrb[0].mxu0
      %1949 = vdwg.mxu0
      %1950 = vrot.lane.b32.xlu0 %v1786, 111
      %v1951 = vpop.permute.xlu0 %1950
      %1952 = vrot.lane.b32.xlu0 %v1787, 111
      %v1953 = vpop.permute.xlu0 %1952
      %1954 = vrot.lane.b32.xlu0 %v1788, 111
      %v1955 = vpop.permute.xlu0 %1954
      %v1956 = vsel %vm427, %v1951, %v1953
      %v1957 = vsel %vm427, %v1953, %v1955
      %v1962 = vsel %vm1805, %v1785, 0
      %1964 = vmatprep.subr.mxu0 %v1957
      %1965 = vmatpush1.msra.mxu0 %v1956
      %1966 = vmatprep.subr.mxu0 0.0
      %1967 = vmatpush1.msra.mxu0 0.0
      %1968 = vmatprep.subr.mxu0 0.0
      %1969 = vmatpush1.msra.mxu0 0.0
      %1970 = vmatprep.subr.mxu0 0.0
      %1971 = vmatpush1.msra.mxu0 0.0
      %1972 = vmatprep.subr.mxu0 0.0
      %1973 = vmatpush1.msra.mxu0 0.0
      %1974 = vmatprep.subr.mxu0 0.0
      %1975 = vmatpush1.msra.mxu0 0.0
      %1976 = vmatprep.subr.mxu0 0.0
      %1977 = vmatpush1.msra.mxu0 0.0
      %1978 = vmatprep.subr.mxu0 0.0
      %1979 = vmatpush1.msra.mxu0 0.0
      %1980 = vmatprep.subr.mxu0 0.0
      %1981 = vmatpush1.msra.mxu0 0.0
      %1982 = vmatprep.subr.mxu0 0.0
      %1983 = vmatpush1.msra.mxu0 0.0
      %1984 = vmatprep.subr.mxu0 0.0
      %1985 = vmatpush1.msra.mxu0 0.0
      %1986 = vmatprep.subr.mxu0 0.0
      %1987 = vmatpush1.msra.mxu0 0.0
      %1988 = vmatprep.subr.mxu0 0.0
      %1989 = vmatpush1.msra.mxu0 0.0
      %1990 = vmatprep.subr.mxu0 0.0
      %1991 = vmatpush1.msra.mxu0 0.0
      %1992 = vmatprep.subr.mxu0 0.0
      %1993 = vmatpush1.msra.mxu0 0.0
      %1994 = vmatprep.subr.mxu0 0.0
      %1995 = vmatpush1.msra.mxu0 0.0
      %1996 = vmatprep.subr.mxu0 0.0
      %1997 = vmatpush1.msra.mxu0 0.0
      %1998 = vmatprep.subr.mxu0 0.0
      %1999 = vmatpush1.msra.mxu0 0.0
      %2000 = vmatprep.subr.mxu0 0.0
      %2001 = vmatpush1.msra.mxu0 0.0
      %2002 = vmatprep.subr.mxu0 0.0
      %2003 = vmatpush1.msra.mxu0 0.0
      %2004 = vmatprep.subr.mxu0 0.0
      %2005 = vmatpush1.msra.mxu0 0.0
      %2006 = vmatprep.subr.mxu0 0.0
      %2007 = vmatpush1.msra.mxu0 0.0
      %2008 = vmatprep.subr.mxu0 0.0
      %2009 = vmatpush1.msra.mxu0 0.0
      %2010 = vmatprep.subr.mxu0 0.0
      %2011 = vmatpush1.msra.mxu0 0.0
      %2012 = vmatprep.subr.mxu0 0.0
      %2013 = vmatpush1.msra.mxu0 0.0
      %2014 = vmatprep.subr.mxu0 0.0
      %2015 = vmatpush1.msra.mxu0 0.0
      %2016 = vmatprep.subr.mxu0 0.0
      %2017 = vmatpush1.msra.mxu0 0.0
      %2018 = vmatprep.subr.mxu0 0.0
      %2019 = vmatpush1.msra.mxu0 0.0
      %2020 = vmatprep.subr.mxu0 0.0
      %2021 = vmatpush1.msra.mxu0 0.0
      %2022 = vmatprep.subr.mxu0 0.0
      %2023 = vmatpush1.msra.mxu0 0.0
      %2024 = vmatprep.subr.mxu0 0.0
      %2025 = vmatpush1.msra.mxu0 0.0
      %2026 = vmatprep.subr.mxu0 0.0
      %2027 = vmatpush1.msra.mxu0 0.0
      %2028 = vmatprep.mubr.f32.mxu0 0.0
      %2029 = vmatmul.mubr.f32.gmra.mrb[0].mxu0 %v1962
      %v2030 = vpop.f32.mrb[0].mxu0
      %v2031 = vadd.f32 %v1876, %v2030
      %v2032 = vpop.f32.mrb[0].mxu0
      %v2033 = vadd.f32 %v1878, %v2032
      %2034 = vdwg.mxu0
      %2035 = vmatprep.subr.mxu0 0.0
      %2036 = vmatpush1.msra.mxu0 %v1955
      %2037 = vmatprep.subr.mxu0 0.0
      %2038 = vmatpush1.msra.mxu0 0.0
      %2039 = vmatprep.subr.mxu0 0.0
      %2040 = vmatpush1.msra.mxu0 0.0
      %2041 = vmatprep.subr.mxu0 0.0
      %2042 = vmatpush1.msra.mxu0 0.0
      %2043 = vmatprep.subr.mxu0 0.0
      %2044 = vmatpush1.msra.mxu0 0.0
      %2045 = vmatprep.subr.mxu0 0.0
      %2046 = vmatpush1.msra.mxu0 0.0
      %2047 = vmatprep.subr.mxu0 0.0
      %2048 = vmatpush1.msra.mxu0 0.0
      %2049 = vmatprep.subr.mxu0 0.0
      %2050 = vmatpush1.msra.mxu0 0.0
      %2051 = vmatprep.subr.mxu0 0.0
      %2052 = vmatpush1.msra.mxu0 0.0
      %2053 = vmatprep.subr.mxu0 0.0
      %2054 = vmatpush1.msra.mxu0 0.0
      %2055 = vmatprep.subr.mxu0 0.0
      %2056 = vmatpush1.msra.mxu0 0.0
      %2057 = vmatprep.subr.mxu0 0.0
      %2058 = vmatpush1.msra.mxu0 0.0
      %2059 = vmatprep.subr.mxu0 0.0
      %2060 = vmatpush1.msra.mxu0 0.0
      %2061 = vmatprep.subr.mxu0 0.0
      %2062 = vmatpush1.msra.mxu0 0.0
      %2063 = vmatprep.subr.mxu0 0.0
      %2064 = vmatpush1.msra.mxu0 0.0
      %2065 = vmatprep.subr.mxu0 0.0
      %2066 = vmatpush1.msra.mxu0 0.0
      %2067 = vmatprep.subr.mxu0 0.0
      %2068 = vmatpush1.msra.mxu0 0.0
      %2069 = vmatprep.subr.mxu0 0.0
      %2070 = vmatpush1.msra.mxu0 0.0
      %2071 = vmatprep.subr.mxu0 0.0
      %2072 = vmatpush1.msra.mxu0 0.0
      %2073 = vmatprep.subr.mxu0 0.0
      %2074 = vmatpush1.msra.mxu0 0.0
      %2075 = vmatprep.subr.mxu0 0.0
      %2076 = vmatpush1.msra.mxu0 0.0
      %2077 = vmatprep.subr.mxu0 0.0
      %2078 = vmatpush1.msra.mxu0 0.0
      %2079 = vmatprep.subr.mxu0 0.0
      %2080 = vmatpush1.msra.mxu0 0.0
      %2081 = vmatprep.subr.mxu0 0.0
      %2082 = vmatpush1.msra.mxu0 0.0
      %2083 = vmatprep.subr.mxu0 0.0
      %2084 = vmatpush1.msra.mxu0 0.0
      %2085 = vmatprep.subr.mxu0 0.0
      %2086 = vmatpush1.msra.mxu0 0.0
      %2087 = vmatprep.subr.mxu0 0.0
      %2088 = vmatpush1.msra.mxu0 0.0
      %2089 = vmatprep.subr.mxu0 0.0
      %2090 = vmatpush1.msra.mxu0 0.0
      %2091 = vmatprep.subr.mxu0 0.0
      %2092 = vmatpush1.msra.mxu0 0.0
      %2093 = vmatprep.subr.mxu0 0.0
      %2094 = vmatpush1.msra.mxu0 0.0
      %2095 = vmatprep.subr.mxu0 0.0
      %2096 = vmatpush1.msra.mxu0 0.0
      %2097 = vmatprep.subr.mxu0 0.0
      %2098 = vmatpush1.msra.mxu0 0.0
      %2099 = vmatprep.mubr.f32.mxu0 0.0
      %2100 = vmatmul.mubr.f32.gmra.mrb[0].mxu0 %v1962
      %v2101 = vpop.f32.mrb[0].mxu0
      %v2102 = vadd.f32 %v1947, %v2101
      %v2103 = vpop.f32.mrb[0].mxu0
      %2104 = vdwg.mxu0
      %s2105 = scalar_lea.vmem %s3, 8
      %v2106 = vld [vmem:[%s2105] sm:$0xf]
      %2107 = vrot.lane.b32.xlu0 %v1786, 109
      %v2108 = vpop.permute.xlu0 %2107
      %2109 = vrot.lane.b32.xlu0 %v1787, 109
      %v2110 = vpop.permute.xlu0 %2109
      %2111 = vrot.lane.b32.xlu0 %v1788, 109
      %v2112 = vpop.permute.xlu0 %2111
      %v2113 = vsel %vm588, %v2108, %v2110
      %v2114 = vsel %vm588, %v2110, %v2112
      %v2119 = vsel %vm1805, %v2106, 0
      %2121 = vmatprep.subr.mxu0 %v2114
      %2122 = vmatpush1.msra.mxu0 %v2113
      %2123 = vmatprep.subr.mxu0 0.0
      %2124 = vmatpush1.msra.mxu0 0.0
      %2125 = vmatprep.subr.mxu0 0.0
      %2126 = vmatpush1.msra.mxu0 0.0
      %2127 = vmatprep.subr.mxu0 0.0
      %2128 = vmatpush1.msra.mxu0 0.0
      %2129 = vmatprep.subr.mxu0 0.0
      %2130 = vmatpush1.msra.mxu0 0.0
      %2131 = vmatprep.subr.mxu0 0.0
      %2132 = vmatpush1.msra.mxu0 0.0
      %2133 = vmatprep.subr.mxu0 0.0
      %2134 = vmatpush1.msra.mxu0 0.0
      %2135 = vmatprep.subr.mxu0 0.0
      %2136 = vmatpush1.msra.mxu0 0.0
      %2137 = vmatprep.subr.mxu0 0.0
      %2138 = vmatpush1.msra.mxu0 0.0
      %2139 = vmatprep.subr.mxu0 0.0
      %2140 = vmatpush1.msra.mxu0 0.0
      %2141 = vmatprep.subr.mxu0 0.0
      %2142 = vmatpush1.msra.mxu0 0.0
      %2143 = vmatprep.subr.mxu0 0.0
      %2144 = vmatpush1.msra.mxu0 0.0
      %2145 = vmatprep.subr.mxu0 0.0
      %2146 = vmatpush1.msra.mxu0 0.0
      %2147 = vmatprep.subr.mxu0 0.0
      %2148 = vmatpush1.msra.mxu0 0.0
      %2149 = vmatprep.subr.mxu0 0.0
      %2150 = vmatpush1.msra.mxu0 0.0
      %2151 = vmatprep.subr.mxu0 0.0
      %2152 = vmatpush1.msra.mxu0 0.0
      %2153 = vmatprep.subr.mxu0 0.0
      %2154 = vmatpush1.msra.mxu0 0.0
      %2155 = vmatprep.subr.mxu0 0.0
      %2156 = vmatpush1.msra.mxu0 0.0
      %2157 = vmatprep.subr.mxu0 0.0
      %2158 = vmatpush1.msra.mxu0 0.0
      %2159 = vmatprep.subr.mxu0 0.0
      %2160 = vmatpush1.msra.mxu0 0.0
      %2161 = vmatprep.subr.mxu0 0.0
      %2162 = vmatpush1.msra.mxu0 0.0
      %2163 = vmatprep.subr.mxu0 0.0
      %2164 = vmatpush1.msra.mxu0 0.0
      %2165 = vmatprep.subr.mxu0 0.0
      %2166 = vmatpush1.msra.mxu0 0.0
      %2167 = vmatprep.subr.mxu0 0.0
      %2168 = vmatpush1.msra.mxu0 0.0
      %2169 = vmatprep.subr.mxu0 0.0
      %2170 = vmatpush1.msra.mxu0 0.0
      %2171 = vmatprep.subr.mxu0 0.0
      %2172 = vmatpush1.msra.mxu0 0.0
      %2173 = vmatprep.subr.mxu0 0.0
      %2174 = vmatpush1.msra.mxu0 0.0
      %2175 = vmatprep.subr.mxu0 0.0
      %2176 = vmatpush1.msra.mxu0 0.0
      %2177 = vmatprep.subr.mxu0 0.0
      %2178 = vmatpush1.msra.mxu0 0.0
      %2179 = vmatprep.subr.mxu0 0.0
      %2180 = vmatpush1.msra.mxu0 0.0
      %2181 = vmatprep.subr.mxu0 0.0
      %2182 = vmatpush1.msra.mxu0 0.0
      %2183 = vmatprep.subr.mxu0 0.0
      %2184 = vmatpush1.msra.mxu0 0.0
      %2185 = vmatprep.mubr.f32.mxu0 0.0
      %2186 = vmatmul.mubr.f32.gmra.mrb[0].mxu0 %v2119
      %v2187 = vpop.f32.mrb[0].mxu0
      %v2188 = vadd.f32 0.0, %v2187
      %v2189 = vpop.f32.mrb[0].mxu0
      %v2190 = vadd.f32 0.0, %v2189
      %2191 = vdwg.mxu0
      %2192 = vmatprep.subr.mxu0 0.0
      %2193 = vmatpush1.msra.mxu0 %v2112
      %2194 = vmatprep.subr.mxu0 0.0
      %2195 = vmatpush1.msra.mxu0 0.0
      %2196 = vmatprep.subr.mxu0 0.0
      %2197 = vmatpush1.msra.mxu0 0.0
      %2198 = vmatprep.subr.mxu0 0.0
      %2199 = vmatpush1.msra.mxu0 0.0
      %2200 = vmatprep.subr.mxu0 0.0
      %2201 = vmatpush1.msra.mxu0 0.0
      %2202 = vmatprep.subr.mxu0 0.0
      %2203 = vmatpush1.msra.mxu0 0.0
      %2204 = vmatprep.subr.mxu0 0.0
      %2205 = vmatpush1.msra.mxu0 0.0
      %2206 = vmatprep.subr.mxu0 0.0
      %2207 = vmatpush1.msra.mxu0 0.0
      %2208 = vmatprep.subr.mxu0 0.0
      %2209 = vmatpush1.msra.mxu0 0.0
      %2210 = vmatprep.subr.mxu0 0.0
      %2211 = vmatpush1.msra.mxu0 0.0
      %2212 = vmatprep.subr.mxu0 0.0
      %2213 = vmatpush1.msra.mxu0 0.0
      %2214 = vmatprep.subr.mxu0 0.0
      %2215 = vmatpush1.msra.mxu0 0.0
      %2216 = vmatprep.subr.mxu0 0.0
      %2217 = vmatpush1.msra.mxu0 0.0
      %2218 = vmatprep.subr.mxu0 0.0
      %2219 = vmatpush1.msra.mxu0 0.0
      %2220 = vmatprep.subr.mxu0 0.0
      %2221 = vmatpush1.msra.mxu0 0.0
      %2222 = vmatprep.subr.mxu0 0.0
      %2223 = vmatpush1.msra.mxu0 0.0
      %2224 = vmatprep.subr.mxu0 0.0
      %2225 = vmatpush1.msra.mxu0 0.0
      %2226 = vmatprep.subr.mxu0 0.0
      %2227 = vmatpush1.msra.mxu0 0.0
      %2228 = vmatprep.subr.mxu0 0.0
      %2229 = vmatpush1.msra.mxu0 0.0
      %2230 = vmatprep.subr.mxu0 0.0
      %2231 = vmatpush1.msra.mxu0 0.0
      %2232 = vmatprep.subr.mxu0 0.0
      %2233 = vmatpush1.msra.mxu0 0.0
      %2234 = vmatprep.subr.mxu0 0.0
      %2235 = vmatpush1.msra.mxu0 0.0
      %2236 = vmatprep.subr.mxu0 0.0
      %2237 = vmatpush1.msra.mxu0 0.0
      %2238 = vmatprep.subr.mxu0 0.0
      %2239 = vmatpush1.msra.mxu0 0.0
      %2240 = vmatprep.subr.mxu0 0.0
      %2241 = vmatpush1.msra.mxu0 0.0
      %2242 = vmatprep.subr.mxu0 0.0
      %2243 = vmatpush1.msra.mxu0 0.0
      %2244 = vmatprep.subr.mxu0 0.0
      %2245 = vmatpush1.msra.mxu0 0.0
      %2246 = vmatprep.subr.mxu0 0.0
      %2247 = vmatpush1.msra.mxu0 0.0
      %2248 = vmatprep.subr.mxu0 0.0
      %2249 = vmatpush1.msra.mxu0 0.0
      %2250 = vmatprep.subr.mxu0 0.0
      %2251 = vmatpush1.msra.mxu0 0.0
      %2252 = vmatprep.subr.mxu0 0.0
      %2253 = vmatpush1.msra.mxu0 0.0
      %2254 = vmatprep.subr.mxu0 0.0
      %2255 = vmatpush1.msra.mxu0 0.0
      %2256 = vmatprep.mubr.f32.mxu0 0.0
      %2257 = vmatmul.mubr.f32.gmra.mrb[0].mxu0 %v2119
      %v2258 = vpop.f32.mrb[0].mxu0
      %v2259 = vadd.f32 0.0, %v2258
      %v2260 = vpop.f32.mrb[0].mxu0
      %2261 = vdwg.mxu0
      %v2262 = vadd.f32 %v2031, %v2188
      %v2263 = vadd.f32 %v2033, %v2190
      %v2264 = vadd.f32 %v2102, %v2259
      %s2265 = scalar_lea.vmem %s3, 12
      %v2266 = vld [vmem:[%s2265] sm:$0xf]
      %2267 = vrot.lane.b32.xlu0 %v1786, 93
      %v2268 = vpop.permute.xlu0 %2267
      %2269 = vrot.lane.b32.xlu0 %v1787, 93
      %v2270 = vpop.permute.xlu0 %2269
      %2271 = vrot.lane.b32.xlu0 %v1788, 93
      %v2272 = vpop.permute.xlu0 %2271
      %v2273 = vsel %vm752, %v2268, %v2270
      %v2274 = vsel %vm752, %v2270, %v2272
      %v2279 = vsel %vm1805, %v2266, 0
      %2281 = vmatprep.subr.mxu0 %v2274
      %2282 = vmatpush1.msra.mxu0 %v2273
      %2283 = vmatprep.subr.mxu0 0.0
      %2284 = vmatpush1.msra.mxu0 0.0
      %2285 = vmatprep.subr.mxu0 0.0
      %2286 = vmatpush1.msra.mxu0 0.0
      %2287 = vmatprep.subr.mxu0 0.0
      %2288 = vmatpush1.msra.mxu0 0.0
      %2289 = vmatprep.subr.mxu0 0.0
      %2290 = vmatpush1.msra.mxu0 0.0
      %2291 = vmatprep.subr.mxu0 0.0
      %2292 = vmatpush1.msra.mxu0 0.0
      %2293 = vmatprep.subr.mxu0 0.0
      %2294 = vmatpush1.msra.mxu0 0.0
      %2295 = vmatprep.subr.mxu0 0.0
      %2296 = vmatpush1.msra.mxu0 0.0
      %2297 = vmatprep.subr.mxu0 0.0
      %2298 = vmatpush1.msra.mxu0 0.0
      %2299 = vmatprep.subr.mxu0 0.0
      %2300 = vmatpush1.msra.mxu0 0.0
      %2301 = vmatprep.subr.mxu0 0.0
      %2302 = vmatpush1.msra.mxu0 0.0
      %2303 = vmatprep.subr.mxu0 0.0
      %2304 = vmatpush1.msra.mxu0 0.0
      %2305 = vmatprep.subr.mxu0 0.0
      %2306 = vmatpush1.msra.mxu0 0.0
      %2307 = vmatprep.subr.mxu0 0.0
      %2308 = vmatpush1.msra.mxu0 0.0
      %2309 = vmatprep.subr.mxu0 0.0
      %2310 = vmatpush1.msra.mxu0 0.0
      %2311 = vmatprep.subr.mxu0 0.0
      %2312 = vmatpush1.msra.mxu0 0.0
      %2313 = vmatprep.subr.mxu0 0.0
      %2314 = vmatpush1.msra.mxu0 0.0
      %2315 = vmatprep.subr.mxu0 0.0
      %2316 = vmatpush1.msra.mxu0 0.0
      %2317 = vmatprep.subr.mxu0 0.0
      %2318 = vmatpush1.msra.mxu0 0.0
      %2319 = vmatprep.subr.mxu0 0.0
      %2320 = vmatpush1.msra.mxu0 0.0
      %2321 = vmatprep.subr.mxu0 0.0
      %2322 = vmatpush1.msra.mxu0 0.0
      %2323 = vmatprep.subr.mxu0 0.0
      %2324 = vmatpush1.msra.mxu0 0.0
      %2325 = vmatprep.subr.mxu0 0.0
      %2326 = vmatpush1.msra.mxu0 0.0
      %2327 = vmatprep.subr.mxu0 0.0
      %2328 = vmatpush1.msra.mxu0 0.0
      %2329 = vmatprep.subr.mxu0 0.0
      %2330 = vmatpush1.msra.mxu0 0.0
      %2331 = vmatprep.subr.mxu0 0.0
      %2332 = vmatpush1.msra.mxu0 0.0
      %2333 = vmatprep.subr.mxu0 0.0
      %2334 = vmatpush1.msra.mxu0 0.0
      %2335 = vmatprep.subr.mxu0 0.0
      %2336 = vmatpush1.msra.mxu0 0.0
      %2337 = vmatprep.subr.mxu0 0.0
      %2338 = vmatpush1.msra.mxu0 0.0
      %2339 = vmatprep.subr.mxu0 0.0
      %2340 = vmatpush1.msra.mxu0 0.0
      %2341 = vmatprep.subr.mxu0 0.0
      %2342 = vmatpush1.msra.mxu0 0.0
      %2343 = vmatprep.subr.mxu0 0.0
      %2344 = vmatpush1.msra.mxu0 0.0
      %2345 = vmatprep.mubr.f32.mxu0 0.0
      %2346 = vmatmul.mubr.f32.gmra.mrb[0].mxu0 %v2279
      %v2347 = vpop.f32.mrb[0].mxu0
      %v2348 = vadd.f32 0.0, %v2347
      %v2349 = vpop.f32.mrb[0].mxu0
      %v2350 = vadd.f32 0.0, %v2349
      %2351 = vdwg.mxu0
      %2352 = vmatprep.subr.mxu0 0.0
      %2353 = vmatpush1.msra.mxu0 %v2272
      %2354 = vmatprep.subr.mxu0 0.0
      %2355 = vmatpush1.msra.mxu0 0.0
      %2356 = vmatprep.subr.mxu0 0.0
      %2357 = vmatpush1.msra.mxu0 0.0
      %2358 = vmatprep.subr.mxu0 0.0
      %2359 = vmatpush1.msra.mxu0 0.0
      %2360 = vmatprep.subr.mxu0 0.0
      %2361 = vmatpush1.msra.mxu0 0.0
      %2362 = vmatprep.subr.mxu0 0.0
      %2363 = vmatpush1.msra.mxu0 0.0
      %2364 = vmatprep.subr.mxu0 0.0
      %2365 = vmatpush1.msra.mxu0 0.0
      %2366 = vmatprep.subr.mxu0 0.0
      %2367 = vmatpush1.msra.mxu0 0.0
      %2368 = vmatprep.subr.mxu0 0.0
      %2369 = vmatpush1.msra.mxu0 0.0
      %2370 = vmatprep.subr.mxu0 0.0
      %2371 = vmatpush1.msra.mxu0 0.0
      %2372 = vmatprep.subr.mxu0 0.0
      %2373 = vmatpush1.msra.mxu0 0.0
      %2374 = vmatprep.subr.mxu0 0.0
      %2375 = vmatpush1.msra.mxu0 0.0
      %2376 = vmatprep.subr.mxu0 0.0
      %2377 = vmatpush1.msra.mxu0 0.0
      %2378 = vmatprep.subr.mxu0 0.0
      %2379 = vmatpush1.msra.mxu0 0.0
      %2380 = vmatprep.subr.mxu0 0.0
      %2381 = vmatpush1.msra.mxu0 0.0
      %2382 = vmatprep.subr.mxu0 0.0
      %2383 = vmatpush1.msra.mxu0 0.0
      %2384 = vmatprep.subr.mxu0 0.0
      %2385 = vmatpush1.msra.mxu0 0.0
      %2386 = vmatprep.subr.mxu0 0.0
      %2387 = vmatpush1.msra.mxu0 0.0
      %2388 = vmatprep.subr.mxu0 0.0
      %2389 = vmatpush1.msra.mxu0 0.0
      %2390 = vmatprep.subr.mxu0 0.0
      %2391 = vmatpush1.msra.mxu0 0.0
      %2392 = vmatprep.subr.mxu0 0.0
      %2393 = vmatpush1.msra.mxu0 0.0
      %2394 = vmatprep.subr.mxu0 0.0
      %2395 = vmatpush1.msra.mxu0 0.0
      %2396 = vmatprep.subr.mxu0 0.0
      %2397 = vmatpush1.msra.mxu0 0.0
      %2398 = vmatprep.subr.mxu0 0.0
      %2399 = vmatpush1.msra.mxu0 0.0
      %2400 = vmatprep.subr.mxu0 0.0
      %2401 = vmatpush1.msra.mxu0 0.0
      %2402 = vmatprep.subr.mxu0 0.0
      %2403 = vmatpush1.msra.mxu0 0.0
      %2404 = vmatprep.subr.mxu0 0.0
      %2405 = vmatpush1.msra.mxu0 0.0
      %2406 = vmatprep.subr.mxu0 0.0
      %2407 = vmatpush1.msra.mxu0 0.0
      %2408 = vmatprep.subr.mxu0 0.0
      %2409 = vmatpush1.msra.mxu0 0.0
      %2410 = vmatprep.subr.mxu0 0.0
      %2411 = vmatpush1.msra.mxu0 0.0
      %2412 = vmatprep.subr.mxu0 0.0
      %2413 = vmatpush1.msra.mxu0 0.0
      %2414 = vmatprep.subr.mxu0 0.0
      %2415 = vmatpush1.msra.mxu0 0.0
      %2416 = vmatprep.mubr.f32.mxu0 0.0
      %2417 = vmatmul.mubr.f32.gmra.mrb[0].mxu0 %v2279
      %v2418 = vpop.f32.mrb[0].mxu0
      %v2419 = vadd.f32 0.0, %v2418
      %v2420 = vpop.f32.mrb[0].mxu0
      %2421 = vdwg.mxu0
      %v2422 = vadd.f32 %v2262, %v2348
      %v2423 = vadd.f32 %v2263, %v2350
      %v2424 = vadd.f32 %v2264, %v2419
      %s2425 = scalar_lea.vmem %s3, 16
      %v2426 = vld [vmem:[%s2425] sm:$0xf]
      %2427 = vrot.lane.b32.xlu0 %v1786, 92
      %v2428 = vpop.permute.xlu0 %2427
      %2429 = vrot.lane.b32.xlu0 %v1787, 92
      %v2430 = vpop.permute.xlu0 %2429
      %2431 = vrot.lane.b32.xlu0 %v1788, 92
      %v2432 = vpop.permute.xlu0 %2431
      %v2433 = vsel %vm916, %v2428, %v2430
      %v2434 = vsel %vm916, %v2430, %v2432
      %v2439 = vsel %vm1805, %v2426, 0
      %2441 = vmatprep.subr.mxu0 %v2434
      %2442 = vmatpush1.msra.mxu0 %v2433
      %2443 = vmatprep.subr.mxu0 0.0
      %2444 = vmatpush1.msra.mxu0 0.0
      %2445 = vmatprep.subr.mxu0 0.0
      %2446 = vmatpush1.msra.mxu0 0.0
      %2447 = vmatprep.subr.mxu0 0.0
      %2448 = vmatpush1.msra.mxu0 0.0
      %2449 = vmatprep.subr.mxu0 0.0
      %2450 = vmatpush1.msra.mxu0 0.0
      %2451 = vmatprep.subr.mxu0 0.0
      %2452 = vmatpush1.msra.mxu0 0.0
      %2453 = vmatprep.subr.mxu0 0.0
      %2454 = vmatpush1.msra.mxu0 0.0
      %2455 = vmatprep.subr.mxu0 0.0
      %2456 = vmatpush1.msra.mxu0 0.0
      %2457 = vmatprep.subr.mxu0 0.0
      %2458 = vmatpush1.msra.mxu0 0.0
      %2459 = vmatprep.subr.mxu0 0.0
      %2460 = vmatpush1.msra.mxu0 0.0
      %2461 = vmatprep.subr.mxu0 0.0
      %2462 = vmatpush1.msra.mxu0 0.0
      %2463 = vmatprep.subr.mxu0 0.0
      %2464 = vmatpush1.msra.mxu0 0.0
      %2465 = vmatprep.subr.mxu0 0.0
      %2466 = vmatpush1.msra.mxu0 0.0
      %2467 = vmatprep.subr.mxu0 0.0
      %2468 = vmatpush1.msra.mxu0 0.0
      %2469 = vmatprep.subr.mxu0 0.0
      %2470 = vmatpush1.msra.mxu0 0.0
      %2471 = vmatprep.subr.mxu0 0.0
      %2472 = vmatpush1.msra.mxu0 0.0
      %2473 = vmatprep.subr.mxu0 0.0
      %2474 = vmatpush1.msra.mxu0 0.0
      %2475 = vmatprep.subr.mxu0 0.0
      %2476 = vmatpush1.msra.mxu0 0.0
      %2477 = vmatprep.subr.mxu0 0.0
      %2478 = vmatpush1.msra.mxu0 0.0
      %2479 = vmatprep.subr.mxu0 0.0
      %2480 = vmatpush1.msra.mxu0 0.0
      %2481 = vmatprep.subr.mxu0 0.0
      %2482 = vmatpush1.msra.mxu0 0.0
      %2483 = vmatprep.subr.mxu0 0.0
      %2484 = vmatpush1.msra.mxu0 0.0
      %2485 = vmatprep.subr.mxu0 0.0
      %2486 = vmatpush1.msra.mxu0 0.0
      %2487 = vmatprep.subr.mxu0 0.0
      %2488 = vmatpush1.msra.mxu0 0.0
      %2489 = vmatprep.subr.mxu0 0.0
      %2490 = vmatpush1.msra.mxu0 0.0
      %2491 = vmatprep.subr.mxu0 0.0
      %2492 = vmatpush1.msra.mxu0 0.0
      %2493 = vmatprep.subr.mxu0 0.0
      %2494 = vmatpush1.msra.mxu0 0.0
      %2495 = vmatprep.subr.mxu0 0.0
      %2496 = vmatpush1.msra.mxu0 0.0
      %2497 = vmatprep.subr.mxu0 0.0
      %2498 = vmatpush1.msra.mxu0 0.0
      %2499 = vmatprep.subr.mxu0 0.0
      %2500 = vmatpush1.msra.mxu0 0.0
      %2501 = vmatprep.subr.mxu0 0.0
      %2502 = vmatpush1.msra.mxu0 0.0
      %2503 = vmatprep.subr.mxu0 0.0
      %2504 = vmatpush1.msra.mxu0 0.0
      %2505 = vmatprep.mubr.f32.mxu0 0.0
      %2506 = vmatmul.mubr.f32.gmra.mrb[0].mxu0 %v2439
      %v2507 = vpop.f32.mrb[0].mxu0
      %v2508 = vadd.f32 0.0, %v2507
      %v2509 = vpop.f32.mrb[0].mxu0
      %v2510 = vadd.f32 0.0, %v2509
      %2511 = vdwg.mxu0
      %2512 = vmatprep.subr.mxu0 0.0
      %2513 = vmatpush1.msra.mxu0 %v2432
      %2514 = vmatprep.subr.mxu0 0.0
      %2515 = vmatpush1.msra.mxu0 0.0
      %2516 = vmatprep.subr.mxu0 0.0
      %2517 = vmatpush1.msra.mxu0 0.0
      %2518 = vmatprep.subr.mxu0 0.0
      %2519 = vmatpush1.msra.mxu0 0.0
      %2520 = vmatprep.subr.mxu0 0.0
      %2521 = vmatpush1.msra.mxu0 0.0
      %2522 = vmatprep.subr.mxu0 0.0
      %2523 = vmatpush1.msra.mxu0 0.0
      %2524 = vmatprep.subr.mxu0 0.0
      %2525 = vmatpush1.msra.mxu0 0.0
      %2526 = vmatprep.subr.mxu0 0.0
      %2527 = vmatpush1.msra.mxu0 0.0
      %2528 = vmatprep.subr.mxu0 0.0
      %2529 = vmatpush1.msra.mxu0 0.0
      %2530 = vmatprep.subr.mxu0 0.0
      %2531 = vmatpush1.msra.mxu0 0.0
      %2532 = vmatprep.subr.mxu0 0.0
      %2533 = vmatpush1.msra.mxu0 0.0
      %2534 = vmatprep.subr.mxu0 0.0
      %2535 = vmatpush1.msra.mxu0 0.0
      %2536 = vmatprep.subr.mxu0 0.0
      %2537 = vmatpush1.msra.mxu0 0.0
      %2538 = vmatprep.subr.mxu0 0.0
      %2539 = vmatpush1.msra.mxu0 0.0
      %2540 = vmatprep.subr.mxu0 0.0
      %2541 = vmatpush1.msra.mxu0 0.0
      %2542 = vmatprep.subr.mxu0 0.0
      %2543 = vmatpush1.msra.mxu0 0.0
      %2544 = vmatprep.subr.mxu0 0.0
      %2545 = vmatpush1.msra.mxu0 0.0
      %2546 = vmatprep.subr.mxu0 0.0
      %2547 = vmatpush1.msra.mxu0 0.0
      %2548 = vmatprep.subr.mxu0 0.0
      %2549 = vmatpush1.msra.mxu0 0.0
      %2550 = vmatprep.subr.mxu0 0.0
      %2551 = vmatpush1.msra.mxu0 0.0
      %2552 = vmatprep.subr.mxu0 0.0
      %2553 = vmatpush1.msra.mxu0 0.0
      %2554 = vmatprep.subr.mxu0 0.0
      %2555 = vmatpush1.msra.mxu0 0.0
      %2556 = vmatprep.subr.mxu0 0.0
      %2557 = vmatpush1.msra.mxu0 0.0
      %2558 = vmatprep.subr.mxu0 0.0
      %2559 = vmatpush1.msra.mxu0 0.0
      %2560 = vmatprep.subr.mxu0 0.0
      %2561 = vmatpush1.msra.mxu0 0.0
      %2562 = vmatprep.subr.mxu0 0.0
      %2563 = vmatpush1.msra.mxu0 0.0
      %2564 = vmatprep.subr.mxu0 0.0
      %2565 = vmatpush1.msra.mxu0 0.0
      %2566 = vmatprep.subr.mxu0 0.0
      %2567 = vmatpush1.msra.mxu0 0.0
      %2568 = vmatprep.subr.mxu0 0.0
      %2569 = vmatpush1.msra.mxu0 0.0
      %2570 = vmatprep.subr.mxu0 0.0
      %2571 = vmatpush1.msra.mxu0 0.0
      %2572 = vmatprep.subr.mxu0 0.0
      %2573 = vmatpush1.msra.mxu0 0.0
      %2574 = vmatprep.subr.mxu0 0.0
      %2575 = vmatpush1.msra.mxu0 0.0
      %2576 = vmatprep.mubr.f32.mxu0 0.0
      %2577 = vmatmul.mubr.f32.gmra.mrb[0].mxu0 %v2439
      %v2578 = vpop.f32.mrb[0].mxu0
      %v2579 = vadd.f32 0.0, %v2578
      %v2580 = vpop.f32.mrb[0].mxu0
      %2581 = vdwg.mxu0
      %v2582 = vadd.f32 %v2422, %v2508
      %v2583 = vadd.f32 %v2423, %v2510
      %v2584 = vadd.f32 %v2424, %v2579
      %s2585 = scalar_lea.vmem %s3, 20
      %v2586 = vld [vmem:[%s2585] sm:$0xf]
      %2587 = vrot.lane.b32.xlu0 %v1786, 91
      %v2588 = vpop.permute.xlu0 %2587
      %2589 = vrot.lane.b32.xlu0 %v1787, 91
      %v2590 = vpop.permute.xlu0 %2589
      %2591 = vrot.lane.b32.xlu0 %v1788, 91
      %v2592 = vpop.permute.xlu0 %2591
      %v2593 = vsel %vm1080, %v2588, %v2590
      %v2594 = vsel %vm1080, %v2590, %v2592
      %v2599 = vsel %vm1805, %v2586, 0
      %2601 = vmatprep.subr.mxu0 %v2594
      %2602 = vmatpush1.msra.mxu0 %v2593
      %2603 = vmatprep.subr.mxu0 0.0
      %2604 = vmatpush1.msra.mxu0 0.0
      %2605 = vmatprep.subr.mxu0 0.0
      %2606 = vmatpush1.msra.mxu0 0.0
      %2607 = vmatprep.subr.mxu0 0.0
      %2608 = vmatpush1.msra.mxu0 0.0
      %2609 = vmatprep.subr.mxu0 0.0
      %2610 = vmatpush1.msra.mxu0 0.0
      %2611 = vmatprep.subr.mxu0 0.0
      %2612 = vmatpush1.msra.mxu0 0.0
      %2613 = vmatprep.subr.mxu0 0.0
      %2614 = vmatpush1.msra.mxu0 0.0
      %2615 = vmatprep.subr.mxu0 0.0
      %2616 = vmatpush1.msra.mxu0 0.0
      %2617 = vmatprep.subr.mxu0 0.0
      %2618 = vmatpush1.msra.mxu0 0.0
      %2619 = vmatprep.subr.mxu0 0.0
      %2620 = vmatpush1.msra.mxu0 0.0
      %2621 = vmatprep.subr.mxu0 0.0
      %2622 = vmatpush1.msra.mxu0 0.0
      %2623 = vmatprep.subr.mxu0 0.0
      %2624 = vmatpush1.msra.mxu0 0.0
      %2625 = vmatprep.subr.mxu0 0.0
      %2626 = vmatpush1.msra.mxu0 0.0
      %2627 = vmatprep.subr.mxu0 0.0
      %2628 = vmatpush1.msra.mxu0 0.0
      %2629 = vmatprep.subr.mxu0 0.0
      %2630 = vmatpush1.msra.mxu0 0.0
      %2631 = vmatprep.subr.mxu0 0.0
      %2632 = vmatpush1.msra.mxu0 0.0
      %2633 = vmatprep.subr.mxu0 0.0
      %2634 = vmatpush1.msra.mxu0 0.0
      %2635 = vmatprep.subr.mxu0 0.0
      %2636 = vmatpush1.msra.mxu0 0.0
      %2637 = vmatprep.subr.mxu0 0.0
      %2638 = vmatpush1.msra.mxu0 0.0
      %2639 = vmatprep.subr.mxu0 0.0
      %2640 = vmatpush1.msra.mxu0 0.0
      %2641 = vmatprep.subr.mxu0 0.0
      %2642 = vmatpush1.msra.mxu0 0.0
      %2643 = vmatprep.subr.mxu0 0.0
      %2644 = vmatpush1.msra.mxu0 0.0
      %2645 = vmatprep.subr.mxu0 0.0
      %2646 = vmatpush1.msra.mxu0 0.0
      %2647 = vmatprep.subr.mxu0 0.0
      %2648 = vmatpush1.msra.mxu0 0.0
      %2649 = vmatprep.subr.mxu0 0.0
      %2650 = vmatpush1.msra.mxu0 0.0
      %2651 = vmatprep.subr.mxu0 0.0
      %2652 = vmatpush1.msra.mxu0 0.0
      %2653 = vmatprep.subr.mxu0 0.0
      %2654 = vmatpush1.msra.mxu0 0.0
      %2655 = vmatprep.subr.mxu0 0.0
      %2656 = vmatpush1.msra.mxu0 0.0
      %2657 = vmatprep.subr.mxu0 0.0
      %2658 = vmatpush1.msra.mxu0 0.0
      %2659 = vmatprep.subr.mxu0 0.0
      %2660 = vmatpush1.msra.mxu0 0.0
      %2661 = vmatprep.subr.mxu0 0.0
      %2662 = vmatpush1.msra.mxu0 0.0
      %2663 = vmatprep.subr.mxu0 0.0
      %2664 = vmatpush1.msra.mxu0 0.0
      %2665 = vmatprep.mubr.f32.mxu0 0.0
      %2666 = vmatmul.mubr.f32.gmra.mrb[0].mxu0 %v2599
      %v2667 = vpop.f32.mrb[0].mxu0
      %v2668 = vadd.f32 0.0, %v2667
      %v2669 = vpop.f32.mrb[0].mxu0
      %v2670 = vadd.f32 0.0, %v2669
      %2671 = vdwg.mxu0
      %2672 = vmatprep.subr.mxu0 0.0
      %2673 = vmatpush1.msra.mxu0 %v2592
      %2674 = vmatprep.subr.mxu0 0.0
      %2675 = vmatpush1.msra.mxu0 0.0
      %2676 = vmatprep.subr.mxu0 0.0
      %2677 = vmatpush1.msra.mxu0 0.0
      %2678 = vmatprep.subr.mxu0 0.0
      %2679 = vmatpush1.msra.mxu0 0.0
      %2680 = vmatprep.subr.mxu0 0.0
      %2681 = vmatpush1.msra.mxu0 0.0
      %2682 = vmatprep.subr.mxu0 0.0
      %2683 = vmatpush1.msra.mxu0 0.0
      %2684 = vmatprep.subr.mxu0 0.0
      %2685 = vmatpush1.msra.mxu0 0.0
      %2686 = vmatprep.subr.mxu0 0.0
      %2687 = vmatpush1.msra.mxu0 0.0
      %2688 = vmatprep.subr.mxu0 0.0
      %2689 = vmatpush1.msra.mxu0 0.0
      %2690 = vmatprep.subr.mxu0 0.0
      %2691 = vmatpush1.msra.mxu0 0.0
      %2692 = vmatprep.subr.mxu0 0.0
      %2693 = vmatpush1.msra.mxu0 0.0
      %2694 = vmatprep.subr.mxu0 0.0
      %2695 = vmatpush1.msra.mxu0 0.0
      %2696 = vmatprep.subr.mxu0 0.0
      %2697 = vmatpush1.msra.mxu0 0.0
      %2698 = vmatprep.subr.mxu0 0.0
      %2699 = vmatpush1.msra.mxu0 0.0
      %2700 = vmatprep.subr.mxu0 0.0
      %2701 = vmatpush1.msra.mxu0 0.0
      %2702 = vmatprep.subr.mxu0 0.0
      %2703 = vmatpush1.msra.mxu0 0.0
      %2704 = vmatprep.subr.mxu0 0.0
      %2705 = vmatpush1.msra.mxu0 0.0
      %2706 = vmatprep.subr.mxu0 0.0
      %2707 = vmatpush1.msra.mxu0 0.0
      %2708 = vmatprep.subr.mxu0 0.0
      %2709 = vmatpush1.msra.mxu0 0.0
      %2710 = vmatprep.subr.mxu0 0.0
      %2711 = vmatpush1.msra.mxu0 0.0
      %2712 = vmatprep.subr.mxu0 0.0
      %2713 = vmatpush1.msra.mxu0 0.0
      %2714 = vmatprep.subr.mxu0 0.0
      %2715 = vmatpush1.msra.mxu0 0.0
      %2716 = vmatprep.subr.mxu0 0.0
      %2717 = vmatpush1.msra.mxu0 0.0
      %2718 = vmatprep.subr.mxu0 0.0
      %2719 = vmatpush1.msra.mxu0 0.0
      %2720 = vmatprep.subr.mxu0 0.0
      %2721 = vmatpush1.msra.mxu0 0.0
      %2722 = vmatprep.subr.mxu0 0.0
      %2723 = vmatpush1.msra.mxu0 0.0
      %2724 = vmatprep.subr.mxu0 0.0
      %2725 = vmatpush1.msra.mxu0 0.0
      %2726 = vmatprep.subr.mxu0 0.0
      %2727 = vmatpush1.msra.mxu0 0.0
      %2728 = vmatprep.subr.mxu0 0.0
      %2729 = vmatpush1.msra.mxu0 0.0
      %2730 = vmatprep.subr.mxu0 0.0
      %2731 = vmatpush1.msra.mxu0 0.0
      %2732 = vmatprep.subr.mxu0 0.0
      %2733 = vmatpush1.msra.mxu0 0.0
      %2734 = vmatprep.subr.mxu0 0.0
      %2735 = vmatpush1.msra.mxu0 0.0
      %2736 = vmatprep.mubr.f32.mxu0 0.0
      %2737 = vmatmul.mubr.f32.gmra.mrb[0].mxu0 %v2599
      %v2738 = vpop.f32.mrb[0].mxu0
      %v2739 = vadd.f32 0.0, %v2738
      %v2740 = vpop.f32.mrb[0].mxu0
      %2741 = vdwg.mxu0
      %v2742 = vadd.f32 %v2582, %v2668
      %v2743 = vadd.f32 %v2583, %v2670
      %v2744 = vadd.f32 %v2584, %v2739
      %s2745 = scalar_lea.vmem %s3, 24
      %v2746 = vld [vmem:[%s2745] sm:$0xf]
      %2747 = vrot.lane.b32.xlu0 %v1786, 75
      %v2748 = vpop.permute.xlu0 %2747
      %2749 = vrot.lane.b32.xlu0 %v1787, 75
      %v2750 = vpop.permute.xlu0 %2749
      %2751 = vrot.lane.b32.xlu0 %v1788, 75
      %v2752 = vpop.permute.xlu0 %2751
      %v2753 = vsel %vm1244, %v2748, %v2750
      %v2754 = vsel %vm1244, %v2750, %v2752
      %v2759 = vsel %vm1805, %v2746, 0
      %2761 = vmatprep.subr.mxu0 %v2754
      %2762 = vmatpush1.msra.mxu0 %v2753
      %2763 = vmatprep.subr.mxu0 0.0
      %2764 = vmatpush1.msra.mxu0 0.0
      %2765 = vmatprep.subr.mxu0 0.0
      %2766 = vmatpush1.msra.mxu0 0.0
      %2767 = vmatprep.subr.mxu0 0.0
      %2768 = vmatpush1.msra.mxu0 0.0
      %2769 = vmatprep.subr.mxu0 0.0
      %2770 = vmatpush1.msra.mxu0 0.0
      %2771 = vmatprep.subr.mxu0 0.0
      %2772 = vmatpush1.msra.mxu0 0.0
      %2773 = vmatprep.subr.mxu0 0.0
      %2774 = vmatpush1.msra.mxu0 0.0
      %2775 = vmatprep.subr.mxu0 0.0
      %2776 = vmatpush1.msra.mxu0 0.0
      %2777 = vmatprep.subr.mxu0 0.0
      %2778 = vmatpush1.msra.mxu0 0.0
      %2779 = vmatprep.subr.mxu0 0.0
      %2780 = vmatpush1.msra.mxu0 0.0
      %2781 = vmatprep.subr.mxu0 0.0
      %2782 = vmatpush1.msra.mxu0 0.0
      %2783 = vmatprep.subr.mxu0 0.0
      %2784 = vmatpush1.msra.mxu0 0.0
      %2785 = vmatprep.subr.mxu0 0.0
      %2786 = vmatpush1.msra.mxu0 0.0
      %2787 = vmatprep.subr.mxu0 0.0
      %2788 = vmatpush1.msra.mxu0 0.0
      %2789 = vmatprep.subr.mxu0 0.0
      %2790 = vmatpush1.msra.mxu0 0.0
      %2791 = vmatprep.subr.mxu0 0.0
      %2792 = vmatpush1.msra.mxu0 0.0
      %2793 = vmatprep.subr.mxu0 0.0
      %2794 = vmatpush1.msra.mxu0 0.0
      %2795 = vmatprep.subr.mxu0 0.0
      %2796 = vmatpush1.msra.mxu0 0.0
      %2797 = vmatprep.subr.mxu0 0.0
      %2798 = vmatpush1.msra.mxu0 0.0
      %2799 = vmatprep.subr.mxu0 0.0
      %2800 = vmatpush1.msra.mxu0 0.0
      %2801 = vmatprep.subr.mxu0 0.0
      %2802 = vmatpush1.msra.mxu0 0.0
      %2803 = vmatprep.subr.mxu0 0.0
      %2804 = vmatpush1.msra.mxu0 0.0
      %2805 = vmatprep.subr.mxu0 0.0
      %2806 = vmatpush1.msra.mxu0 0.0
      %2807 = vmatprep.subr.mxu0 0.0
      %2808 = vmatpush1.msra.mxu0 0.0
      %2809 = vmatprep.subr.mxu0 0.0
      %2810 = vmatpush1.msra.mxu0 0.0
      %2811 = vmatprep.subr.mxu0 0.0
      %2812 = vmatpush1.msra.mxu0 0.0
      %2813 = vmatprep.subr.mxu0 0.0
      %2814 = vmatpush1.msra.mxu0 0.0
      %2815 = vmatprep.subr.mxu0 0.0
      %2816 = vmatpush1.msra.mxu0 0.0
      %2817 = vmatprep.subr.mxu0 0.0
      %2818 = vmatpush1.msra.mxu0 0.0
      %2819 = vmatprep.subr.mxu0 0.0
      %2820 = vmatpush1.msra.mxu0 0.0
      %2821 = vmatprep.subr.mxu0 0.0
      %2822 = vmatpush1.msra.mxu0 0.0
      %2823 = vmatprep.subr.mxu0 0.0
      %2824 = vmatpush1.msra.mxu0 0.0
      %2825 = vmatprep.mubr.f32.mxu0 0.0
      %2826 = vmatmul.mubr.f32.gmra.mrb[0].mxu0 %v2759
      %v2827 = vpop.f32.mrb[0].mxu0
      %v2828 = vadd.f32 0.0, %v2827
      %v2829 = vpop.f32.mrb[0].mxu0
      %v2830 = vadd.f32 0.0, %v2829
      %2831 = vdwg.mxu0
      %2832 = vmatprep.subr.mxu0 0.0
      %2833 = vmatpush1.msra.mxu0 %v2752
      %2834 = vmatprep.subr.mxu0 0.0
      %2835 = vmatpush1.msra.mxu0 0.0
      %2836 = vmatprep.subr.mxu0 0.0
      %2837 = vmatpush1.msra.mxu0 0.0
      %2838 = vmatprep.subr.mxu0 0.0
      %2839 = vmatpush1.msra.mxu0 0.0
      %2840 = vmatprep.subr.mxu0 0.0
      %2841 = vmatpush1.msra.mxu0 0.0
      %2842 = vmatprep.subr.mxu0 0.0
      %2843 = vmatpush1.msra.mxu0 0.0
      %2844 = vmatprep.subr.mxu0 0.0
      %2845 = vmatpush1.msra.mxu0 0.0
      %2846 = vmatprep.subr.mxu0 0.0
      %2847 = vmatpush1.msra.mxu0 0.0
      %2848 = vmatprep.subr.mxu0 0.0
      %2849 = vmatpush1.msra.mxu0 0.0
      %2850 = vmatprep.subr.mxu0 0.0
      %2851 = vmatpush1.msra.mxu0 0.0
      %2852 = vmatprep.subr.mxu0 0.0
      %2853 = vmatpush1.msra.mxu0 0.0
      %2854 = vmatprep.subr.mxu0 0.0
      %2855 = vmatpush1.msra.mxu0 0.0
      %2856 = vmatprep.subr.mxu0 0.0
      %2857 = vmatpush1.msra.mxu0 0.0
      %2858 = vmatprep.subr.mxu0 0.0
      %2859 = vmatpush1.msra.mxu0 0.0
      %2860 = vmatprep.subr.mxu0 0.0
      %2861 = vmatpush1.msra.mxu0 0.0
      %2862 = vmatprep.subr.mxu0 0.0
      %2863 = vmatpush1.msra.mxu0 0.0
      %2864 = vmatprep.subr.mxu0 0.0
      %2865 = vmatpush1.msra.mxu0 0.0
      %2866 = vmatprep.subr.mxu0 0.0
      %2867 = vmatpush1.msra.mxu0 0.0
      %2868 = vmatprep.subr.mxu0 0.0
      %2869 = vmatpush1.msra.mxu0 0.0
      %2870 = vmatprep.subr.mxu0 0.0
      %2871 = vmatpush1.msra.mxu0 0.0
      %2872 = vmatprep.subr.mxu0 0.0
      %2873 = vmatpush1.msra.mxu0 0.0
      %2874 = vmatprep.subr.mxu0 0.0
      %2875 = vmatpush1.msra.mxu0 0.0
      %2876 = vmatprep.subr.mxu0 0.0
      %2877 = vmatpush1.msra.mxu0 0.0
      %2878 = vmatprep.subr.mxu0 0.0
      %2879 = vmatpush1.msra.mxu0 0.0
      %2880 = vmatprep.subr.mxu0 0.0
      %2881 = vmatpush1.msra.mxu0 0.0
      %2882 = vmatprep.subr.mxu0 0.0
      %2883 = vmatpush1.msra.mxu0 0.0
      %2884 = vmatprep.subr.mxu0 0.0
      %2885 = vmatpush1.msra.mxu0 0.0
      %2886 = vmatprep.subr.mxu0 0.0
      %2887 = vmatpush1.msra.mxu0 0.0
      %2888 = vmatprep.subr.mxu0 0.0
      %2889 = vmatpush1.msra.mxu0 0.0
      %2890 = vmatprep.subr.mxu0 0.0
      %2891 = vmatpush1.msra.mxu0 0.0
      %2892 = vmatprep.subr.mxu0 0.0
      %2893 = vmatpush1.msra.mxu0 0.0
      %2894 = vmatprep.subr.mxu0 0.0
      %2895 = vmatpush1.msra.mxu0 0.0
      %2896 = vmatprep.mubr.f32.mxu0 0.0
      %2897 = vmatmul.mubr.f32.gmra.mrb[0].mxu0 %v2759
      %v2898 = vpop.f32.mrb[0].mxu0
      %v2899 = vadd.f32 0.0, %v2898
      %v2900 = vpop.f32.mrb[0].mxu0
      %2901 = vdwg.mxu0
      %v2902 = vadd.f32 %v2742, %v2828
      %v2903 = vadd.f32 %v2743, %v2830
      %v2904 = vadd.f32 %v2744, %v2899
      %s2905 = scalar_lea.vmem %s3, 28
      %v2906 = vld [vmem:[%s2905] sm:$0xf]
      %2907 = vrot.lane.b32.xlu0 %v1786, 74
      %v2908 = vpop.permute.xlu0 %2907
      %2909 = vrot.lane.b32.xlu0 %v1787, 74
      %v2910 = vpop.permute.xlu0 %2909
      %2911 = vrot.lane.b32.xlu0 %v1788, 74
      %v2912 = vpop.permute.xlu0 %2911
      %v2913 = vsel %vm1408, %v2908, %v2910
      %v2914 = vsel %vm1408, %v2910, %v2912
      %v2919 = vsel %vm1805, %v2906, 0
      %2921 = vmatprep.subr.mxu0 %v2914
      %2922 = vmatpush1.msra.mxu0 %v2913
      %2923 = vmatprep.subr.mxu0 0.0
      %2924 = vmatpush1.msra.mxu0 0.0
      %2925 = vmatprep.subr.mxu0 0.0
      %2926 = vmatpush1.msra.mxu0 0.0
      %2927 = vmatprep.subr.mxu0 0.0
      %2928 = vmatpush1.msra.mxu0 0.0
      %2929 = vmatprep.subr.mxu0 0.0
      %2930 = vmatpush1.msra.mxu0 0.0
      %2931 = vmatprep.subr.mxu0 0.0
      %2932 = vmatpush1.msra.mxu0 0.0
      %2933 = vmatprep.subr.mxu0 0.0
      %2934 = vmatpush1.msra.mxu0 0.0
      %2935 = vmatprep.subr.mxu0 0.0
      %2936 = vmatpush1.msra.mxu0 0.0
      %2937 = vmatprep.subr.mxu0 0.0
      %2938 = vmatpush1.msra.mxu0 0.0
      %2939 = vmatprep.subr.mxu0 0.0
      %2940 = vmatpush1.msra.mxu0 0.0
      %2941 = vmatprep.subr.mxu0 0.0
      %2942 = vmatpush1.msra.mxu0 0.0
      %2943 = vmatprep.subr.mxu0 0.0
      %2944 = vmatpush1.msra.mxu0 0.0
      %2945 = vmatprep.subr.mxu0 0.0
      %2946 = vmatpush1.msra.mxu0 0.0
      %2947 = vmatprep.subr.mxu0 0.0
      %2948 = vmatpush1.msra.mxu0 0.0
      %2949 = vmatprep.subr.mxu0 0.0
      %2950 = vmatpush1.msra.mxu0 0.0
      %2951 = vmatprep.subr.mxu0 0.0
      %2952 = vmatpush1.msra.mxu0 0.0
      %2953 = vmatprep.subr.mxu0 0.0
      %2954 = vmatpush1.msra.mxu0 0.0
      %2955 = vmatprep.subr.mxu0 0.0
      %2956 = vmatpush1.msra.mxu0 0.0
      %2957 = vmatprep.subr.mxu0 0.0
      %2958 = vmatpush1.msra.mxu0 0.0
      %2959 = vmatprep.subr.mxu0 0.0
      %2960 = vmatpush1.msra.mxu0 0.0
      %2961 = vmatprep.subr.mxu0 0.0
      %2962 = vmatpush1.msra.mxu0 0.0
      %2963 = vmatprep.subr.mxu0 0.0
      %2964 = vmatpush1.msra.mxu0 0.0
      %2965 = vmatprep.subr.mxu0 0.0
      %2966 = vmatpush1.msra.mxu0 0.0
      %2967 = vmatprep.subr.mxu0 0.0
      %2968 = vmatpush1.msra.mxu0 0.0
      %2969 = vmatprep.subr.mxu0 0.0
      %2970 = vmatpush1.msra.mxu0 0.0
      %2971 = vmatprep.subr.mxu0 0.0
      %2972 = vmatpush1.msra.mxu0 0.0
      %2973 = vmatprep.subr.mxu0 0.0
      %2974 = vmatpush1.msra.mxu0 0.0
      %2975 = vmatprep.subr.mxu0 0.0
      %2976 = vmatpush1.msra.mxu0 0.0
      %2977 = vmatprep.subr.mxu0 0.0
      %2978 = vmatpush1.msra.mxu0 0.0
      %2979 = vmatprep.subr.mxu0 0.0
      %2980 = vmatpush1.msra.mxu0 0.0
      %2981 = vmatprep.subr.mxu0 0.0
      %2982 = vmatpush1.msra.mxu0 0.0
      %2983 = vmatprep.subr.mxu0 0.0
      %2984 = vmatpush1.msra.mxu0 0.0
      %2985 = vmatprep.mubr.f32.mxu0 0.0
      %2986 = vmatmul.mubr.f32.gmra.mrb[0].mxu0 %v2919
      %v2987 = vpop.f32.mrb[0].mxu0
      %v2988 = vadd.f32 0.0, %v2987
      %v2989 = vpop.f32.mrb[0].mxu0
      %v2990 = vadd.f32 0.0, %v2989
      %2991 = vdwg.mxu0
      %2992 = vmatprep.subr.mxu0 0.0
      %2993 = vmatpush1.msra.mxu0 %v2912
      %2994 = vmatprep.subr.mxu0 0.0
      %2995 = vmatpush1.msra.mxu0 0.0
      %2996 = vmatprep.subr.mxu0 0.0
      %2997 = vmatpush1.msra.mxu0 0.0
      %2998 = vmatprep.subr.mxu0 0.0
      %2999 = vmatpush1.msra.mxu0 0.0
      %3000 = vmatprep.subr.mxu0 0.0
      %3001 = vmatpush1.msra.mxu0 0.0
      %3002 = vmatprep.subr.mxu0 0.0
      %3003 = vmatpush1.msra.mxu0 0.0
      %3004 = vmatprep.subr.mxu0 0.0
      %3005 = vmatpush1.msra.mxu0 0.0
      %3006 = vmatprep.subr.mxu0 0.0
      %3007 = vmatpush1.msra.mxu0 0.0
      %3008 = vmatprep.subr.mxu0 0.0
      %3009 = vmatpush1.msra.mxu0 0.0
      %3010 = vmatprep.subr.mxu0 0.0
      %3011 = vmatpush1.msra.mxu0 0.0
      %3012 = vmatprep.subr.mxu0 0.0
      %3013 = vmatpush1.msra.mxu0 0.0
      %3014 = vmatprep.subr.mxu0 0.0
      %3015 = vmatpush1.msra.mxu0 0.0
      %3016 = vmatprep.subr.mxu0 0.0
      %3017 = vmatpush1.msra.mxu0 0.0
      %3018 = vmatprep.subr.mxu0 0.0
      %3019 = vmatpush1.msra.mxu0 0.0
      %3020 = vmatprep.subr.mxu0 0.0
      %3021 = vmatpush1.msra.mxu0 0.0
      %3022 = vmatprep.subr.mxu0 0.0
      %3023 = vmatpush1.msra.mxu0 0.0
      %3024 = vmatprep.subr.mxu0 0.0
      %3025 = vmatpush1.msra.mxu0 0.0
      %3026 = vmatprep.subr.mxu0 0.0
      %3027 = vmatpush1.msra.mxu0 0.0
      %3028 = vmatprep.subr.mxu0 0.0
      %3029 = vmatpush1.msra.mxu0 0.0
      %3030 = vmatprep.subr.mxu0 0.0
      %3031 = vmatpush1.msra.mxu0 0.0
      %3032 = vmatprep.subr.mxu0 0.0
      %3033 = vmatpush1.msra.mxu0 0.0
      %3034 = vmatprep.subr.mxu0 0.0
      %3035 = vmatpush1.msra.mxu0 0.0
      %3036 = vmatprep.subr.mxu0 0.0
      %3037 = vmatpush1.msra.mxu0 0.0
      %3038 = vmatprep.subr.mxu0 0.0
      %3039 = vmatpush1.msra.mxu0 0.0
      %3040 = vmatprep.subr.mxu0 0.0
      %3041 = vmatpush1.msra.mxu0 0.0
      %3042 = vmatprep.subr.mxu0 0.0
      %3043 = vmatpush1.msra.mxu0 0.0
      %3044 = vmatprep.subr.mxu0 0.0
      %3045 = vmatpush1.msra.mxu0 0.0
      %3046 = vmatprep.subr.mxu0 0.0
      %3047 = vmatpush1.msra.mxu0 0.0
      %3048 = vmatprep.subr.mxu0 0.0
      %3049 = vmatpush1.msra.mxu0 0.0
      %3050 = vmatprep.subr.mxu0 0.0
      %3051 = vmatpush1.msra.mxu0 0.0
      %3052 = vmatprep.subr.mxu0 0.0
      %3053 = vmatpush1.msra.mxu0 0.0
      %3054 = vmatprep.subr.mxu0 0.0
      %3055 = vmatpush1.msra.mxu0 0.0
      %3056 = vmatprep.mubr.f32.mxu0 0.0
      %3057 = vmatmul.mubr.f32.gmra.mrb[0].mxu0 %v2919
      %v3058 = vpop.f32.mrb[0].mxu0
      %v3059 = vadd.f32 0.0, %v3058
      %v3060 = vpop.f32.mrb[0].mxu0
      %3061 = vdwg.mxu0
      %v3062 = vadd.f32 %v2902, %v2988
      %v3063 = vadd.f32 %v2903, %v2990
      %v3064 = vadd.f32 %v2904, %v3059
      %s3065 = scalar_lea.vmem %s3, 32
      %v3066 = vld [vmem:[%s3065] sm:$0xf]
      %3067 = vrot.lane.b32.xlu0 %v1786, 73
      %v3068 = vpop.permute.xlu0 %3067
      %3069 = vrot.lane.b32.xlu0 %v1787, 73
      %v3070 = vpop.permute.xlu0 %3069
      %3071 = vrot.lane.b32.xlu0 %v1788, 73
      %v3072 = vpop.permute.xlu0 %3071
      %v3073 = vsel %vm1572, %v3068, %v3070
      %v3074 = vsel %vm1572, %v3070, %v3072
      %v3079 = vsel %vm1805, %v3066, 0
      %3081 = vmatprep.subr.mxu0 %v3074
      %3082 = vmatpush1.msra.mxu0 %v3073
      %3083 = vmatprep.subr.mxu0 0.0
      %3084 = vmatpush1.msra.mxu0 0.0
      %3085 = vmatprep.subr.mxu0 0.0
      %3086 = vmatpush1.msra.mxu0 0.0
      %3087 = vmatprep.subr.mxu0 0.0
      %3088 = vmatpush1.msra.mxu0 0.0
      %3089 = vmatprep.subr.mxu0 0.0
      %3090 = vmatpush1.msra.mxu0 0.0
      %3091 = vmatprep.subr.mxu0 0.0
      %3092 = vmatpush1.msra.mxu0 0.0
      %3093 = vmatprep.subr.mxu0 0.0
      %3094 = vmatpush1.msra.mxu0 0.0
      %3095 = vmatprep.subr.mxu0 0.0
      %3096 = vmatpush1.msra.mxu0 0.0
      %3097 = vmatprep.subr.mxu0 0.0
      %3098 = vmatpush1.msra.mxu0 0.0
      %3099 = vmatprep.subr.mxu0 0.0
      %3100 = vmatpush1.msra.mxu0 0.0
      %3101 = vmatprep.subr.mxu0 0.0
      %3102 = vmatpush1.msra.mxu0 0.0
      %3103 = vmatprep.subr.mxu0 0.0
      %3104 = vmatpush1.msra.mxu0 0.0
      %3105 = vmatprep.subr.mxu0 0.0
      %3106 = vmatpush1.msra.mxu0 0.0
      %3107 = vmatprep.subr.mxu0 0.0
      %3108 = vmatpush1.msra.mxu0 0.0
      %3109 = vmatprep.subr.mxu0 0.0
      %3110 = vmatpush1.msra.mxu0 0.0
      %3111 = vmatprep.subr.mxu0 0.0
      %3112 = vmatpush1.msra.mxu0 0.0
      %3113 = vmatprep.subr.mxu0 0.0
      %3114 = vmatpush1.msra.mxu0 0.0
      %3115 = vmatprep.subr.mxu0 0.0
      %3116 = vmatpush1.msra.mxu0 0.0
      %3117 = vmatprep.subr.mxu0 0.0
      %3118 = vmatpush1.msra.mxu0 0.0
      %3119 = vmatprep.subr.mxu0 0.0
      %3120 = vmatpush1.msra.mxu0 0.0
      %3121 = vmatprep.subr.mxu0 0.0
      %3122 = vmatpush1.msra.mxu0 0.0
      %3123 = vmatprep.subr.mxu0 0.0
      %3124 = vmatpush1.msra.mxu0 0.0
      %3125 = vmatprep.subr.mxu0 0.0
      %3126 = vmatpush1.msra.mxu0 0.0
      %3127 = vmatprep.subr.mxu0 0.0
      %3128 = vmatpush1.msra.mxu0 0.0
      %3129 = vmatprep.subr.mxu0 0.0
      %3130 = vmatpush1.msra.mxu0 0.0
      %3131 = vmatprep.subr.mxu0 0.0
      %3132 = vmatpush1.msra.mxu0 0.0
      %3133 = vmatprep.subr.mxu0 0.0
      %3134 = vmatpush1.msra.mxu0 0.0
      %3135 = vmatprep.subr.mxu0 0.0
      %3136 = vmatpush1.msra.mxu0 0.0
      %3137 = vmatprep.subr.mxu0 0.0
      %3138 = vmatpush1.msra.mxu0 0.0
      %3139 = vmatprep.subr.mxu0 0.0
      %3140 = vmatpush1.msra.mxu0 0.0
      %3141 = vmatprep.subr.mxu0 0.0
      %3142 = vmatpush1.msra.mxu0 0.0
      %3143 = vmatprep.subr.mxu0 0.0
      %3144 = vmatpush1.msra.mxu0 0.0
      %3145 = vmatprep.mubr.f32.mxu0 0.0
      %3146 = vmatmul.mubr.f32.gmra.mrb[0].mxu0 %v3079
      %v3147 = vpop.f32.mrb[0].mxu0
      %v3148 = vadd.f32 0.0, %v3147
      %v3149 = vpop.f32.mrb[0].mxu0
      %v3150 = vadd.f32 0.0, %v3149
      %3151 = vdwg.mxu0
      %3152 = vmatprep.subr.mxu0 0.0
      %3153 = vmatpush1.msra.mxu0 %v3072
      %3154 = vmatprep.subr.mxu0 0.0
      %3155 = vmatpush1.msra.mxu0 0.0
      %3156 = vmatprep.subr.mxu0 0.0
      %3157 = vmatpush1.msra.mxu0 0.0
      %3158 = vmatprep.subr.mxu0 0.0
      %3159 = vmatpush1.msra.mxu0 0.0
      %3160 = vmatprep.subr.mxu0 0.0
      %3161 = vmatpush1.msra.mxu0 0.0
      %3162 = vmatprep.subr.mxu0 0.0
      %3163 = vmatpush1.msra.mxu0 0.0
      %3164 = vmatprep.subr.mxu0 0.0
      %3165 = vmatpush1.msra.mxu0 0.0
      %3166 = vmatprep.subr.mxu0 0.0
      %3167 = vmatpush1.msra.mxu0 0.0
      %3168 = vmatprep.subr.mxu0 0.0
      %3169 = vmatpush1.msra.mxu0 0.0
      %3170 = vmatprep.subr.mxu0 0.0
      %3171 = vmatpush1.msra.mxu0 0.0
      %3172 = vmatprep.subr.mxu0 0.0
      %3173 = vmatpush1.msra.mxu0 0.0
      %3174 = vmatprep.subr.mxu0 0.0
      %3175 = vmatpush1.msra.mxu0 0.0
      %3176 = vmatprep.subr.mxu0 0.0
      %3177 = vmatpush1.msra.mxu0 0.0
      %3178 = vmatprep.subr.mxu0 0.0
      %3179 = vmatpush1.msra.mxu0 0.0
      %3180 = vmatprep.subr.mxu0 0.0
      %3181 = vmatpush1.msra.mxu0 0.0
      %3182 = vmatprep.subr.mxu0 0.0
      %3183 = vmatpush1.msra.mxu0 0.0
      %3184 = vmatprep.subr.mxu0 0.0
      %3185 = vmatpush1.msra.mxu0 0.0
      %3186 = vmatprep.subr.mxu0 0.0
      %3187 = vmatpush1.msra.mxu0 0.0
      %3188 = vmatprep.subr.mxu0 0.0
      %3189 = vmatpush1.msra.mxu0 0.0
      %3190 = vmatprep.subr.mxu0 0.0
      %3191 = vmatpush1.msra.mxu0 0.0
      %3192 = vmatprep.subr.mxu0 0.0
      %3193 = vmatpush1.msra.mxu0 0.0
      %3194 = vmatprep.subr.mxu0 0.0
      %3195 = vmatpush1.msra.mxu0 0.0
      %3196 = vmatprep.subr.mxu0 0.0
      %3197 = vmatpush1.msra.mxu0 0.0
      %3198 = vmatprep.subr.mxu0 0.0
      %3199 = vmatpush1.msra.mxu0 0.0
      %3200 = vmatprep.subr.mxu0 0.0
      %3201 = vmatpush1.msra.mxu0 0.0
      %3202 = vmatprep.subr.mxu0 0.0
      %3203 = vmatpush1.msra.mxu0 0.0
      %3204 = vmatprep.subr.mxu0 0.0
      %3205 = vmatpush1.msra.mxu0 0.0
      %3206 = vmatprep.subr.mxu0 0.0
      %3207 = vmatpush1.msra.mxu0 0.0
      %3208 = vmatprep.subr.mxu0 0.0
      %3209 = vmatpush1.msra.mxu0 0.0
      %3210 = vmatprep.subr.mxu0 0.0
      %3211 = vmatpush1.msra.mxu0 0.0
      %3212 = vmatprep.subr.mxu0 0.0
      %3213 = vmatpush1.msra.mxu0 0.0
      %3214 = vmatprep.subr.mxu0 0.0
      %3215 = vmatpush1.msra.mxu0 0.0
      %3216 = vmatprep.mubr.f32.mxu0 0.0
      %3217 = vmatmul.mubr.f32.gmra.mrb[0].mxu0 %v3079
      %v3218 = vpop.f32.mrb[0].mxu0
      %v3219 = vadd.f32 0.0, %v3218
      %v3220 = vpop.f32.mrb[0].mxu0
      %3221 = vdwg.mxu0
      %v3222 = vadd.f32 %v3062, %v3148
      %v3223 = vadd.f32 %v3063, %v3150
      %v3224 = vadd.f32 %v3064, %v3219
      %v3225 = vld [vmem:[%s4] sm:$0xf]
      %3227 = vset.pattern.permute.xlu0 0
      %3228 = vperm.xlu0 %3227, %v3225
      %v3229 = vpop.permute.xlu0 %3228
      %v3231 = vadd.f32 %v3222, %v3229
      %v3232 = vadd.f32 %v3223, %v3229
      %v3233 = vadd.f32 %v3224, %v3229
      %v3234 = vtanh.pop %v3231
      %v3235 = vtanh.pop %v3232
      %v3236 = vtanh.pop %v3233
      %v3239 = vcombine.low %v3234, %v3235
      %3241 = vst [vmem:[%s251] sm:$0xff] %v3239
      %vm3242 = vcmask 551936
      %3243 = vst.msk [vmem:[%s251 + $0x8] sm:$0xf] %vm3242, %v3236
      %p3244 = scmp.lt.s32.totalorder %s17, 1
      %s3245 = scalar_select %p3244, %s17, 1
      %s3246 = smul.addr %s3245, 3
      %s3247 = smul.addr %s3246, 4
      %s3248 = scalar_lea.vmem %s6, %s3247
      // Predicated region
      $region45: #{model_test_rec_forward.1} parent=43 // pred_check
        %p3249 = pneg %p166
      $region46: #{model_test_rec_forward.1} parent=43 // pred_check_branch
        %3251 = sbr.rel (%p3249) target = $region48
      $region47: #{model_test_rec_forward.1} parent=43 // pred_region
        _
      $region48: #{model_test_rec_forward.1} parent=43 // pred_fallthru
        _
    $region44: #{model_test_rec_forward.1} parent=5 // pred_fallthru
      _
    %p3252 = scmp.le.s32.totalorder 2, %s12
    // Predicated region
    $region49: #{model_test_rec_forward.1} parent=5 // pred_check
      %p3253 = pneg %p3252
    $region50: #{model_test_rec_forward.1} parent=5 // pred_check_branch
      %3255 = sbr.rel (%p3253) target = $region52
    $region51: #{model_test_rec_forward.1} parent=5 // pred_region
      %s3256 = ssub.s32 %s12, 2
      // Predicated region
      $region53: #{model_test_rec_forward.1} parent=51 // pred_check
        %p3257 = pneg %p172
      $region54: #{model_test_rec_forward.1} parent=51 // pred_check_branch
        %3259 = sbr.rel (%p3257) target = $region56
      $region55: #{model_test_rec_forward.1} parent=51 // pred_region
        %p3260 = scmp.lt.s32.totalorder %s18, 1
        %s3261 = scalar_select %p3260, %s18, 1
        %s3262 = smul.addr %s3261, 3
        %s3263 = smul.addr %s3262, 4
        %s3264 = scalar_lea.vmem %s6, %s3263
      $region56: #{model_test_rec_forward.1} parent=51 // pred_fallthru
        _
    $region52: #{model_test_rec_forward.1} parent=5 // pred_fallthru
      _
  $region6: #{model_test_rec_forward.1} parent=0 // loop_footer
    %s16 = sadd.s32 1, %s12
  $region7: #{model_test_rec_forward.1} parent=0 // loop_footer_branch
    %11 = sbr.rel target = $region3
  $region8: #{model_test_rec_forward.1} parent=0 // loop_exit
    _

</llo_original>
